<compile_context>
chip_gen: v6e
topology: v6e:2x2x1
jax: 0.10.0
libtpu: 0.0.40
codegen_flags: <defaults>
</compile_context>

<pallas_src>
import jax
import jax.numpy as jnp
import numpy as np
from jax.experimental import pallas as pl
from jax.experimental.pallas import tpu as pltpu


# ----------------------------- Pallas kernels ------------------------------


def make_kde_kernel(kernel_type: str, bandwidth: float):
    """KDE density over the c channel-vectors of each window block.

    Tile layout: (hw, c, TN) with TN window blocks on lanes.  Gram expansion keeps
    the biggest live intermediate at (c, c, TN); the hw-reduction and the mean over
    the pair axis both reduce *leading* dims (cheap VPU adds, no XLU shuffles).
    """
    inv_h = 1.0 / bandwidth
    inv_h2 = inv_h * inv_h

    def kde_kernel(ghx_ref, dens_ref):
        g = ghx_ref[...]                                  # (hw, c, TN)
        hw = g.shape[0]
        sq_norm = jnp.sum(g * g, axis=0)                  # (c, TN)
        cross = None
        for hidx in range(hw):                            # static unroll, hw is small
            gh = g[hidx]                                  # (c, TN)
            outer = gh[:, None, :] * gh[None, :, :]       # (c, c, TN)
            cross = outer if cross is None else cross + outer
        sq_dist = sq_norm[:, None, :] + sq_norm[None, :, :] - 2.0 * cross
        sq_dist = jnp.maximum(sq_dist, 0.0)               # guard tiny negatives
        if kernel_type == "gaussian":
            K = jnp.exp(-0.5 * inv_h2 * sq_dist)          # no sqrt needed
        elif kernel_type == "laplacian":
            K = jnp.exp(-inv_h * jnp.sqrt(sq_dist))       # only laplacian needs sqrt
        elif kernel_type == "epanechnikov":
            u2 = inv_h2 * sq_dist
            K = 0.75 * (1.0 - u2) * (u2 <= 1.0).astype(jnp.float32)
        else:
            raise ValueError(f"Unsupported kernel: {kernel_type}")
        # K is symmetric in the pair axes -> mean over the leading axis == mean over j.
        dens_ref[...] = jnp.mean(K, axis=0)               # (c, TN)

    return kde_kernel


def make_fc_kernel(gamma: float):
    """Conv1x1 -> ReLU -> Conv1x1 -> Sigmoid (+ gamma), channels-first layout.

    d: (C, TM) with the B*Wn*Wn positions on lanes (lane-dense loads/stores).
    Matmul operands are cast to bf16 (f32 accumulation) for the MXU (v5e benefit).
    """

    def fc_kernel(d_ref, w1_ref, b1_ref, w2_ref, b2_ref, attn_ref):
        d = d_ref[...].astype(jnp.bfloat16)               # (C, TM)
        w1 = w1_ref[...].astype(jnp.bfloat16)             # (Cr, C)
        w2 = w2_ref[...].astype(jnp.bfloat16)             # (C, Cr)
        h1 = jnp.dot(w1, d, preferred_element_type=jnp.float32) + b1_ref[...]
        h1 = jnp.maximum(h1, 0.0)
        h2 = jnp.dot(w2, h1.astype(jnp.bfloat16),
                     preferred_element_type=jnp.float32) + b2_ref[...]
        attn_ref[...] = jax.nn.sigmoid(h2) + gamma

    return fc_kernel


def upsample_mul_kernel(attn_ref, lh_ref, lwt_ref, x_ref, out_ref):
    """Separable bilinear upsample of the (Wn, Wn) attention map, fused with x.

    attn: (TBC, Wn, Wn), lh: (TH, Wn), lwt: (Wn, W), x/out: (TBC, TH, W).
    Both contractions unroll over Wn as VPU broadcast-mul-adds; this replaces the
    previous (H*W, Wn*Wn) interpolation-matrix matmul (8x fewer FLOPs, no big U
    matrix streamed from HBM, no in-kernel relayouts).
    """
    a = attn_ref[...]
    lh = lh_ref[...]
    lwt = lwt_ref[...]
    wn = a.shape[2]
    # step 1: aw[p, i, x] = sum_j a[p, i, j] * Lw[x, j]
    aw = a[:, :, 0, None] * lwt[0][None, None, :]
    for j in range(1, wn):
        aw = aw + a[:, :, j, None] * lwt[j][None, None, :]
    # step 2: up[p, y, x] = sum_i Lh[y, i] * aw[p, i, x]
    up = lh[None, :, 0, None] * aw[:, 0, None, :]
    for i in range(1, wn):
        up = up + lh[None, :, i, None] * aw[:, i, None, :]
    out_ref[...] = x_ref[...] * up


# ------------------------------- host glue ---------------------------------


def bilinear_matrix(out_size: int, in_size: int) -> jnp.ndarray:
    """F.interpolate(mode='bilinear', align_corners=False) as a (out, in) matrix."""
    scale = in_size / out_size
    src = (jnp.arange(out_size, dtype=jnp.float32) + 0.5) * scale - 0.5
    src = jnp.maximum(src, 0.0)
    i0f = jnp.floor(src)
    w1 = src - i0f
    w0 = 1.0 - w1
    i0 = jnp.minimum(i0f.astype(jnp.int32), in_size - 1)
    i1 = jnp.minimum(i0 + 1, in_size - 1)
    return (w0[:, None] * jax.nn.one_hot(i0, in_size, dtype=jnp.float32)
            + w1[:, None] * jax.nn.one_hot(i1, in_size, dtype=jnp.float32))


def _pick_tile(dim: int, candidates) -> int:
    for cand in candidates:
        if cand <= dim and dim % cand == 0:
            return cand
    return dim


def _pick_kde_tile(N: int, c: int, hw: int, budget_bytes: int = 8 * 1024 * 1024) -> int:
    # live f32 bytes per tile ~ double-buffered I/O + three (c, c, TN) intermediates
    for cand in (1024, 512, 256, 128):
        if cand <= N and N % cand == 0:
            live = 4 * cand * (2 * hw * c + 3 * c * c + 4 * c)
            if live <= budget_bytes:
                return cand
    return N


def kde_attention(x, params, *, reduction=4, gamma=0.5, group=4, window=8,
                  kernel="gaussian", h=1.0):
    B, C, H, W = x.shape
    G = group
    c = C // G
    Wn = window
    hh, ww = H // Wn, W // Wn
    hw = hh * ww
    N = B * G * Wn * Wn

    # --- kernel 1: KDE density --------------------------------------------
    # 'b (G c) (W1 h) (W2 w) -> (h w) c (b G W1 W2)': hw leads, c on sublanes,
    # window blocks N on lanes (lane-dense output).
    # TODO(synk): fold this window rearrange into kernel 1 (grid over (b, g) with an
    # in-VMEM relayout) to remove the remaining host-side HBM round-trip over x.
    xr = x.reshape(B, G, c, Wn, hh, Wn, ww)
    ghx = xr.transpose(4, 6, 2, 0, 1, 3, 5).reshape(hw, c, N)

    TN = _pick_kde_tile(N, c, hw)
    kde_vmem = int(min(max(4 * TN * (2 * hw * c + 3 * c * c + 4 * c) + (2 << 20),
                           16 * 1024 * 1024), 48 * 1024 * 1024))
    density = pl.pallas_call(
        make_kde_kernel(kernel, h),
        out_shape=jax.ShapeDtypeStruct((c, N), jnp.float32),
        grid=(N // TN,),
        in_specs=[pl.BlockSpec((hw, c, TN), lambda i: (0, 0, i))],
        out_specs=pl.BlockSpec((c, TN), lambda i: (0, i)),
        compiler_params=pltpu.CompilerParams(
            dimension_semantics=("parallel",),
            vmem_limit_bytes=kde_vmem),
    )(ghx)

    # --- kernel 2: fc (two 1x1 convs), channels-first / lane-dense ---------
    M = B * Wn * Wn
    Cr = C // reduction
    # (c, b, G, W1, W2) -> ((G c), (b W1 W2)) == (C, M); tiny shuffle.
    d_cm = (density.reshape(c, B, G, Wn, Wn)
            .transpose(2, 0, 1, 3, 4)
            .reshape(C, M))
    TM = _pick_tile(M, (1024, 512, 256, 128))
    attn_cm = pl.pallas_call(
        make_fc_kernel(gamma),
        out_shape=jax.ShapeDtypeStruct((C, M), jnp.float32),
        grid=(M // TM,),
        in_specs=[
            pl.BlockSpec((C, TM), lambda j: (0, j)),
            pl.BlockSpec((Cr, C), lambda j: (0, 0)),
            pl.BlockSpec((Cr, 1), lambda j: (0, 0)),
            pl.BlockSpec((C, Cr), lambda j: (0, 0)),
            pl.BlockSpec((C, 1), lambda j: (0, 0)),
        ],
        out_specs=pl.BlockSpec((C, TM), lambda j: (0, j)),
        compiler_params=pltpu.CompilerParams(
            dimension_semantics=("parallel",)),
    )(d_cm, params["w1"], params["b1"].reshape(Cr, 1),
      params["w2"], params["b2"].reshape(C, 1))

    # (C, b, W1, W2) -> (b*C, W1, W2); tiny shuffle.
    attn_bc = (attn_cm.reshape(C, B, Wn, Wn)
               .transpose(1, 0, 2, 3)
               .reshape(B * C, Wn, Wn))

    # --- kernel 3: separable bilinear upsample (align_corners=False) * x ---
    Lh = bilinear_matrix(H, Wn)          # (H, Wn)
    LwT = bilinear_matrix(W, Wn).T       # (Wn, W)
    x3 = x.reshape(B * C, H, W)

    TBC = _pick_tile(B * C, (16, 8))
    TH = _pick_tile(H, (128, 64, 32, 16, 8))
    out3 = pl.pallas_call(
        upsample_mul_kernel,
        out_shape=jax.ShapeDtypeStruct((B * C, H, W), jnp.float32),
        grid=(B * C // TBC, H // TH),
        in_specs=[
            pl.BlockSpec((TBC, Wn, Wn), lambda ib, ih: (ib, 0, 0)),
            pl.BlockSpec((TH, Wn), lambda ib, ih: (ih, 0)),
            pl.BlockSpec((Wn, W), lambda ib, ih: (0, 0)),
            pl.BlockSpec((TBC, TH, W), lambda ib, ih: (ib, ih, 0)),
        ],
        out_specs=pl.BlockSpec((TBC, TH, W), lambda ib, ih: (ib, ih, 0)),
        compiler_params=pltpu.CompilerParams(
            dimension_semantics=("parallel", "parallel")),
    )(attn_bc, Lh, LwT, x3)

    return out3.reshape(B, C, H, W)


# ---------------------------- pure-JAX reference ----------------------------


def reference(x, params, *, reduction=4, gamma=0.5, group=4, window=8,
              kernel="gaussian", h=1.0):
    B, C, H, W = x.shape
    G = group; c = C // G; Wn = window; hh, ww = H // Wn, W // Wn
    N = B * G * Wn * Wn
    xr = (x.reshape(B, G, c, Wn, hh, Wn, ww)
          .transpose(0, 1, 3, 5, 2, 4, 6)
          .reshape(N, c, hh * ww))
    diff = xr[:, None, :, :] - xr[:, :, None, :]
    dist = jnp.sqrt(jnp.sum(diff * diff, axis=-1))
    u = dist / h
    if kernel == "gaussian":
        K = jnp.exp(-0.5 * u ** 2)
    elif kernel == "laplacian":
        K = jnp.exp(-u)
    else:
        K = 0.75 * (1 - u ** 2) * (u <= 1).astype(jnp.float32)
    density = K.mean(-1)                                   # (N, c)
    dg = (density.reshape(B, G, Wn, Wn, c)
          .transpose(0, 1, 4, 2, 3)
          .reshape(B, C, Wn, Wn))
    d = dg.transpose(0, 2, 3, 1)                           # (B, Wn, Wn, C)
    h1 = jax.nn.relu(d @ params["w1"].T + params["b1"])
    attn = jax.nn.sigmoid(h1 @ params["w2"].T + params["b2"]) + gamma
    attn = attn.transpose(0, 3, 1, 2)                      # (B, C, Wn, Wn)
    Lh = bilinear_matrix(H, Wn)
    Lw = bilinear_matrix(W, Wn)
    up = jnp.einsum("yi,bcij,xj->bcyx", Lh, attn, Lw)
    return x * up


# --------------------------------- main -------------------------------------


if __name__ == "__main__":
    key = jax.random.PRNGKey(0)
    B, C, H, W = 2, 16, 16, 16      # channel=16, group=4 -> c=4; window=8 -> 2x2 blocks
    reduction, group, window = 4, 4, 8
    kx, k1, k2, k3, k4 = jax.random.split(key, 5)
    x = jax.random.normal(kx, (B, C, H, W), dtype=jnp.float32)

    Cr = C // reduction
    # deterministic synthetic parameters (Conv2d 1x1 weights: (out, in), biases: (out,))
    params = {
        "w1": jax.random.normal(k1, (Cr, C), dtype=jnp.float32) * 0.2,
        "b1": jax.random.normal(k2, (Cr,), dtype=jnp.float32) * 0.1,
        "w2": jax.random.normal(k3, (C, Cr), dtype=jnp.float32) * 0.2,
        "b2": jax.random.normal(k4, (C,), dtype=jnp.float32) * 0.1,
    }

    run = jax.jit(lambda xv, pv: kde_attention(
        xv, pv, reduction=reduction, group=group, window=window))
    out = jax.block_until_ready(run(x, params))
    ref = jax.block_until_ready(
        reference(x, params, reduction=reduction, group=group, window=window)
    )
    np.testing.assert_allclose(np.asarray(out), np.asarray(ref), rtol=2e-2, atol=2e-2)
    print("KERNEL_OK")
</pallas_src>

<mosaic_0001>
module attributes {stable_mosaic.version = 11 : i64} {
  func.func @kde_kernel(%arg0: i32, %arg1: memref<4x4x512xf32, #tpu.memory_space<vmem>>, %arg2: memref<4x512xf32, #tpu.memory_space<vmem>>) attributes {dimension_semantics = [#tpu.dimension_semantics<parallel>], iteration_bounds = array<i64: 1>, scalar_prefetch = 0 : i64, scratch_operands = 0 : i64, tpu.core_type = #tpu.core_type<tc>, window_params = [{transform_indices = @transform_0, window_bounds = array<i64: 4, 4, 512>}, {transform_indices = @transform_1, window_bounds = array<i64: 4, 512>}]} {
    %c0 = arith.constant 0 : index
    %c0_0 = arith.constant 0 : index
    %c0_1 = arith.constant 0 : index
    %0 = vector.load %arg1[%c0, %c0_0, %c0_1] : memref<4x4x512xf32, #tpu.memory_space<vmem>>, vector<4x4x512xf32>
    %1 = arith.mulf %0, %0 : vector<4x4x512xf32>
    %cst = arith.constant dense<0.000000e+00> : vector<4x512xf32>
    %2 = vector.multi_reduction <add>, %1, %cst [0] : vector<4x4x512xf32> to vector<4x512xf32>
    %3 = vector.extract_strided_slice %0 {offsets = [0, 0, 0], sizes = [1, 4, 512], strides = [1, 1, 1]} : vector<4x4x512xf32> to vector<1x4x512xf32>
    %4 = vector.shape_cast %3 : vector<1x4x512xf32> to vector<4x512xf32>
    %5 = vector.shape_cast %4 : vector<4x512xf32> to vector<4x1x512xf32>
    %6 = vector.shape_cast %4 : vector<4x512xf32> to vector<1x4x512xf32>
    %7 = vector.broadcast %5 : vector<4x1x512xf32> to vector<4x4x512xf32>
    %8 = vector.broadcast %6 : vector<1x4x512xf32> to vector<4x4x512xf32>
    %9 = arith.mulf %7, %8 : vector<4x4x512xf32>
    %10 = vector.extract_strided_slice %0 {offsets = [1, 0, 0], sizes = [1, 4, 512], strides = [1, 1, 1]} : vector<4x4x512xf32> to vector<1x4x512xf32>
    %11 = vector.shape_cast %10 : vector<1x4x512xf32> to vector<4x512xf32>
    %12 = vector.shape_cast %11 : vector<4x512xf32> to vector<4x1x512xf32>
    %13 = vector.shape_cast %11 : vector<4x512xf32> to vector<1x4x512xf32>
    %14 = vector.broadcast %12 : vector<4x1x512xf32> to vector<4x4x512xf32>
    %15 = vector.broadcast %13 : vector<1x4x512xf32> to vector<4x4x512xf32>
    %16 = arith.mulf %14, %15 : vector<4x4x512xf32>
    %17 = arith.addf %9, %16 : vector<4x4x512xf32>
    %18 = vector.extract_strided_slice %0 {offsets = [2, 0, 0], sizes = [1, 4, 512], strides = [1, 1, 1]} : vector<4x4x512xf32> to vector<1x4x512xf32>
    %19 = vector.shape_cast %18 : vector<1x4x512xf32> to vector<4x512xf32>
    %20 = vector.shape_cast %19 : vector<4x512xf32> to vector<4x1x512xf32>
    %21 = vector.shape_cast %19 : vector<4x512xf32> to vector<1x4x512xf32>
    %22 = vector.broadcast %20 : vector<4x1x512xf32> to vector<4x4x512xf32>
    %23 = vector.broadcast %21 : vector<1x4x512xf32> to vector<4x4x512xf32>
    %24 = arith.mulf %22, %23 : vector<4x4x512xf32>
    %25 = arith.addf %17, %24 : vector<4x4x512xf32>
    %26 = vector.extract_strided_slice %0 {offsets = [3, 0, 0], sizes = [1, 4, 512], strides = [1, 1, 1]} : vector<4x4x512xf32> to vector<1x4x512xf32>
    %27 = vector.shape_cast %26 : vector<1x4x512xf32> to vector<4x512xf32>
    %28 = vector.shape_cast %27 : vector<4x512xf32> to vector<4x1x512xf32>
    %29 = vector.shape_cast %27 : vector<4x512xf32> to vector<1x4x512xf32>
    %30 = vector.broadcast %28 : vector<4x1x512xf32> to vector<4x4x512xf32>
    %31 = vector.broadcast %29 : vector<1x4x512xf32> to vector<4x4x512xf32>
    %32 = arith.mulf %30, %31 : vector<4x4x512xf32>
    %33 = arith.addf %25, %32 : vector<4x4x512xf32>
    %34 = vector.shape_cast %2 : vector<4x512xf32> to vector<4x1x512xf32>
    %35 = vector.shape_cast %2 : vector<4x512xf32> to vector<1x4x512xf32>
    %36 = vector.broadcast %34 : vector<4x1x512xf32> to vector<4x4x512xf32>
    %37 = vector.broadcast %35 : vector<1x4x512xf32> to vector<4x4x512xf32>
    %38 = arith.addf %36, %37 : vector<4x4x512xf32>
    %cst_2 = arith.constant 2.000000e+00 : f32
    %39 = vector.broadcast %cst_2 : f32 to vector<4x4x512xf32>
    %40 = arith.mulf %39, %33 : vector<4x4x512xf32>
    %41 = arith.subf %38, %40 : vector<4x4x512xf32>
    %cst_3 = arith.constant 0.000000e+00 : f32
    %42 = vector.broadcast %cst_3 : f32 to vector<4x4x512xf32>
    %43 = arith.maximumf %41, %42 : vector<4x4x512xf32>
    %cst_4 = arith.constant -5.000000e-01 : f32
    %44 = vector.broadcast %cst_4 : f32 to vector<4x4x512xf32>
    %45 = arith.mulf %44, %43 : vector<4x4x512xf32>
    %46 = math.exp %45 : vector<4x4x512xf32>
    %cst_5 = arith.constant dense<0.000000e+00> : vector<4x512xf32>
    %47 = vector.multi_reduction <add>, %46, %cst_5 [0] : vector<4x4x512xf32> to vector<4x512xf32>
    %cst_6 = arith.constant 4.000000e+00 : f32
    %48 = vector.broadcast %cst_6 : f32 to vector<4x512xf32>
    %49 = arith.divf %47, %48 : vector<4x512xf32>
    %c0_7 = arith.constant 0 : index
    %c0_8 = arith.constant 0 : index
    %50 = vector.load %arg2[%c0_7, %c0_8] : memref<4x512xf32, #tpu.memory_space<vmem>>, vector<4x512xf32>
    tpu.vector_store %arg2[%c0_7, %c0_8], %49 {strides = array<i32>} : memref<4x512xf32, #tpu.memory_space<vmem>>, vector<4x512xf32>,
    return
  }
  func.func @transform_0(%arg0: i32) -> (i32, i32, i32) {
    %c0_i32 = arith.constant 0 : i32
    %c0_i32_0 = arith.constant 0 : i32
    %c0_i32_1 = arith.constant 0 : i32
    return %c0_i32, %c0_i32_0, %arg0 : i32, i32, i32
  }
  func.func @transform_1(%arg0: i32) -> (i32, i32) {
    %c0_i32 = arith.constant 0 : i32
    %c0_i32_0 = arith.constant 0 : i32
    return %c0_i32, %arg0 : i32, i32
  }
}

module attributes {stable_mosaic.version = 11 : i64} {
  func.func @fc_kernel(%arg0: i32, %arg1: memref<16x128xf32, #tpu.memory_space<vmem>>, %arg2: memref<4x16xf32, #tpu.memory_space<vmem>>, %arg3: memref<4x1xf32, #tpu.memory_space<vmem>>, %arg4: memref<16x4xf32, #tpu.memory_space<vmem>>, %arg5: memref<16x1xf32, #tpu.memory_space<vmem>>, %arg6: memref<16x128xf32, #tpu.memory_space<vmem>>) attributes {dimension_semantics = [#tpu.dimension_semantics<parallel>], iteration_bounds = array<i64: 1>, scalar_prefetch = 0 : i64, scratch_operands = 0 : i64, tpu.core_type = #tpu.core_type<tc>, window_params = [{transform_indices = @transform_0, window_bounds = array<i64: 16, 128>}, {pipeline_mode = #tpu.pipeline_mode<synchronous>, transform_indices = @transform_1, window_bounds = array<i64: 4, 16>}, {pipeline_mode = #tpu.pipeline_mode<synchronous>, transform_indices = @transform_2, window_bounds = array<i64: 4, 1>}, {pipeline_mode = #tpu.pipeline_mode<synchronous>, transform_indices = @transform_3, window_bounds = array<i64: 16, 4>}, {pipeline_mode = #tpu.pipeline_mode<synchronous>, transform_indices = @transform_4, window_bounds = array<i64: 16, 1>}, {transform_indices = @transform_5, window_bounds = array<i64: 16, 128>}]} {
    %c0 = arith.constant 0 : index
    %c0_0 = arith.constant 0 : index
    %0 = vector.load %arg1[%c0, %c0_0] : memref<16x128xf32, #tpu.memory_space<vmem>>, vector<16x128xf32>
    %1 = arith.truncf %0 : vector<16x128xf32> to vector<16x128xbf16>
    %c0_1 = arith.constant 0 : index
    %c0_2 = arith.constant 0 : index
    %2 = vector.load %arg2[%c0_1, %c0_2] : memref<4x16xf32, #tpu.memory_space<vmem>>, vector<4x16xf32>
    %3 = arith.truncf %2 : vector<4x16xf32> to vector<4x16xbf16>
    %c0_3 = arith.constant 0 : index
    %c0_4 = arith.constant 0 : index
    %4 = vector.load %arg4[%c0_3, %c0_4] : memref<16x4xf32, #tpu.memory_space<vmem>>, vector<16x4xf32>
    %5 = arith.truncf %4 : vector<16x4xf32> to vector<16x4xbf16>
    %cst = arith.constant dense<0.000000e+00> : vector<4x128xf32>
    %6 = tpu.matmul %3, %1, %cst {dimension_numbers = #tpu.dot_dimension_numbers<[1], [0], [0], [1], [0, 0, 1, 1], [], []>} : vector<4x16xbf16>, vector<16x128xbf16>, vector<4x128xf32> -> vector<4x128xf32>
    %c0_5 = arith.constant 0 : index
    %c0_6 = arith.constant 0 : index
    %7 = vector.load %arg3[%c0_5, %c0_6] : memref<4x1xf32, #tpu.memory_space<vmem>>, vector<4x1xf32>
    %8 = vector.broadcast %7 : vector<4x1xf32> to vector<4x128xf32>
    %9 = arith.addf %6, %8 : vector<4x128xf32>
    %cst_7 = arith.constant 0.000000e+00 : f32
    %10 = vector.broadcast %cst_7 : f32 to vector<4x128xf32>
    %11 = arith.maximumf %9, %10 : vector<4x128xf32>
    %12 = arith.truncf %11 : vector<4x128xf32> to vector<4x128xbf16>
    %cst_8 = arith.constant dense<0.000000e+00> : vector<16x128xf32>
    %13 = tpu.matmul %5, %12, %cst_8 {dimension_numbers = #tpu.dot_dimension_numbers<[1], [0], [0], [1], [0, 0, 1, 1], [], []>} : vector<16x4xbf16>, vector<4x128xbf16>, vector<16x128xf32> -> vector<16x128xf32>
    %c0_9 = arith.constant 0 : index
    %c0_10 = arith.constant 0 : index
    %14 = vector.load %arg5[%c0_9, %c0_10] : memref<16x1xf32, #tpu.memory_space<vmem>>, vector<16x1xf32>
    %15 = vector.broadcast %14 : vector<16x1xf32> to vector<16x128xf32>
    %16 = arith.addf %13, %15 : vector<16x128xf32>
    %17 = arith.negf %16 : vector<16x128xf32>
    %18 = math.exp %17 : vector<16x128xf32>
    %cst_11 = arith.constant 1.000000e+00 : f32
    %19 = vector.broadcast %cst_11 : f32 to vector<16x128xf32>
    %20 = arith.addf %19, %18 : vector<16x128xf32>
    %21 = arith.divf %19, %20 : vector<16x128xf32>
    %cst_12 = arith.constant 5.000000e-01 : f32
    %22 = vector.broadcast %cst_12 : f32 to vector<16x128xf32>
    %23 = arith.addf %21, %22 : vector<16x128xf32>
    %c0_13 = arith.constant 0 : index
    %c0_14 = arith.constant 0 : index
    %24 = vector.load %arg6[%c0_13, %c0_14] : memref<16x128xf32, #tpu.memory_space<vmem>>, vector<16x128xf32>
    tpu.vector_store %arg6[%c0_13, %c0_14], %23 {strides = array<i32>} : memref<16x128xf32, #tpu.memory_space<vmem>>, vector<16x128xf32>,
    return
  }
  func.func @transform_0(%arg0: i32) -> (i32, i32) {
    %c0_i32 = arith.constant 0 : i32
    %c0_i32_0 = arith.constant 0 : i32
    return %c0_i32, %arg0 : i32, i32
  }
  func.func @transform_1(%arg0: i32) -> (i32, i32) {
    %c0_i32 = arith.constant 0 : i32
    %c0_i32_0 = arith.constant 0 : i32
    %c0_i32_1 = arith.constant 0 : i32
    return %c0_i32, %c0_i32_0 : i32, i32
  }
  func.func @transform_2(%arg0: i32) -> (i32, i32) {
    %c0_i32 = arith.constant 0 : i32
    %c0_i32_0 = arith.constant 0 : i32
    %c0_i32_1 = arith.constant 0 : i32
    return %c0_i32, %c0_i32_0 : i32, i32
  }
  func.func @transform_3(%arg0: i32) -> (i32, i32) {
    %c0_i32 = arith.constant 0 : i32
    %c0_i32_0 = arith.constant 0 : i32
    %c0_i32_1 = arith.constant 0 : i32
    return %c0_i32, %c0_i32_0 : i32, i32
  }
  func.func @transform_4(%arg0: i32) -> (i32, i32) {
    %c0_i32 = arith.constant 0 : i32
    %c0_i32_0 = arith.constant 0 : i32
    %c0_i32_1 = arith.constant 0 : i32
    return %c0_i32, %c0_i32_0 : i32, i32
  }
  func.func @transform_5(%arg0: i32) -> (i32, i32) {
    %c0_i32 = arith.constant 0 : i32
    %c0_i32_0 = arith.constant 0 : i32
    return %c0_i32, %arg0 : i32, i32
  }
}

module attributes {stable_mosaic.version = 11 : i64} {
  func.func @upsample_mul_kernel(%arg0: i32, %arg1: i32, %arg2: memref<16x8x8xf32, #tpu.memory_space<vmem>>, %arg3: memref<16x8xf32, #tpu.memory_space<vmem>>, %arg4: memref<8x16xf32, #tpu.memory_space<vmem>>, %arg5: memref<16x16x16xf32, #tpu.memory_space<vmem>>, %arg6: memref<16x16x16xf32, #tpu.memory_space<vmem>>) attributes {dimension_semantics = [#tpu.dimension_semantics<parallel>, #tpu.dimension_semantics<parallel>], iteration_bounds = array<i64: 2, 1>, scalar_prefetch = 0 : i64, scratch_operands = 0 : i64, tpu.core_type = #tpu.core_type<tc>, window_params = [{transform_indices = @transform_0, window_bounds = array<i64: 16, 8, 8>}, {transform_indices = @transform_1, window_bounds = array<i64: 16, 8>}, {pipeline_mode = #tpu.pipeline_mode<synchronous>, transform_indices = @transform_2, window_bounds = array<i64: 8, 16>}, {transform_indices = @transform_3, window_bounds = array<i64: 16, 16, 16>}, {transform_indices = @transform_4, window_bounds = array<i64: 16, 16, 16>}]} {
    %c0 = arith.constant 0 : index
    %c0_0 = arith.constant 0 : index
    %c0_1 = arith.constant 0 : index
    %0 = vector.load %arg2[%c0, %c0_0, %c0_1] : memref<16x8x8xf32, #tpu.memory_space<vmem>>, vector<16x8x8xf32>
    %c0_2 = arith.constant 0 : index
    %c0_3 = arith.constant 0 : index
    %1 = vector.load %arg3[%c0_2, %c0_3] : memref<16x8xf32, #tpu.memory_space<vmem>>, vector<16x8xf32>
    %c0_4 = arith.constant 0 : index
    %c0_5 = arith.constant 0 : index
    %2 = vector.load %arg4[%c0_4, %c0_5] : memref<8x16xf32, #tpu.memory_space<vmem>>, vector<8x16xf32>
    %3 = vector.extract_strided_slice %0 {offsets = [0, 0, 0], sizes = [16, 8, 1], strides = [1, 1, 1]} : vector<16x8x8xf32> to vector<16x8x1xf32>
    %4 = vector.shape_cast %3 : vector<16x8x1xf32> to vector<16x8xf32>
    %5 = vector.shape_cast %4 : vector<16x8xf32> to vector<16x8x1xf32>
    %6 = vector.extract_strided_slice %2 {offsets = [0, 0], sizes = [1, 16], strides = [1, 1]} : vector<8x16xf32> to vector<1x16xf32>
    %7 = vector.shape_cast %6 : vector<1x16xf32> to vector<16xf32>
    %8 = vector.shape_cast %7 : vector<16xf32> to vector<1x1x16xf32>
    %9 = vector.broadcast %5 : vector<16x8x1xf32> to vector<16x8x16xf32>
    %10 = vector.broadcast %8 : vector<1x1x16xf32> to vector<16x8x16xf32>
    %11 = arith.mulf %9, %10 : vector<16x8x16xf32>
    %12 = vector.extract_strided_slice %0 {offsets = [0, 0, 1], sizes = [16, 8, 1], strides = [1, 1, 1]} : vector<16x8x8xf32> to vector<16x8x1xf32>
    %13 = vector.shape_cast %12 : vector<16x8x1xf32> to vector<16x8xf32>
    %14 = vector.shape_cast %13 : vector<16x8xf32> to vector<16x8x1xf32>
    %15 = vector.extract_strided_slice %2 {offsets = [1, 0], sizes = [1, 16], strides = [1, 1]} : vector<8x16xf32> to vector<1x16xf32>
    %16 = vector.shape_cast %15 : vector<1x16xf32> to vector<16xf32>
    %17 = vector.shape_cast %16 : vector<16xf32> to vector<1x1x16xf32>
    %18 = vector.broadcast %14 : vector<16x8x1xf32> to vector<16x8x16xf32>
    %19 = vector.broadcast %17 : vector<1x1x16xf32> to vector<16x8x16xf32>
    %20 = arith.mulf %18, %19 : vector<16x8x16xf32>
    %21 = arith.addf %11, %20 : vector<16x8x16xf32>
    %22 = vector.extract_strided_slice %0 {offsets = [0, 0, 2], sizes = [16, 8, 1], strides = [1, 1, 1]} : vector<16x8x8xf32> to vector<16x8x1xf32>
    %23 = vector.shape_cast %22 : vector<16x8x1xf32> to vector<16x8xf32>
    %24 = vector.shape_cast %23 : vector<16x8xf32> to vector<16x8x1xf32>
    %25 = vector.extract_strided_slice %2 {offsets = [2, 0], sizes = [1, 16], strides = [1, 1]} : vector<8x16xf32> to vector<1x16xf32>
    %26 = vector.shape_cast %25 : vector<1x16xf32> to vector<16xf32>
    %27 = vector.shape_cast %26 : vector<16xf32> to vector<1x1x16xf32>
    %28 = vector.broadcast %24 : vector<16x8x1xf32> to vector<16x8x16xf32>
    %29 = vector.broadcast %27 : vector<1x1x16xf32> to vector<16x8x16xf32>
    %30 = arith.mulf %28, %29 : vector<16x8x16xf32>
    %31 = arith.addf %21, %30 : vector<16x8x16xf32>
    %32 = vector.extract_strided_slice %0 {offsets = [0, 0, 3], sizes = [16, 8, 1], strides = [1, 1, 1]} : vector<16x8x8xf32> to vector<16x8x1xf32>
    %33 = vector.shape_cast %32 : vector<16x8x1xf32> to vector<16x8xf32>
    %34 = vector.shape_cast %33 : vector<16x8xf32> to vector<16x8x1xf32>
    %35 = vector.extract_strided_slice %2 {offsets = [3, 0], sizes = [1, 16], strides = [1, 1]} : vector<8x16xf32> to vector<1x16xf32>
    %36 = vector.shape_cast %35 : vector<1x16xf32> to vector<16xf32>
    %37 = vector.shape_cast %36 : vector<16xf32> to vector<1x1x16xf32>
    %38 = vector.broadcast %34 : vector<16x8x1xf32> to vector<16x8x16xf32>
    %39 = vector.broadcast %37 : vector<1x1x16xf32> to vector<16x8x16xf32>
    %40 = arith.mulf %38, %39 : vector<16x8x16xf32>
    %41 = arith.addf %31, %40 : vector<16x8x16xf32>
    %42 = vector.extract_strided_slice %0 {offsets = [0, 0, 4], sizes = [16, 8, 1], strides = [1, 1, 1]} : vector<16x8x8xf32> to vector<16x8x1xf32>
    %43 = vector.shape_cast %42 : vector<16x8x1xf32> to vector<16x8xf32>
    %44 = vector.shape_cast %43 : vector<16x8xf32> to vector<16x8x1xf32>
    %45 = vector.extract_strided_slice %2 {offsets = [4, 0], sizes = [1, 16], strides = [1, 1]} : vector<8x16xf32> to vector<1x16xf32>
    %46 = vector.shape_cast %45 : vector<1x16xf32> to vector<16xf32>
    %47 = vector.shape_cast %46 : vector<16xf32> to vector<1x1x16xf32>
    %48 = vector.broadcast %44 : vector<16x8x1xf32> to vector<16x8x16xf32>
    %49 = vector.broadcast %47 : vector<1x1x16xf32> to vector<16x8x16xf32>
    %50 = arith.mulf %48, %49 : vector<16x8x16xf32>
    %51 = arith.addf %41, %50 : vector<16x8x16xf32>
    %52 = vector.extract_strided_slice %0 {offsets = [0, 0, 5], sizes = [16, 8, 1], strides = [1, 1, 1]} : vector<16x8x8xf32> to vector<16x8x1xf32>
    %53 = vector.shape_cast %52 : vector<16x8x1xf32> to vector<16x8xf32>
    %54 = vector.shape_cast %53 : vector<16x8xf32> to vector<16x8x1xf32>
    %55 = vector.extract_strided_slice %2 {offsets = [5, 0], sizes = [1, 16], strides = [1, 1]} : vector<8x16xf32> to vector<1x16xf32>
    %56 = vector.shape_cast %55 : vector<1x16xf32> to vector<16xf32>
    %57 = vector.shape_cast %56 : vector<16xf32> to vector<1x1x16xf32>
    %58 = vector.broadcast %54 : vector<16x8x1xf32> to vector<16x8x16xf32>
    %59 = vector.broadcast %57 : vector<1x1x16xf32> to vector<16x8x16xf32>
    %60 = arith.mulf %58, %59 : vector<16x8x16xf32>
    %61 = arith.addf %51, %60 : vector<16x8x16xf32>
    %62 = vector.extract_strided_slice %0 {offsets = [0, 0, 6], sizes = [16, 8, 1], strides = [1, 1, 1]} : vector<16x8x8xf32> to vector<16x8x1xf32>
    %63 = vector.shape_cast %62 : vector<16x8x1xf32> to vector<16x8xf32>
    %64 = vector.shape_cast %63 : vector<16x8xf32> to vector<16x8x1xf32>
    %65 = vector.extract_strided_slice %2 {offsets = [6, 0], sizes = [1, 16], strides = [1, 1]} : vector<8x16xf32> to vector<1x16xf32>
    %66 = vector.shape_cast %65 : vector<1x16xf32> to vector<16xf32>
    %67 = vector.shape_cast %66 : vector<16xf32> to vector<1x1x16xf32>
    %68 = vector.broadcast %64 : vector<16x8x1xf32> to vector<16x8x16xf32>
    %69 = vector.broadcast %67 : vector<1x1x16xf32> to vector<16x8x16xf32>
    %70 = arith.mulf %68, %69 : vector<16x8x16xf32>
    %71 = arith.addf %61, %70 : vector<16x8x16xf32>
    %72 = vector.extract_strided_slice %0 {offsets = [0, 0, 7], sizes = [16, 8, 1], strides = [1, 1, 1]} : vector<16x8x8xf32> to vector<16x8x1xf32>
    %73 = vector.shape_cast %72 : vector<16x8x1xf32> to vector<16x8xf32>
    %74 = vector.shape_cast %73 : vector<16x8xf32> to vector<16x8x1xf32>
    %75 = vector.extract_strided_slice %2 {offsets = [7, 0], sizes = [1, 16], strides = [1, 1]} : vector<8x16xf32> to vector<1x16xf32>
    %76 = vector.shape_cast %75 : vector<1x16xf32> to vector<16xf32>
    %77 = vector.shape_cast %76 : vector<16xf32> to vector<1x1x16xf32>
    %78 = vector.broadcast %74 : vector<16x8x1xf32> to vector<16x8x16xf32>
    %79 = vector.broadcast %77 : vector<1x1x16xf32> to vector<16x8x16xf32>
    %80 = arith.mulf %78, %79 : vector<16x8x16xf32>
    %81 = arith.addf %71, %80 : vector<16x8x16xf32>
    %82 = vector.extract_strided_slice %1 {offsets = [0, 0], sizes = [16, 1], strides = [1, 1]} : vector<16x8xf32> to vector<16x1xf32>
    %83 = vector.shape_cast %82 : vector<16x1xf32> to vector<16xf32>
    %84 = vector.shape_cast %83 : vector<16xf32> to vector<1x16x1xf32>
    %85 = vector.extract_strided_slice %81 {offsets = [0, 0, 0], sizes = [16, 1, 16], strides = [1, 1, 1]} : vector<16x8x16xf32> to vector<16x1x16xf32>
    %86 = vector.shape_cast %85 : vector<16x1x16xf32> to vector<16x16xf32>
    %87 = vector.shape_cast %86 : vector<16x16xf32> to vector<16x1x16xf32>
    %88 = vector.broadcast %84 : vector<1x16x1xf32> to vector<16x16x16xf32>
    %89 = vector.broadcast %87 : vector<16x1x16xf32> to vector<16x16x16xf32>
    %90 = arith.mulf %88, %89 : vector<16x16x16xf32>
    %91 = vector.extract_strided_slice %1 {offsets = [0, 1], sizes = [16, 1], strides = [1, 1]} : vector<16x8xf32> to vector<16x1xf32>
    %92 = vector.shape_cast %91 : vector<16x1xf32> to vector<16xf32>
    %93 = vector.shape_cast %92 : vector<16xf32> to vector<1x16x1xf32>
    %94 = vector.extract_strided_slice %81 {offsets = [0, 1, 0], sizes = [16, 1, 16], strides = [1, 1, 1]} : vector<16x8x16xf32> to vector<16x1x16xf32>
    %95 = vector.shape_cast %94 : vector<16x1x16xf32> to vector<16x16xf32>
    %96 = vector.shape_cast %95 : vector<16x16xf32> to vector<16x1x16xf32>
    %97 = vector.broadcast %93 : vector<1x16x1xf32> to vector<16x16x16xf32>
    %98 = vector.broadcast %96 : vector<16x1x16xf32> to vector<16x16x16xf32>
    %99 = arith.mulf %97, %98 : vector<16x16x16xf32>
    %100 = arith.addf %90, %99 : vector<16x16x16xf32>
    %101 = vector.extract_strided_slice %1 {offsets = [0, 2], sizes = [16, 1], strides = [1, 1]} : vector<16x8xf32> to vector<16x1xf32>
    %102 = vector.shape_cast %101 : vector<16x1xf32> to vector<16xf32>
    %103 = vector.shape_cast %102 : vector<16xf32> to vector<1x16x1xf32>
    %104 = vector.extract_strided_slice %81 {offsets = [0, 2, 0], sizes = [16, 1, 16], strides = [1, 1, 1]} : vector<16x8x16xf32> to vector<16x1x16xf32>
    %105 = vector.shape_cast %104 : vector<16x1x16xf32> to vector<16x16xf32>
    %106 = vector.shape_cast %105 : vector<16x16xf32> to vector<16x1x16xf32>
    %107 = vector.broadcast %103 : vector<1x16x1xf32> to vector<16x16x16xf32>
    %108 = vector.broadcast %106 : vector<16x1x16xf32> to vector<16x16x16xf32>
    %109 = arith.mulf %107, %108 : vector<16x16x16xf32>
    %110 = arith.addf %100, %109 : vector<16x16x16xf32>
    %111 = vector.extract_strided_slice %1 {offsets = [0, 3], sizes = [16, 1], strides = [1, 1]} : vector<16x8xf32> to vector<16x1xf32>
    %112 = vector.shape_cast %111 : vector<16x1xf32> to vector<16xf32>
    %113 = vector.shape_cast %112 : vector<16xf32> to vector<1x16x1xf32>
    %114 = vector.extract_strided_slice %81 {offsets = [0, 3, 0], sizes = [16, 1, 16], strides = [1, 1, 1]} : vector<16x8x16xf32> to vector<16x1x16xf32>
    %115 = vector.shape_cast %114 : vector<16x1x16xf32> to vector<16x16xf32>
    %116 = vector.shape_cast %115 : vector<16x16xf32> to vector<16x1x16xf32>
    %117 = vector.broadcast %113 : vector<1x16x1xf32> to vector<16x16x16xf32>
    %118 = vector.broadcast %116 : vector<16x1x16xf32> to vector<16x16x16xf32>
    %119 = arith.mulf %117, %118 : vector<16x16x16xf32>
    %120 = arith.addf %110, %119 : vector<16x16x16xf32>
    %121 = vector.extract_strided_slice %1 {offsets = [0, 4], sizes = [16, 1], strides = [1, 1]} : vector<16x8xf32> to vector<16x1xf32>
    %122 = vector.shape_cast %121 : vector<16x1xf32> to vector<16xf32>
    %123 = vector.shape_cast %122 : vector<16xf32> to vector<1x16x1xf32>
    %124 = vector.extract_strided_slice %81 {offsets = [0, 4, 0], sizes = [16, 1, 16], strides = [1, 1, 1]} : vector<16x8x16xf32> to vector<16x1x16xf32>
    %125 = vector.shape_cast %124 : vector<16x1x16xf32> to vector<16x16xf32>
    %126 = vector.shape_cast %125 : vector<16x16xf32> to vector<16x1x16xf32>
    %127 = vector.broadcast %123 : vector<1x16x1xf32> to vector<16x16x16xf32>
    %128 = vector.broadcast %126 : vector<16x1x16xf32> to vector<16x16x16xf32>
    %129 = arith.mulf %127, %128 : vector<16x16x16xf32>
    %130 = arith.addf %120, %129 : vector<16x16x16xf32>
    %131 = vector.extract_strided_slice %1 {offsets = [0, 5], sizes = [16, 1], strides = [1, 1]} : vector<16x8xf32> to vector<16x1xf32>
    %132 = vector.shape_cast %131 : vector<16x1xf32> to vector<16xf32>
    %133 = vector.shape_cast %132 : vector<16xf32> to vector<1x16x1xf32>
    %134 = vector.extract_strided_slice %81 {offsets = [0, 5, 0], sizes = [16, 1, 16], strides = [1, 1, 1]} : vector<16x8x16xf32> to vector<16x1x16xf32>
    %135 = vector.shape_cast %134 : vector<16x1x16xf32> to vector<16x16xf32>
    %136 = vector.shape_cast %135 : vector<16x16xf32> to vector<16x1x16xf32>
    %137 = vector.broadcast %133 : vector<1x16x1xf32> to vector<16x16x16xf32>
    %138 = vector.broadcast %136 : vector<16x1x16xf32> to vector<16x16x16xf32>
    %139 = arith.mulf %137, %138 : vector<16x16x16xf32>
    %140 = arith.addf %130, %139 : vector<16x16x16xf32>
    %141 = vector.extract_strided_slice %1 {offsets = [0, 6], sizes = [16, 1], strides = [1, 1]} : vector<16x8xf32> to vector<16x1xf32>
    %142 = vector.shape_cast %141 : vector<16x1xf32> to vector<16xf32>
    %143 = vector.shape_cast %142 : vector<16xf32> to vector<1x16x1xf32>
    %144 = vector.extract_strided_slice %81 {offsets = [0, 6, 0], sizes = [16, 1, 16], strides = [1, 1, 1]} : vector<16x8x16xf32> to vector<16x1x16xf32>
    %145 = vector.shape_cast %144 : vector<16x1x16xf32> to vector<16x16xf32>
    %146 = vector.shape_cast %145 : vector<16x16xf32> to vector<16x1x16xf32>
    %147 = vector.broadcast %143 : vector<1x16x1xf32> to vector<16x16x16xf32>
    %148 = vector.broadcast %146 : vector<16x1x16xf32> to vector<16x16x16xf32>
    %149 = arith.mulf %147, %148 : vector<16x16x16xf32>
    %150 = arith.addf %140, %149 : vector<16x16x16xf32>
    %151 = vector.extract_strided_slice %1 {offsets = [0, 7], sizes = [16, 1], strides = [1, 1]} : vector<16x8xf32> to vector<16x1xf32>
    %152 = vector.shape_cast %151 : vector<16x1xf32> to vector<16xf32>
    %153 = vector.shape_cast %152 : vector<16xf32> to vector<1x16x1xf32>
    %154 = vector.extract_strided_slice %81 {offsets = [0, 7, 0], sizes = [16, 1, 16], strides = [1, 1, 1]} : vector<16x8x16xf32> to vector<16x1x16xf32>
    %155 = vector.shape_cast %154 : vector<16x1x16xf32> to vector<16x16xf32>
    %156 = vector.shape_cast %155 : vector<16x16xf32> to vector<16x1x16xf32>
    %157 = vector.broadcast %153 : vector<1x16x1xf32> to vector<16x16x16xf32>
    %158 = vector.broadcast %156 : vector<16x1x16xf32> to vector<16x16x16xf32>
    %159 = arith.mulf %157, %158 : vector<16x16x16xf32>
    %160 = arith.addf %150, %159 : vector<16x16x16xf32>
    %c0_6 = arith.constant 0 : index
    %c0_7 = arith.constant 0 : index
    %c0_8 = arith.constant 0 : index
    %161 = vector.load %arg5[%c0_6, %c0_7, %c0_8] : memref<16x16x16xf32, #tpu.memory_space<vmem>>, vector<16x16x16xf32>
    %162 = arith.mulf %161, %160 : vector<16x16x16xf32>
    %c0_9 = arith.constant 0 : index
    %c0_10 = arith.constant 0 : index
    %c0_11 = arith.constant 0 : index
    %163 = vector.load %arg6[%c0_9, %c0_10, %c0_11] : memref<16x16x16xf32, #tpu.memory_space<vmem>>, vector<16x16x16xf32>
    tpu.vector_store %arg6[%c0_9, %c0_10, %c0_11], %162 {strides = array<i32>} : memref<16x16x16xf32, #tpu.memory_space<vmem>>, vector<16x16x16xf32>,
    return
  }
  func.func @transform_0(%arg0: i32, %arg1: i32) -> (i32, i32, i32) {
    %c0_i32 = arith.constant 0 : i32
    %c0_i32_0 = arith.constant 0 : i32
    %c0_i32_1 = arith.constant 0 : i32
    return %arg0, %c0_i32, %c0_i32_0 : i32, i32, i32
  }
  func.func @transform_1(%arg0: i32, %arg1: i32) -> (i32, i32) {
    %c0_i32 = arith.constant 0 : i32
    %c0_i32_0 = arith.constant 0 : i32
    return %arg1, %c0_i32 : i32, i32
  }
  func.func @transform_2(%arg0: i32, %arg1: i32) -> (i32, i32) {
    %c0_i32 = arith.constant 0 : i32
    %c0_i32_0 = arith.constant 0 : i32
    %c0_i32_1 = arith.constant 0 : i32
    return %c0_i32, %c0_i32_0 : i32, i32
  }
  func.func @transform_3(%arg0: i32, %arg1: i32) -> (i32, i32, i32) {
    %c0_i32 = arith.constant 0 : i32
    %c0_i32_0 = arith.constant 0 : i32
    return %arg0, %arg1, %c0_i32 : i32, i32, i32
  }
  func.func @transform_4(%arg0: i32, %arg1: i32) -> (i32, i32, i32) {
    %c0_i32 = arith.constant 0 : i32
    %c0_i32_0 = arith.constant 0 : i32
    return %arg0, %arg1, %c0_i32 : i32, i32, i32
  }
}

</mosaic_0001>

<llo_original>
// kernel: _lambda_.3
$region0: #{_lambda_.3}
  #allocation0 [shape = 'u32[]', space=smem, size = 0x4, offset = 0x4, fixed_abs, tag = 'smem constant byte address 0x4 - core index']
  #allocation1 [shape = 'u32[144,128]{1,0:T(1,128)}', space=vmem, size = 0x12000, scoped, tag = 'internal scratch']
  %s0 = inlined_call_operand.vmem [shape: f32[4,4,512], index: 0, kind: input, shape index: {}]
  %s1 = inlined_call_operand.vmem [shape: f32[4,512], index: 1, kind: output, shape index: {}]
  %s2 = sld [smem:[#allocation0]]
  $region14: #{_lambda_.3} parent=0
    _
  %s4 = ssub.s32 1, %s2
  %s5 = scalar_select 0, %s4, %s2
  // Predicated region
  $region2: #{_lambda_.3} parent=0 // pred_check
    _
  $region3: #{_lambda_.3} parent=0 // pred_check_branch
    %7 = sbr.rel (0) target = $region5
  $region4: #{_lambda_.3} parent=0 // pred_region
    _
  $region5: #{_lambda_.3} parent=0 // pred_fallthru
    _
  %v8 = vld [vmem:[%s0] sm:$0xff]
  %v9 = vld [vmem:[%s0 + $0x8] sm:$0xff]
  %v10 = vld [vmem:[%s0 + $0x10] sm:$0xff]
  %v11 = vld [vmem:[%s0 + $0x18] sm:$0xff]
  %v12 = vld [vmem:[%s0 + $0x20] sm:$0xff]
  %v13 = vld [vmem:[%s0 + $0x28] sm:$0xff]
  %v14 = vld [vmem:[%s0 + $0x30] sm:$0xff]
  %v15 = vld [vmem:[%s0 + $0x38] sm:$0xff]
  %v16 = vmul.f32 %v8, %v8
  %v17 = vmul.f32 %v9, %v9
  %v18 = vmul.f32 %v10, %v10
  %v19 = vmul.f32 %v11, %v11
  %v20 = vmul.f32 %v12, %v12
  %v21 = vmul.f32 %v13, %v13
  %v22 = vmul.f32 %v14, %v14
  %v23 = vmul.f32 %v15, %v15
  %v32 = vcombine.high %v16, %v16
  %v33 = vcombine.high %v17, %v17
  %v34 = vcombine.high %v18, %v18
  %v35 = vcombine.high %v19, %v19
  %v36 = vcombine.high %v20, %v20
  %v37 = vcombine.high %v21, %v21
  %v38 = vcombine.high %v22, %v22
  %v39 = vcombine.high %v23, %v23
  %vm48 = vcmask 1043456
  %v49 = vsel %vm48, %v16, 0.0
  %v50 = vsel %vm48, %v18, 0.0
  %v51 = vadd.f32 %v49, %v50
  %v52 = vsel %vm48, %v20, 0.0
  %v53 = vadd.f32 %v51, %v52
  %v54 = vsel %vm48, %v22, 0.0
  %v55 = vadd.f32 %v53, %v54
  %v56 = vsel %vm48, %v32, 0.0
  %v57 = vsel %vm48, %v34, 0.0
  %v58 = vadd.f32 %v56, %v57
  %v59 = vsel %vm48, %v36, 0.0
  %v60 = vadd.f32 %v58, %v59
  %v61 = vsel %vm48, %v38, 0.0
  %v62 = vadd.f32 %v60, %v61
  %v63 = vsel %vm48, %v17, 0.0
  %v64 = vsel %vm48, %v19, 0.0
  %v65 = vadd.f32 %v63, %v64
  %v66 = vsel %vm48, %v21, 0.0
  %v67 = vadd.f32 %v65, %v66
  %v68 = vsel %vm48, %v23, 0.0
  %v69 = vadd.f32 %v67, %v68
  %v70 = vsel %vm48, %v33, 0.0
  %v71 = vsel %vm48, %v35, 0.0
  %v72 = vadd.f32 %v70, %v71
  %v73 = vsel %vm48, %v37, 0.0
  %v74 = vadd.f32 %v72, %v73
  %v75 = vsel %vm48, %v39, 0.0
  %v76 = vadd.f32 %v74, %v75
  %v80 = vunpack.c.l.s4 1966171168
  %v81 = vunpack.c.0.s8 %v80
  %v82 = vlaneseq
  %v83 = vshrl.u32 %v82, 7
  %v84 = vsub.s32 %v81, %v83
  %v85 = vrot.slane %v8, %v84
  %v87 = vunpack.c.l.s4 1966171168
  %v88 = vunpack.c.0.s8 %v87
  %v89 = vlaneseq
  %v90 = vshrl.u32 %v89, 7
  %v91 = vsub.s32 %v88, %v90
  %v92 = vrot.slane %v9, %v91
  %v93 = vcombine.low %v85, %v92
  %v94 = vcombine.high %v85, %v92
  %v96 = vunpack.c.l.s4 1966171168
  %v97 = vunpack.c.0.s8 %v96
  %v98 = vlaneseq
  %v99 = vshrl.u32 %v98, 7
  %v100 = vsub.s32 %v97, %v99
  %v101 = vrot.slane %v93, %v100
  %v103 = vunpack.c.l.s4 1966171168
  %v104 = vunpack.c.0.s8 %v103
  %v105 = vlaneseq
  %v106 = vshrl.u32 %v105, 7
  %v107 = vsub.s32 %v104, %v106
  %v108 = vrot.slane %v94, %v107
  %v109 = vcombine.high %v101, %v101
  %v110 = vcombine.high %v108, %v108
  %v111 = vlaneseq
  %v112 = vshrl.u32 %v111, 7
  %v113 = vsub.s32 0, %v112
  %v114 = vrot.slane %v101, %v113
  %v115 = vlaneseq
  %v116 = vshrl.u32 %v115, 7
  %v117 = vsub.s32 1, %v116
  %v118 = vrot.slane %v101, %v117
  %v119 = vlaneseq
  %v120 = vshrl.u32 %v119, 7
  %v121 = vsub.s32 2, %v120
  %v122 = vrot.slane %v101, %v121
  %v123 = vlaneseq
  %v124 = vshrl.u32 %v123, 7
  %v125 = vsub.s32 3, %v124
  %v126 = vrot.slane %v101, %v125
  %v127 = vlaneseq
  %v128 = vshrl.u32 %v127, 7
  %v129 = vsub.s32 0, %v128
  %v130 = vrot.slane %v108, %v129
  %v131 = vlaneseq
  %v132 = vshrl.u32 %v131, 7
  %v133 = vsub.s32 1, %v132
  %v134 = vrot.slane %v108, %v133
  %v135 = vlaneseq
  %v136 = vshrl.u32 %v135, 7
  %v137 = vsub.s32 2, %v136
  %v138 = vrot.slane %v108, %v137
  %v139 = vlaneseq
  %v140 = vshrl.u32 %v139, 7
  %v141 = vsub.s32 3, %v140
  %v142 = vrot.slane %v108, %v141
  %v143 = vlaneseq
  %v144 = vshrl.u32 %v143, 7
  %v145 = vsub.s32 0, %v144
  %v146 = vrot.slane %v109, %v145
  %v147 = vlaneseq
  %v148 = vshrl.u32 %v147, 7
  %v149 = vsub.s32 1, %v148
  %v150 = vrot.slane %v109, %v149
  %v151 = vlaneseq
  %v152 = vshrl.u32 %v151, 7
  %v153 = vsub.s32 2, %v152
  %v154 = vrot.slane %v109, %v153
  %v155 = vlaneseq
  %v156 = vshrl.u32 %v155, 7
  %v157 = vsub.s32 3, %v156
  %v158 = vrot.slane %v109, %v157
  %v159 = vlaneseq
  %v160 = vshrl.u32 %v159, 7
  %v161 = vsub.s32 0, %v160
  %v162 = vrot.slane %v110, %v161
  %v163 = vlaneseq
  %v164 = vshrl.u32 %v163, 7
  %v165 = vsub.s32 1, %v164
  %v166 = vrot.slane %v110, %v165
  %v167 = vlaneseq
  %v168 = vshrl.u32 %v167, 7
  %v169 = vsub.s32 2, %v168
  %v170 = vrot.slane %v110, %v169
  %v171 = vlaneseq
  %v172 = vshrl.u32 %v171, 7
  %v173 = vsub.s32 3, %v172
  %v174 = vrot.slane %v110, %v173
  %v191 = vcombine.high %v8, %v8
  %v192 = vcombine.high %v9, %v9
  %v195 = vmul.f32 %v114, %v8
  %v196 = vmul.f32 %v118, %v191
  %v197 = vmul.f32 %v122, %v9
  %v198 = vmul.f32 %v126, %v192
  %v199 = vmul.f32 %v130, %v8
  %v200 = vmul.f32 %v134, %v191
  %v201 = vmul.f32 %v138, %v9
  %v202 = vmul.f32 %v142, %v192
  %v203 = vmul.f32 %v146, %v8
  %v204 = vmul.f32 %v150, %v191
  %v205 = vmul.f32 %v154, %v9
  %v206 = vmul.f32 %v158, %v192
  %v207 = vmul.f32 %v162, %v8
  %v208 = vmul.f32 %v166, %v191
  %v209 = vmul.f32 %v170, %v9
  %v210 = vmul.f32 %v174, %v192
  %v214 = vunpack.c.l.s4 1966171168
  %v215 = vunpack.c.0.s8 %v214
  %v216 = vlaneseq
  %v217 = vshrl.u32 %v216, 7
  %v218 = vsub.s32 %v215, %v217
  %v219 = vrot.slane %v10, %v218
  %v221 = vunpack.c.l.s4 1966171168
  %v222 = vunpack.c.0.s8 %v221
  %v223 = vlaneseq
  %v224 = vshrl.u32 %v223, 7
  %v225 = vsub.s32 %v222, %v224
  %v226 = vrot.slane %v11, %v225
  %v227 = vcombine.low %v219, %v226
  %v228 = vcombine.high %v219, %v226
  %v230 = vunpack.c.l.s4 1966171168
  %v231 = vunpack.c.0.s8 %v230
  %v232 = vlaneseq
  %v233 = vshrl.u32 %v232, 7
  %v234 = vsub.s32 %v231, %v233
  %v235 = vrot.slane %v227, %v234
  %v237 = vunpack.c.l.s4 1966171168
  %v238 = vunpack.c.0.s8 %v237
  %v239 = vlaneseq
  %v240 = vshrl.u32 %v239, 7
  %v241 = vsub.s32 %v238, %v240
  %v242 = vrot.slane %v228, %v241
  %v243 = vcombine.high %v235, %v235
  %v244 = vcombine.high %v242, %v242
  %v245 = vlaneseq
  %v246 = vshrl.u32 %v245, 7
  %v247 = vsub.s32 0, %v246
  %v248 = vrot.slane %v235, %v247
  %v249 = vlaneseq
  %v250 = vshrl.u32 %v249, 7
  %v251 = vsub.s32 1, %v250
  %v252 = vrot.slane %v235, %v251
  %v253 = vlaneseq
  %v254 = vshrl.u32 %v253, 7
  %v255 = vsub.s32 2, %v254
  %v256 = vrot.slane %v235, %v255
  %v257 = vlaneseq
  %v258 = vshrl.u32 %v257, 7
  %v259 = vsub.s32 3, %v258
  %v260 = vrot.slane %v235, %v259
  %v261 = vlaneseq
  %v262 = vshrl.u32 %v261, 7
  %v263 = vsub.s32 0, %v262
  %v264 = vrot.slane %v242, %v263
  %v265 = vlaneseq
  %v266 = vshrl.u32 %v265, 7
  %v267 = vsub.s32 1, %v266
  %v268 = vrot.slane %v242, %v267
  %v269 = vlaneseq
  %v270 = vshrl.u32 %v269, 7
  %v271 = vsub.s32 2, %v270
  %v272 = vrot.slane %v242, %v271
  %v273 = vlaneseq
  %v274 = vshrl.u32 %v273, 7
  %v275 = vsub.s32 3, %v274
  %v276 = vrot.slane %v242, %v275
  %v277 = vlaneseq
  %v278 = vshrl.u32 %v277, 7
  %v279 = vsub.s32 0, %v278
  %v280 = vrot.slane %v243, %v279
  %v281 = vlaneseq
  %v282 = vshrl.u32 %v281, 7
  %v283 = vsub.s32 1, %v282
  %v284 = vrot.slane %v243, %v283
  %v285 = vlaneseq
  %v286 = vshrl.u32 %v285, 7
  %v287 = vsub.s32 2, %v286
  %v288 = vrot.slane %v243, %v287
  %v289 = vlaneseq
  %v290 = vshrl.u32 %v289, 7
  %v291 = vsub.s32 3, %v290
  %v292 = vrot.slane %v243, %v291
  %v293 = vlaneseq
  %v294 = vshrl.u32 %v293, 7
  %v295 = vsub.s32 0, %v294
  %v296 = vrot.slane %v244, %v295
  %v297 = vlaneseq
  %v298 = vshrl.u32 %v297, 7
  %v299 = vsub.s32 1, %v298
  %v300 = vrot.slane %v244, %v299
  %v301 = vlaneseq
  %v302 = vshrl.u32 %v301, 7
  %v303 = vsub.s32 2, %v302
  %v304 = vrot.slane %v244, %v303
  %v305 = vlaneseq
  %v306 = vshrl.u32 %v305, 7
  %v307 = vsub.s32 3, %v306
  %v308 = vrot.slane %v244, %v307
  %v325 = vcombine.high %v10, %v10
  %v326 = vcombine.high %v11, %v11
  %v329 = vmul.f32 %v248, %v10
  %v330 = vmul.f32 %v252, %v325
  %v331 = vmul.f32 %v256, %v11
  %v332 = vmul.f32 %v260, %v326
  %v333 = vmul.f32 %v264, %v10
  %v334 = vmul.f32 %v268, %v325
  %v335 = vmul.f32 %v272, %v11
  %v336 = vmul.f32 %v276, %v326
  %v337 = vmul.f32 %v280, %v10
  %v338 = vmul.f32 %v284, %v325
  %v339 = vmul.f32 %v288, %v11
  %v340 = vmul.f32 %v292, %v326
  %v341 = vmul.f32 %v296, %v10
  %v342 = vmul.f32 %v300, %v325
  %v343 = vmul.f32 %v304, %v11
  %v344 = vmul.f32 %v308, %v326
  %v345 = vadd.f32 %v195, %v329
  %v346 = vadd.f32 %v196, %v330
  %v347 = vadd.f32 %v197, %v331
  %v348 = vadd.f32 %v198, %v332
  %v349 = vadd.f32 %v199, %v333
  %v350 = vadd.f32 %v200, %v334
  %v351 = vadd.f32 %v201, %v335
  %v352 = vadd.f32 %v202, %v336
  %v353 = vadd.f32 %v203, %v337
  %v354 = vadd.f32 %v204, %v338
  %v355 = vadd.f32 %v205, %v339
  %v356 = vadd.f32 %v206, %v340
  %v357 = vadd.f32 %v207, %v341
  %v358 = vadd.f32 %v208, %v342
  %v359 = vadd.f32 %v209, %v343
  %v360 = vadd.f32 %v210, %v344
  %v364 = vunpack.c.l.s4 1966171168
  %v365 = vunpack.c.0.s8 %v364
  %v366 = vlaneseq
  %v367 = vshrl.u32 %v366, 7
  %v368 = vsub.s32 %v365, %v367
  %v369 = vrot.slane %v12, %v368
  %v371 = vunpack.c.l.s4 1966171168
  %v372 = vunpack.c.0.s8 %v371
  %v373 = vlaneseq
  %v374 = vshrl.u32 %v373, 7
  %v375 = vsub.s32 %v372, %v374
  %v376 = vrot.slane %v13, %v375
  %v377 = vcombine.low %v369, %v376
  %v378 = vcombine.high %v369, %v376
  %v380 = vunpack.c.l.s4 1966171168
  %v381 = vunpack.c.0.s8 %v380
  %v382 = vlaneseq
  %v383 = vshrl.u32 %v382, 7
  %v384 = vsub.s32 %v381, %v383
  %v385 = vrot.slane %v377, %v384
  %v387 = vunpack.c.l.s4 1966171168
  %v388 = vunpack.c.0.s8 %v387
  %v389 = vlaneseq
  %v390 = vshrl.u32 %v389, 7
  %v391 = vsub.s32 %v388, %v390
  %v392 = vrot.slane %v378, %v391
  %v393 = vcombine.high %v385, %v385
  %v394 = vcombine.high %v392, %v392
  %v395 = vlaneseq
  %v396 = vshrl.u32 %v395, 7
  %v397 = vsub.s32 0, %v396
  %v398 = vrot.slane %v385, %v397
  %v399 = vlaneseq
  %v400 = vshrl.u32 %v399, 7
  %v401 = vsub.s32 1, %v400
  %v402 = vrot.slane %v385, %v401
  %v403 = vlaneseq
  %v404 = vshrl.u32 %v403, 7
  %v405 = vsub.s32 2, %v404
  %v406 = vrot.slane %v385, %v405
  %v407 = vlaneseq
  %v408 = vshrl.u32 %v407, 7
  %v409 = vsub.s32 3, %v408
  %v410 = vrot.slane %v385, %v409
  %v411 = vlaneseq
  %v412 = vshrl.u32 %v411, 7
  %v413 = vsub.s32 0, %v412
  %v414 = vrot.slane %v392, %v413
  %v415 = vlaneseq
  %v416 = vshrl.u32 %v415, 7
  %v417 = vsub.s32 1, %v416
  %v418 = vrot.slane %v392, %v417
  %v419 = vlaneseq
  %v420 = vshrl.u32 %v419, 7
  %v421 = vsub.s32 2, %v420
  %v422 = vrot.slane %v392, %v421
  %v423 = vlaneseq
  %v424 = vshrl.u32 %v423, 7
  %v425 = vsub.s32 3, %v424
  %v426 = vrot.slane %v392, %v425
  %v427 = vlaneseq
  %v428 = vshrl.u32 %v427, 7
  %v429 = vsub.s32 0, %v428
  %v430 = vrot.slane %v393, %v429
  %v431 = vlaneseq
  %v432 = vshrl.u32 %v431, 7
  %v433 = vsub.s32 1, %v432
  %v434 = vrot.slane %v393, %v433
  %v435 = vlaneseq
  %v436 = vshrl.u32 %v435, 7
  %v437 = vsub.s32 2, %v436
  %v438 = vrot.slane %v393, %v437
  %v439 = vlaneseq
  %v440 = vshrl.u32 %v439, 7
  %v441 = vsub.s32 3, %v440
  %v442 = vrot.slane %v393, %v441
  %v443 = vlaneseq
  %v444 = vshrl.u32 %v443, 7
  %v445 = vsub.s32 0, %v444
  %v446 = vrot.slane %v394, %v445
  %v447 = vlaneseq
  %v448 = vshrl.u32 %v447, 7
  %v449 = vsub.s32 1, %v448
  %v450 = vrot.slane %v394, %v449
  %v451 = vlaneseq
  %v452 = vshrl.u32 %v451, 7
  %v453 = vsub.s32 2, %v452
  %v454 = vrot.slane %v394, %v453
  %v455 = vlaneseq
  %v456 = vshrl.u32 %v455, 7
  %v457 = vsub.s32 3, %v456
  %v458 = vrot.slane %v394, %v457
  %v475 = vcombine.high %v12, %v12
  %v476 = vcombine.high %v13, %v13
  %v479 = vmul.f32 %v398, %v12
  %v480 = vmul.f32 %v402, %v475
  %v481 = vmul.f32 %v406, %v13
  %v482 = vmul.f32 %v410, %v476
  %v483 = vmul.f32 %v414, %v12
  %v484 = vmul.f32 %v418, %v475
  %v485 = vmul.f32 %v422, %v13
  %v486 = vmul.f32 %v426, %v476
  %v487 = vmul.f32 %v430, %v12
  %v488 = vmul.f32 %v434, %v475
  %v489 = vmul.f32 %v438, %v13
  %v490 = vmul.f32 %v442, %v476
  %v491 = vmul.f32 %v446, %v12
  %v492 = vmul.f32 %v450, %v475
  %v493 = vmul.f32 %v454, %v13
  %v494 = vmul.f32 %v458, %v476
  %v495 = vadd.f32 %v345, %v479
  %v496 = vadd.f32 %v346, %v480
  %v497 = vadd.f32 %v347, %v481
  %v498 = vadd.f32 %v348, %v482
  %v499 = vadd.f32 %v349, %v483
  %v500 = vadd.f32 %v350, %v484
  %v501 = vadd.f32 %v351, %v485
  %v502 = vadd.f32 %v352, %v486
  %v503 = vadd.f32 %v353, %v487
  %v504 = vadd.f32 %v354, %v488
  %v505 = vadd.f32 %v355, %v489
  %v506 = vadd.f32 %v356, %v490
  %v507 = vadd.f32 %v357, %v491
  %v508 = vadd.f32 %v358, %v492
  %v509 = vadd.f32 %v359, %v493
  %v510 = vadd.f32 %v360, %v494
  %v514 = vunpack.c.l.s4 1966171168
  %v515 = vunpack.c.0.s8 %v514
  %v516 = vlaneseq
  %v517 = vshrl.u32 %v516, 7
  %v518 = vsub.s32 %v515, %v517
  %v519 = vrot.slane %v14, %v518
  %v521 = vunpack.c.l.s4 1966171168
  %v522 = vunpack.c.0.s8 %v521
  %v523 = vlaneseq
  %v524 = vshrl.u32 %v523, 7
  %v525 = vsub.s32 %v522, %v524
  %v526 = vrot.slane %v15, %v525
  %v527 = vcombine.low %v519, %v526
  %v528 = vcombine.high %v519, %v526
  %v530 = vunpack.c.l.s4 1966171168
  %v531 = vunpack.c.0.s8 %v530
  %v532 = vlaneseq
  %v533 = vshrl.u32 %v532, 7
  %v534 = vsub.s32 %v531, %v533
  %v535 = vrot.slane %v527, %v534
  %v537 = vunpack.c.l.s4 1966171168
  %v538 = vunpack.c.0.s8 %v537
  %v539 = vlaneseq
  %v540 = vshrl.u32 %v539, 7
  %v541 = vsub.s32 %v538, %v540
  %v542 = vrot.slane %v528, %v541
  %v543 = vcombine.high %v535, %v535
  %v544 = vcombine.high %v542, %v542
  %v545 = vlaneseq
  %v546 = vshrl.u32 %v545, 7
  %v547 = vsub.s32 0, %v546
  %v548 = vrot.slane %v535, %v547
  %v549 = vlaneseq
  %v550 = vshrl.u32 %v549, 7
  %v551 = vsub.s32 1, %v550
  %v552 = vrot.slane %v535, %v551
  %v553 = vlaneseq
  %v554 = vshrl.u32 %v553, 7
  %v555 = vsub.s32 2, %v554
  %v556 = vrot.slane %v535, %v555
  %v557 = vlaneseq
  %v558 = vshrl.u32 %v557, 7
  %v559 = vsub.s32 3, %v558
  %v560 = vrot.slane %v535, %v559
  %v561 = vlaneseq
  %v562 = vshrl.u32 %v561, 7
  %v563 = vsub.s32 0, %v562
  %v564 = vrot.slane %v542, %v563
  %v565 = vlaneseq
  %v566 = vshrl.u32 %v565, 7
  %v567 = vsub.s32 1, %v566
  %v568 = vrot.slane %v542, %v567
  %v569 = vlaneseq
  %v570 = vshrl.u32 %v569, 7
  %v571 = vsub.s32 2, %v570
  %v572 = vrot.slane %v542, %v571
  %v573 = vlaneseq
  %v574 = vshrl.u32 %v573, 7
  %v575 = vsub.s32 3, %v574
  %v576 = vrot.slane %v542, %v575
  %v577 = vlaneseq
  %v578 = vshrl.u32 %v577, 7
  %v579 = vsub.s32 0, %v578
  %v580 = vrot.slane %v543, %v579
  %v581 = vlaneseq
  %v582 = vshrl.u32 %v581, 7
  %v583 = vsub.s32 1, %v582
  %v584 = vrot.slane %v543, %v583
  %v585 = vlaneseq
  %v586 = vshrl.u32 %v585, 7
  %v587 = vsub.s32 2, %v586
  %v588 = vrot.slane %v543, %v587
  %v589 = vlaneseq
  %v590 = vshrl.u32 %v589, 7
  %v591 = vsub.s32 3, %v590
  %v592 = vrot.slane %v543, %v591
  %v593 = vlaneseq
  %v594 = vshrl.u32 %v593, 7
  %v595 = vsub.s32 0, %v594
  %v596 = vrot.slane %v544, %v595
  %v597 = vlaneseq
  %v598 = vshrl.u32 %v597, 7
  %v599 = vsub.s32 1, %v598
  %v600 = vrot.slane %v544, %v599
  %v601 = vlaneseq
  %v602 = vshrl.u32 %v601, 7
  %v603 = vsub.s32 2, %v602
  %v604 = vrot.slane %v544, %v603
  %v605 = vlaneseq
  %v606 = vshrl.u32 %v605, 7
  %v607 = vsub.s32 3, %v606
  %v608 = vrot.slane %v544, %v607
  %v625 = vcombine.high %v14, %v14
  %v626 = vcombine.high %v15, %v15
  %v629 = vmul.f32 %v548, %v14
  %v630 = vmul.f32 %v552, %v625
  %v631 = vmul.f32 %v556, %v15
  %v632 = vmul.f32 %v560, %v626
  %v633 = vmul.f32 %v564, %v14
  %v634 = vmul.f32 %v568, %v625
  %v635 = vmul.f32 %v572, %v15
  %v636 = vmul.f32 %v576, %v626
  %v637 = vmul.f32 %v580, %v14
  %v638 = vmul.f32 %v584, %v625
  %v639 = vmul.f32 %v588, %v15
  %v640 = vmul.f32 %v592, %v626
  %v641 = vmul.f32 %v596, %v14
  %v642 = vmul.f32 %v600, %v625
  %v643 = vmul.f32 %v604, %v15
  %v644 = vmul.f32 %v608, %v626
  %v645 = vadd.f32 %v495, %v629
  %v646 = vadd.f32 %v496, %v630
  %v647 = vadd.f32 %v497, %v631
  %v648 = vadd.f32 %v498, %v632
  %v649 = vadd.f32 %v499, %v633
  %v650 = vadd.f32 %v500, %v634
  %v651 = vadd.f32 %v501, %v635
  %v652 = vadd.f32 %v502, %v636
  %v653 = vadd.f32 %v503, %v637
  %v654 = vadd.f32 %v504, %v638
  %v655 = vadd.f32 %v505, %v639
  %v656 = vadd.f32 %v506, %v640
  %v657 = vadd.f32 %v507, %v641
  %v658 = vadd.f32 %v508, %v642
  %v659 = vadd.f32 %v509, %v643
  %v660 = vadd.f32 %v510, %v644
  %v665 = vcombine.low %v55, %v62
  %v666 = vcombine.low %v69, %v76
  %v668 = vunpack.c.l.s4 1966171168
  %v669 = vunpack.c.0.s8 %v668
  %v670 = vlaneseq
  %v671 = vshrl.u32 %v670, 7
  %v672 = vsub.s32 %v669, %v671
  %v673 = vrot.slane %v665, %v672
  %v675 = vunpack.c.l.s4 1966171168
  %v676 = vunpack.c.0.s8 %v675
  %v677 = vlaneseq
  %v678 = vshrl.u32 %v677, 7
  %v679 = vsub.s32 %v676, %v678
  %v680 = vrot.slane %v666, %v679
  %v681 = vcombine.low %v673, %v680
  %v682 = vcombine.high %v673, %v680
  %v684 = vunpack.c.l.s4 1966171168
  %v685 = vunpack.c.0.s8 %v684
  %v686 = vlaneseq
  %v687 = vshrl.u32 %v686, 7
  %v688 = vsub.s32 %v685, %v687
  %v689 = vrot.slane %v681, %v688
  %v691 = vunpack.c.l.s4 1966171168
  %v692 = vunpack.c.0.s8 %v691
  %v693 = vlaneseq
  %v694 = vshrl.u32 %v693, 7
  %v695 = vsub.s32 %v692, %v694
  %v696 = vrot.slane %v682, %v695
  %v697 = vcombine.high %v689, %v689
  %v698 = vcombine.high %v696, %v696
  %v699 = vlaneseq
  %v700 = vshrl.u32 %v699, 7
  %v701 = vsub.s32 0, %v700
  %v702 = vrot.slane %v689, %v701
  %v703 = vlaneseq
  %v704 = vshrl.u32 %v703, 7
  %v705 = vsub.s32 1, %v704
  %v706 = vrot.slane %v689, %v705
  %v707 = vlaneseq
  %v708 = vshrl.u32 %v707, 7
  %v709 = vsub.s32 2, %v708
  %v710 = vrot.slane %v689, %v709
  %v711 = vlaneseq
  %v712 = vshrl.u32 %v711, 7
  %v713 = vsub.s32 3, %v712
  %v714 = vrot.slane %v689, %v713
  %v715 = vlaneseq
  %v716 = vshrl.u32 %v715, 7
  %v717 = vsub.s32 0, %v716
  %v718 = vrot.slane %v696, %v717
  %v719 = vlaneseq
  %v720 = vshrl.u32 %v719, 7
  %v721 = vsub.s32 1, %v720
  %v722 = vrot.slane %v696, %v721
  %v723 = vlaneseq
  %v724 = vshrl.u32 %v723, 7
  %v725 = vsub.s32 2, %v724
  %v726 = vrot.slane %v696, %v725
  %v727 = vlaneseq
  %v728 = vshrl.u32 %v727, 7
  %v729 = vsub.s32 3, %v728
  %v730 = vrot.slane %v696, %v729
  %v731 = vlaneseq
  %v732 = vshrl.u32 %v731, 7
  %v733 = vsub.s32 0, %v732
  %v734 = vrot.slane %v697, %v733
  %v735 = vlaneseq
  %v736 = vshrl.u32 %v735, 7
  %v737 = vsub.s32 1, %v736
  %v738 = vrot.slane %v697, %v737
  %v739 = vlaneseq
  %v740 = vshrl.u32 %v739, 7
  %v741 = vsub.s32 2, %v740
  %v742 = vrot.slane %v697, %v741
  %v743 = vlaneseq
  %v744 = vshrl.u32 %v743, 7
  %v745 = vsub.s32 3, %v744
  %v746 = vrot.slane %v697, %v745
  %v747 = vlaneseq
  %v748 = vshrl.u32 %v747, 7
  %v749 = vsub.s32 0, %v748
  %v750 = vrot.slane %v698, %v749
  %v751 = vlaneseq
  %v752 = vshrl.u32 %v751, 7
  %v753 = vsub.s32 1, %v752
  %v754 = vrot.slane %v698, %v753
  %v755 = vlaneseq
  %v756 = vshrl.u32 %v755, 7
  %v757 = vsub.s32 2, %v756
  %v758 = vrot.slane %v698, %v757
  %v759 = vlaneseq
  %v760 = vshrl.u32 %v759, 7
  %v761 = vsub.s32 3, %v760
  %v762 = vrot.slane %v698, %v761
  %v779 = vadd.f32 %v702, %v55
  %v780 = vadd.f32 %v706, %v62
  %v781 = vadd.f32 %v710, %v69
  %v782 = vadd.f32 %v714, %v76
  %v783 = vadd.f32 %v718, %v55
  %v784 = vadd.f32 %v722, %v62
  %v785 = vadd.f32 %v726, %v69
  %v786 = vadd.f32 %v730, %v76
  %v787 = vadd.f32 %v734, %v55
  %v788 = vadd.f32 %v738, %v62
  %v789 = vadd.f32 %v742, %v69
  %v790 = vadd.f32 %v746, %v76
  %v791 = vadd.f32 %v750, %v55
  %v792 = vadd.f32 %v754, %v62
  %v793 = vadd.f32 %v758, %v69
  %v794 = vadd.f32 %v762, %v76
  %v795 = vmul.f32 %v645, 2.0
  %v796 = vmul.f32 %v646, 2.0
  %v797 = vmul.f32 %v647, 2.0
  %v798 = vmul.f32 %v648, 2.0
  %v799 = vmul.f32 %v649, 2.0
  %v800 = vmul.f32 %v650, 2.0
  %v801 = vmul.f32 %v651, 2.0
  %v802 = vmul.f32 %v652, 2.0
  %v803 = vmul.f32 %v653, 2.0
  %v804 = vmul.f32 %v654, 2.0
  %v805 = vmul.f32 %v655, 2.0
  %v806 = vmul.f32 %v656, 2.0
  %v807 = vmul.f32 %v657, 2.0
  %v808 = vmul.f32 %v658, 2.0
  %v809 = vmul.f32 %v659, 2.0
  %v810 = vmul.f32 %v660, 2.0
  %v811 = vsub.f32 %v779, %v795
  %v812 = vsub.f32 %v780, %v796
  %v813 = vsub.f32 %v781, %v797
  %v814 = vsub.f32 %v782, %v798
  %v815 = vsub.f32 %v783, %v799
  %v816 = vsub.f32 %v784, %v800
  %v817 = vsub.f32 %v785, %v801
  %v818 = vsub.f32 %v786, %v802
  %v819 = vsub.f32 %v787, %v803
  %v820 = vsub.f32 %v788, %v804
  %v821 = vsub.f32 %v789, %v805
  %v822 = vsub.f32 %v790, %v806
  %v823 = vsub.f32 %v791, %v807
  %v824 = vsub.f32 %v792, %v808
  %v825 = vsub.f32 %v793, %v809
  %v826 = vsub.f32 %v794, %v810
  %v827 = vmax.f32 %v811, 0.0
  %v828 = vmax.f32 %v812, 0.0
  %v829 = vmax.f32 %v813, 0.0
  %v830 = vmax.f32 %v814, 0.0
  %v831 = vmax.f32 %v815, 0.0
  %v832 = vmax.f32 %v816, 0.0
  %v833 = vmax.f32 %v817, 0.0
  %v834 = vmax.f32 %v818, 0.0
  %v835 = vmax.f32 %v819, 0.0
  %v836 = vmax.f32 %v820, 0.0
  %v837 = vmax.f32 %v821, 0.0
  %v838 = vmax.f32 %v822, 0.0
  %v839 = vmax.f32 %v823, 0.0
  %v840 = vmax.f32 %v824, 0.0
  %v841 = vmax.f32 %v825, 0.0
  %v842 = vmax.f32 %v826, 0.0
  %v843 = vmul.f32 %v827, -0.5
  %v844 = vmul.f32 %v828, -0.5
  %v845 = vmul.f32 %v829, -0.5
  %v846 = vmul.f32 %v830, -0.5
  %v847 = vmul.f32 %v831, -0.5
  %v848 = vmul.f32 %v832, -0.5
  %v849 = vmul.f32 %v833, -0.5
  %v850 = vmul.f32 %v834, -0.5
  %v851 = vmul.f32 %v835, -0.5
  %v852 = vmul.f32 %v836, -0.5
  %v853 = vmul.f32 %v837, -0.5
  %v854 = vmul.f32 %v838, -0.5
  %v855 = vmul.f32 %v839, -0.5
  %v856 = vmul.f32 %v840, -0.5
  %v857 = vmul.f32 %v841, -0.5
  %v858 = vmul.f32 %v842, -0.5
  %v859 = vmul.f32 %v843, 1.442695
  %v860 = vpow.pop %v859
  %v861 = vmul.f32 %v844, 1.442695
  %v862 = vpow.pop %v861
  %v863 = vmul.f32 %v845, 1.442695
  %v864 = vpow.pop %v863
  %v865 = vmul.f32 %v846, 1.442695
  %v866 = vpow.pop %v865
  %v867 = vmul.f32 %v847, 1.442695
  %v868 = vpow.pop %v867
  %v869 = vmul.f32 %v848, 1.442695
  %v870 = vpow.pop %v869
  %v871 = vmul.f32 %v849, 1.442695
  %v872 = vpow.pop %v871
  %v873 = vmul.f32 %v850, 1.442695
  %v874 = vpow.pop %v873
  %v875 = vmul.f32 %v851, 1.442695
  %v876 = vpow.pop %v875
  %v877 = vmul.f32 %v852, 1.442695
  %v878 = vpow.pop %v877
  %v879 = vmul.f32 %v853, 1.442695
  %v880 = vpow.pop %v879
  %v881 = vmul.f32 %v854, 1.442695
  %v882 = vpow.pop %v881
  %v883 = vmul.f32 %v855, 1.442695
  %v884 = vpow.pop %v883
  %v885 = vmul.f32 %v856, 1.442695
  %v886 = vpow.pop %v885
  %v887 = vmul.f32 %v857, 1.442695
  %v888 = vpow.pop %v887
  %v889 = vmul.f32 %v858, 1.442695
  %v890 = vpow.pop %v889
  %v891 = vsel %vm48, %v860, 0.0
  %v892 = vsel %vm48, %v868, 0.0
  %v893 = vadd.f32 %v891, %v892
  %v894 = vsel %vm48, %v876, 0.0
  %v895 = vadd.f32 %v893, %v894
  %v896 = vsel %vm48, %v884, 0.0
  %v897 = vadd.f32 %v895, %v896
  %v898 = vsel %vm48, %v862, 0.0
  %v899 = vsel %vm48, %v870, 0.0
  %v900 = vadd.f32 %v898, %v899
  %v901 = vsel %vm48, %v878, 0.0
  %v902 = vadd.f32 %v900, %v901
  %v903 = vsel %vm48, %v886, 0.0
  %v904 = vadd.f32 %v902, %v903
  %v905 = vsel %vm48, %v864, 0.0
  %v906 = vsel %vm48, %v872, 0.0
  %v907 = vadd.f32 %v905, %v906
  %v908 = vsel %vm48, %v880, 0.0
  %v909 = vadd.f32 %v907, %v908
  %v910 = vsel %vm48, %v888, 0.0
  %v911 = vadd.f32 %v909, %v910
  %v912 = vsel %vm48, %v866, 0.0
  %v913 = vsel %vm48, %v874, 0.0
  %v914 = vadd.f32 %v912, %v913
  %v915 = vsel %vm48, %v882, 0.0
  %v916 = vadd.f32 %v914, %v915
  %v917 = vsel %vm48, %v890, 0.0
  %v918 = vadd.f32 %v916, %v917
  %v919 = vrcp.pop 4.0
  %v920 = vmul.f32 %v897, %v919
  %v921 = vmul.f32 %v904, %v919
  %v922 = vmul.f32 %v911, %v919
  %v923 = vmul.f32 %v918, %v919
  %v928 = vcombine.low %v920, %v921
  %v929 = vcombine.low %v922, %v923
  %932 = vst [vmem:[%s1] sm:$0xff] %v928
  %933 = vst [vmem:[%s1 + $0x8] sm:$0xff] %v929
  // Predicated region
  $region6: #{_lambda_.3} parent=0 // pred_check
    _
  $region7: #{_lambda_.3} parent=0 // pred_check_branch
    %935 = sbr.rel (0) target = $region9
  $region8: #{_lambda_.3} parent=0 // pred_region
    _
  $region9: #{_lambda_.3} parent=0 // pred_fallthru
    _
  // Predicated region
  $region10: #{_lambda_.3} parent=0 // pred_check
    _
  $region11: #{_lambda_.3} parent=0 // pred_check_branch
    %937 = sbr.rel (0) target = $region13
  $region12: #{_lambda_.3} parent=0 // pred_region
    _
  $region13: #{_lambda_.3} parent=0 // pred_fallthru
    _

// kernel: _lambda_.4
$region0: #{_lambda_.4}
  #allocation0 [shape = 'u32[]', space=smem, size = 0x4, offset = 0x4, fixed_abs, tag = 'smem constant byte address 0x4 - core index']
  #allocation1 [shape = 'u32[144,128]{1,0:T(1,128)}', space=vmem, size = 0x12000, scoped, tag = 'internal scratch']
  %s0 = inlined_call_operand.vmem [shape: f32[16,128], index: 0, kind: input, shape index: {}]
  %s1 = inlined_call_operand.vmem [shape: f32[4,16], index: 1, kind: input, shape index: {}]
  %s2 = inlined_call_operand.vmem [shape: f32[4,1], index: 2, kind: input, shape index: {}]
  %s3 = inlined_call_operand.vmem [shape: f32[16,4], index: 3, kind: input, shape index: {}]
  %s4 = inlined_call_operand.vmem [shape: f32[16,1], index: 4, kind: input, shape index: {}]
  %s5 = inlined_call_operand.vmem [shape: f32[16,128], index: 5, kind: output, shape index: {}]
  %s6 = sld [smem:[#allocation0]]
  $region30: #{_lambda_.4} parent=0
    _
  %s8 = ssub.s32 1, %s6
  %s9 = scalar_select 0, %s8, %s6
  // Predicated region
  $region2: #{_lambda_.4} parent=0 // pred_check
    _
  $region3: #{_lambda_.4} parent=0 // pred_check_branch
    %11 = sbr.rel (0) target = $region5
  $region4: #{_lambda_.4} parent=0 // pred_region
    _
  $region5: #{_lambda_.4} parent=0 // pred_fallthru
    _
  // Predicated region
  $region6: #{_lambda_.4} parent=0 // pred_check
    _
  $region7: #{_lambda_.4} parent=0 // pred_check_branch
    %13 = sbr.rel (0) target = $region9
  $region8: #{_lambda_.4} parent=0 // pred_region
    _
  $region9: #{_lambda_.4} parent=0 // pred_fallthru
    _
  // Predicated region
  $region10: #{_lambda_.4} parent=0 // pred_check
    _
  $region11: #{_lambda_.4} parent=0 // pred_check_branch
    %15 = sbr.rel (0) target = $region13
  $region12: #{_lambda_.4} parent=0 // pred_region
    _
  $region13: #{_lambda_.4} parent=0 // pred_fallthru
    _
  // Predicated region
  $region14: #{_lambda_.4} parent=0 // pred_check
    _
  $region15: #{_lambda_.4} parent=0 // pred_check_branch
    %17 = sbr.rel (0) target = $region17
  $region16: #{_lambda_.4} parent=0 // pred_region
    _
  $region17: #{_lambda_.4} parent=0 // pred_fallthru
    _
  // Predicated region
  $region18: #{_lambda_.4} parent=0 // pred_check
    _
  $region19: #{_lambda_.4} parent=0 // pred_check_branch
    %19 = sbr.rel (0) target = $region21
  $region20: #{_lambda_.4} parent=0 // pred_region
    _
  $region21: #{_lambda_.4} parent=0 // pred_fallthru
    _
  %v21 = vld [vmem:[%s0] sm:$0xff]
  %v22 = vld [vmem:[%s0 + $0x8] sm:$0xff]
  %v23 = vpack.c.bf16 %v22, %v21
  %v24 = vld [vmem:[%s1] sm:$0xf]
  %v25 = vpack.c.bf16 %v24, %v24
  %v26 = vld [vmem:[%s3] sm:$0xff]
  %v27 = vld [vmem:[%s3 + $0x8] sm:$0xff]
  %v28 = vpack.c.bf16 %v27, %v26
  %v29 = vld [vmem:[%s2] sm:$0xf]
  %31 = vset.pattern.permute.xlu0 0
  %32 = vperm.xlu0 %31, %v29
  %v33 = vpop.permute.xlu0 %32
  %vm35 = vcmask 130048
  %v37 = vsel %vm35, %v25, 0
  %39 = vmatprep.subr.bf16.mxu0 0
  %40 = vmatpush1.bf16.msra.mxu0 0
  %41 = vmatprep.subr.bf16.mxu0 0
  %42 = vmatpush1.bf16.msra.mxu0 0
  %43 = vmatprep.subr.bf16.mxu0 0
  %44 = vmatpush1.bf16.msra.mxu0 0
  %45 = vmatprep.subr.bf16.mxu0 0
  %46 = vmatpush1.bf16.msra.mxu0 0
  %47 = vmatprep.subr.bf16.mxu0 0
  %48 = vmatpush1.bf16.msra.mxu0 0
  %49 = vmatprep.subr.bf16.mxu0 0
  %50 = vmatpush1.bf16.msra.mxu0 0
  %51 = vmatprep.subr.bf16.mxu0 0
  %52 = vmatpush1.bf16.msra.mxu0 0
  %53 = vmatprep.subr.bf16.mxu0 0
  %54 = vmatpush1.bf16.msra.mxu0 %v23
  %55 = vmatprep.subr.bf16.mxu0 0
  %56 = vmatpush2.bf16.msra.mxu0 0
  %57 = vmatprep.subr.bf16.mxu0 0
  %58 = vmatpush2.bf16.msra.mxu0 0
  %59 = vmatprep.subr.bf16.mxu0 0
  %60 = vmatpush2.bf16.msra.mxu0 0
  %61 = vmatprep.subr.bf16.mxu0 0
  %62 = vmatpush2.bf16.msra.mxu0 0
  %63 = vmatprep.subr.bf16.mxu0 0
  %64 = vmatpush2.bf16.msra.mxu0 0
  %65 = vmatprep.subr.bf16.mxu0 0
  %66 = vmatpush2.bf16.msra.mxu0 0
  %67 = vmatprep.subr.bf16.mxu0 0
  %68 = vmatpush2.bf16.msra.mxu0 0
  %69 = vmatprep.subr.bf16.mxu0 0
  %70 = vmatpush2.bf16.msra.mxu0 0
  %71 = vmatprep.mubr.bf16.mxu0 0
  %72 = vmatmul.mubr.bf16.gmra.mxu0 %v37
  %v73 = vpop.f32.mrf.mxu0
  %v74 = vadd.f32 %v33, %v73
  %v75 = vpop.f32.mrf.mxu0
  %v76 = vpop.f32.mrf.mxu0
  %v77 = vpop.f32.mrf.mxu0
  %78 = vdwg.mxu0
  %v79 = vmax.f32 %v74, 0.0
  %v80 = vpack.c.bf16 %v79, %v79
  %v81 = vld [vmem:[%s4] sm:$0xff]
  %v82 = vld [vmem:[%s4 + $0x8] sm:$0xff]
  %84 = vset.pattern.permute.xlu0 0
  %85 = vperm.xlu0 %84, %v81
  %v86 = vpop.permute.xlu0 %85
  %89 = vset.pattern.permute.xlu0 0
  %90 = vperm.xlu0 %89, %v82
  %v91 = vpop.permute.xlu0 %90
  %vm93 = vcmask 31744
  %v95 = vsel %vm93, %v28, 0
  %vm97 = vcmask 1041408
  %v99 = vsel %vm97, %v80, 0
  %101 = vmatprep.subr.bf16.mxu0 0
  %102 = vmatpush1.bf16.msra.mxu0 0
  %103 = vmatprep.subr.bf16.mxu0 0
  %104 = vmatpush1.bf16.msra.mxu0 0
  %105 = vmatprep.subr.bf16.mxu0 0
  %106 = vmatpush1.bf16.msra.mxu0 0
  %107 = vmatprep.subr.bf16.mxu0 0
  %108 = vmatpush1.bf16.msra.mxu0 0
  %109 = vmatprep.subr.bf16.mxu0 0
  %110 = vmatpush1.bf16.msra.mxu0 0
  %111 = vmatprep.subr.bf16.mxu0 0
  %112 = vmatpush1.bf16.msra.mxu0 0
  %113 = vmatprep.subr.bf16.mxu0 0
  %114 = vmatpush1.bf16.msra.mxu0 0
  %115 = vmatprep.subr.bf16.mxu0 0
  %116 = vmatpush1.bf16.msra.mxu0 %v99
  %117 = vmatprep.subr.bf16.mxu0 0
  %118 = vmatpush2.bf16.msra.mxu0 0
  %119 = vmatprep.subr.bf16.mxu0 0
  %120 = vmatpush2.bf16.msra.mxu0 0
  %121 = vmatprep.subr.bf16.mxu0 0
  %122 = vmatpush2.bf16.msra.mxu0 0
  %123 = vmatprep.subr.bf16.mxu0 0
  %124 = vmatpush2.bf16.msra.mxu0 0
  %125 = vmatprep.subr.bf16.mxu0 0
  %126 = vmatpush2.bf16.msra.mxu0 0
  %127 = vmatprep.subr.bf16.mxu0 0
  %128 = vmatpush2.bf16.msra.mxu0 0
  %129 = vmatprep.subr.bf16.mxu0 0
  %130 = vmatpush2.bf16.msra.mxu0 0
  %131 = vmatprep.subr.bf16.mxu0 0
  %132 = vmatpush2.bf16.msra.mxu0 0
  %133 = vmatprep.mubr.bf16.mxu0 0
  %134 = vmatmul.mubr.bf16.gmra.mxu0 %v95
  %v135 = vpop.f32.mrf.mxu0
  %v136 = vadd.f32 %v86, %v135
  %v137 = vpop.f32.mrf.mxu0
  %v138 = vpop.f32.mrf.mxu0
  %v139 = vadd.f32 %v91, %v138
  %v140 = vpop.f32.mrf.mxu0
  %141 = vdwg.mxu0
  %v142 = vxor.u32 %v136, 2147483648
  %v143 = vxor.u32 %v139, 2147483648
  %v144 = vmul.f32 %v142, 1.442695
  %v145 = vpow.pop %v144
  %v146 = vmul.f32 %v143, 1.442695
  %v147 = vpow.pop %v146
  %v148 = vadd.f32 %v145, 1.0
  %v149 = vadd.f32 %v147, 1.0
  %v150 = vrcp.pop %v148
  %v151 = vmul.f32 1.0, %v150
  %v152 = vrcp.pop %v149
  %v153 = vmul.f32 1.0, %v152
  %v154 = vadd.f32 %v151, 0.5
  %v155 = vadd.f32 %v153, 0.5
  %156 = vst [vmem:[%s5] sm:$0xff] %v154
  %157 = vst [vmem:[%s5 + $0x8] sm:$0xff] %v155
  // Predicated region
  $region22: #{_lambda_.4} parent=0 // pred_check
    _
  $region23: #{_lambda_.4} parent=0 // pred_check_branch
    %159 = sbr.rel (0) target = $region25
  $region24: #{_lambda_.4} parent=0 // pred_region
    _
  $region25: #{_lambda_.4} parent=0 // pred_fallthru
    _
  // Predicated region
  $region26: #{_lambda_.4} parent=0 // pred_check
    _
  $region27: #{_lambda_.4} parent=0 // pred_check_branch
    %161 = sbr.rel (0) target = $region29
  $region28: #{_lambda_.4} parent=0 // pred_region
    _
  $region29: #{_lambda_.4} parent=0 // pred_fallthru
    _

// kernel: _lambda_.5
$region0: #{_lambda_.5}
  #allocation0 [shape = 'u32[]', space=smem, size = 0x4, offset = 0x4, fixed_abs, tag = 'smem constant byte address 0x4 - core index']
  #allocation1 [shape = 'u32[144,128]{1,0:T(1,128)}', space=vmem, size = 0x12000, scoped, tag = 'internal scratch']
  %s0 = inlined_call_operand.vmem [shape: f32[32,8,8], index: 0, kind: input, shape index: {}]
  %s1 = inlined_call_operand.vmem [shape: f32[16,8], index: 1, kind: input, shape index: {}]
  %s2 = inlined_call_operand.vmem [shape: f32[8,16], index: 2, kind: input, shape index: {}]
  %s3 = inlined_call_operand.vmem [shape: f32[32,16,16], index: 3, kind: input, shape index: {}]
  %s4 = inlined_call_operand.hbm [shape: f32[32,16,16], index: 4, kind: output, shape index: {}]
  %s5 = sld [smem:[#allocation0]]
  $region49: #{_lambda_.5} parent=0
    _
  %s7 = ssub.s32 1, %s5
  %s8 = scalar_select 0, %s7, %s5
  $region1: #{_lambda_.5} parent=0
    #allocation2 [shape = 'u8[262144]{0}', space=vmem, size = 0x40000, scoped, tag = 'output window, operand 0']
    #allocation3 [shape = 's32[2]{0}', space=sflag, size = 0x8, scoped, tag = 'scoped memory for _lambda_.5']
    %9 = vsyncpa [#allocation3], 0
    %s10 = scalar_lea.sflag [#allocation3], 1
    %11 = vsyncpa %s10, 0
    loop: start=0, step=1, limit=4
    $region2: #{_lambda_.5} parent=1 // loop_pre_header
      _
    $region3: #{_lambda_.5} parent=1 // loop_header
      %s13 = sphi 0, %s17
      %p14 = scmp.ge.s32.totalorder %s13, 4
      %s20 = sphi 0, %s32
      %s21 = sphi 0, %s28
      %s22 = sphi 0, %s20
      %s23 = sphi 0, %s21
      %s24 = sphi 0, %s22
      %s25 = sphi 0, %s23
      %s35 = sphi 0, %s37
      %s38 = sphi 0, %s35
      %s39 = sphi 0, %s38
      %s55 = sphi 0, %s39
      %s61 = sphi 0, %s63
      %s64 = sphi 0, %s61
      %s65 = sphi 0, %s64
      %s81 = sphi 0, %s65
      %s85 = sphi 0, %s85
      %s87 = sphi 0, %s85
      %s88 = sphi 0, %s87
      %s102 = sphi 0, %s88
      %s110 = sphi 0, %s112
      %s113 = sphi 0, %s110
      %s114 = sphi 0, %s113
      %s130 = sphi 0, %s114
      %s138 = sphi 0, %s140
      %s141 = sphi 0, %s138
      %s142 = sphi 0, %s141
      %s158 = sphi 0, %s142
    $region4: #{_lambda_.5} parent=1 // loop_header_branch
      %16 = sbr.rel (%p14) target = $region8
    $region5: #{_lambda_.5} parent=1 // loop_body
      %s18 = ssub.s32 %s13, 1
      %s19 = ssub.s32 %s13, 2
      %s26 = sadd.s32 1, %s21
      %p27 = scmp.ge.s32.totalorder %s26, 1
      %s28 = scalar_select %p27, 0, %s26
      %s29 = sadd.s32 1, %s20
      %s30 = scalar_select %p27, %s29, %s20
      %p31 = scmp.ge.s32.totalorder %s30, 2
      %s32 = scalar_select %p31, 0, %s30
      %s33 = ssub.s32 %s20, %s32
      %p34 = scmp.eq.s32.totalorder %s33, 0
      %s36 = sadd.s32 %s35, 1
      %s37 = scalar_select %p34, %s35, %s36
      %p40 = pneg %p34
      %p41 = scmp.eq.s32.totalorder %s13, 1
      %p42 = por %p40, %p41
      %p43 = scmp.ne.s32.totalorder %s35, %s38
      %p44 = scmp.eq.s32.totalorder %s13, 0
      %p45 = por %p43, %p44
      %p46 = scmp.ne.s32.totalorder %s35, %s38
      %p47 = scmp.eq.s32.totalorder %s18, 1
      %p48 = por %p46, %p47
      %p49 = scmp.ne.s32.totalorder %s38, %s39
      %p50 = scmp.eq.s32.totalorder %s18, 0
      %p51 = por %p49, %p50
      %p52 = scmp.ne.s32.totalorder %s38, %s39
      %p53 = scmp.eq.s32.totalorder %s19, 1
      %p54 = por %p52, %p53
      %p56 = scmp.ne.s32.totalorder %s39, %s55
      %p57 = scmp.eq.s32.totalorder %s19, 0
      %p58 = por %p56, %p57
      %s59 = ssub.s32 %s21, %s28
      %p60 = scmp.eq.s32.totalorder %s59, 0
      %s62 = sadd.s32 %s61, 1
      %s63 = scalar_select %p60, %s61, %s62
      %p66 = pneg %p60
      %p67 = scmp.eq.s32.totalorder %s13, 1
      %p68 = por %p66, %p67
      %p69 = scmp.ne.s32.totalorder %s61, %s64
      %p70 = scmp.eq.s32.totalorder %s13, 0
      %p71 = por %p69, %p70
      %p72 = scmp.ne.s32.totalorder %s61, %s64
      %p73 = scmp.eq.s32.totalorder %s18, 1
      %p74 = por %p72, %p73
      %p75 = scmp.ne.s32.totalorder %s64, %s65
      %p76 = scmp.eq.s32.totalorder %s18, 0
      %p77 = por %p75, %p76
      %p78 = scmp.ne.s32.totalorder %s64, %s65
      %p79 = scmp.eq.s32.totalorder %s19, 1
      %p80 = por %p78, %p79
      %p82 = scmp.ne.s32.totalorder %s65, %s81
      %p83 = scmp.eq.s32.totalorder %s19, 0
      %p84 = por %p82, %p83
      %s86 = sadd.s32 %s85, 1
      %p89 = scmp.eq.s32.totalorder %s13, 1
      %p90 = scmp.ne.s32.totalorder %s85, %s87
      %p91 = scmp.eq.s32.totalorder %s13, 0
      %p92 = por %p90, %p91
      %p93 = scmp.ne.s32.totalorder %s85, %s87
      %p94 = scmp.eq.s32.totalorder %s18, 1
      %p95 = por %p93, %p94
      %p96 = scmp.ne.s32.totalorder %s87, %s88
      %p97 = scmp.eq.s32.totalorder %s18, 0
      %p98 = por %p96, %p97
      %p99 = scmp.ne.s32.totalorder %s87, %s88
      %p100 = scmp.eq.s32.totalorder %s19, 1
      %p101 = por %p99, %p100
      %p103 = scmp.ne.s32.totalorder %s88, %s102
      %p104 = scmp.eq.s32.totalorder %s19, 0
      %p105 = por %p103, %p104
      %s106 = ssub.s32 %s20, %s32
      %s107 = ssub.s32 %s21, %s28
      %s108 = sor.u32 %s106, %s107
      %p109 = scmp.eq.s32.totalorder %s108, 0
      %s111 = sadd.s32 %s110, 1
      %s112 = scalar_select %p109, %s110, %s111
      %p115 = pneg %p109
      %p116 = scmp.eq.s32.totalorder %s13, 1
      %p117 = por %p115, %p116
      %p118 = scmp.ne.s32.totalorder %s110, %s113
      %p119 = scmp.eq.s32.totalorder %s13, 0
      %p120 = por %p118, %p119
      %p121 = scmp.ne.s32.totalorder %s110, %s113
      %p122 = scmp.eq.s32.totalorder %s18, 1
      %p123 = por %p121, %p122
      %p124 = scmp.ne.s32.totalorder %s113, %s114
      %p125 = scmp.eq.s32.totalorder %s18, 0
      %p126 = por %p124, %p125
      %p127 = scmp.ne.s32.totalorder %s113, %s114
      %p128 = scmp.eq.s32.totalorder %s19, 1
      %p129 = por %p127, %p128
      %p131 = scmp.ne.s32.totalorder %s114, %s130
      %p132 = scmp.eq.s32.totalorder %s19, 0
      %p133 = por %p131, %p132
      %s134 = ssub.s32 %s20, %s32
      %s135 = ssub.s32 %s21, %s28
      %s136 = sor.u32 %s134, %s135
      %p137 = scmp.eq.s32.totalorder %s136, 0
      %s139 = sadd.s32 %s138, 1
      %s140 = scalar_select %p137, %s138, %s139
      %p143 = pneg %p137
      %p144 = scmp.eq.s32.totalorder %s13, 1
      %p145 = por %p143, %p144
      %p146 = scmp.ne.s32.totalorder %s138, %s141
      %p147 = scmp.eq.s32.totalorder %s13, 0
      %p148 = por %p146, %p147
      %p149 = scmp.ne.s32.totalorder %s138, %s141
      %p150 = scmp.eq.s32.totalorder %s18, 1
      %p151 = por %p149, %p150
      %p152 = scmp.ne.s32.totalorder %s141, %s142
      %p153 = scmp.eq.s32.totalorder %s18, 0
      %p154 = por %p152, %p153
      %p155 = scmp.ne.s32.totalorder %s141, %s142
      %p156 = scmp.eq.s32.totalorder %s19, 1
      %p157 = por %p155, %p156
      %p159 = scmp.ne.s32.totalorder %s142, %s158
      %p160 = scmp.eq.s32.totalorder %s19, 0
      %p161 = por %p159, %p160
      %p162 = scmp.le.s32.totalorder 1, %s13
      %p163 = scmp.lt.s32.totalorder %s13, 3
      %p164 = pnand %p162, %p163
      %p165 = pneg %p164
      // Predicated region
      $region9: #{_lambda_.5} parent=5 // pred_check
        _
      $region10: #{_lambda_.5} parent=5 // pred_check_branch
        %167 = sbr.rel (%p164) target = $region12
      $region11: #{_lambda_.5} parent=5 // pred_region
        %s168 = ssub.s32 %s13, 1
        // Predicated region
        $region13: #{_lambda_.5} parent=11 // pred_check
          %p169 = pneg %p77
        $region14: #{_lambda_.5} parent=11 // pred_check_branch
          %171 = sbr.rel (%p169) target = $region16
        $region15: #{_lambda_.5} parent=11 // pred_region
          %s172 = smul.u32 2, %s23
          %p173 = scmp.lt.s32.totalorder %s172, 1
          %s174 = scalar_select %p173, %s172, 1
          %s175 = smul.addr %s174, 8
          %s176 = scalar_lea.vmem %s1, %s175
          %s177 = smul.u32 2, %s23
        $region16: #{_lambda_.5} parent=11 // pred_fallthru
          _
        // Predicated region
        $region17: #{_lambda_.5} parent=11 // pred_check
          %p178 = pneg %p98
        $region18: #{_lambda_.5} parent=11 // pred_check_branch
          %180 = sbr.rel (%p178) target = $region20
        $region19: #{_lambda_.5} parent=11 // pred_region
          _
        $region20: #{_lambda_.5} parent=11 // pred_fallthru
          _
      $region12: #{_lambda_.5} parent=5 // pred_fallthru
        _
      %p181 = scmp.lt.s32.totalorder %s13, 2
      // Predicated region
      $region21: #{_lambda_.5} parent=5 // pred_check
        %p182 = pneg %p181
      $region22: #{_lambda_.5} parent=5 // pred_check_branch
        %184 = sbr.rel (%p182) target = $region24
      $region23: #{_lambda_.5} parent=5 // pred_region
        // Predicated region
        $region25: #{_lambda_.5} parent=23 // pred_check
          %p185 = pneg %p45
        $region26: #{_lambda_.5} parent=23 // pred_check_branch
          %187 = sbr.rel (%p185) target = $region28
        $region27: #{_lambda_.5} parent=23 // pred_region
          %s188 = smul.u32 16, %s20
          %p189 = scmp.lt.s32.totalorder %s188, 31
          %s190 = scalar_select %p189, %s188, 31
          %s191 = smul.addr %s190, 8
          %s192 = scalar_lea.vmem %s0, %s191
          %s193 = smul.u32 16, %s20
        $region28: #{_lambda_.5} parent=23 // pred_fallthru
          _
        // Predicated region
        $region29: #{_lambda_.5} parent=23 // pred_check
          %p194 = pneg %p120
        $region30: #{_lambda_.5} parent=23 // pred_check_branch
          %196 = sbr.rel (%p194) target = $region32
        $region31: #{_lambda_.5} parent=23 // pred_region
          %s197 = smul.u32 16, %s20
          %s198 = smul.u32 2, %s21
          %p199 = scmp.lt.s32.totalorder %s197, 31
          %s200 = scalar_select %p199, %s197, 31
          %p201 = scmp.lt.s32.totalorder %s198, 1
          %s202 = scalar_select %p201, %s198, 1
          %s203 = smul.addr %s200, 2
          %s204 = sadd.s32 %s202, %s203
          %s205 = smul.addr %s204, 8
          %s206 = scalar_lea.vmem %s3, %s205
          %s207 = smul.u32 16, %s20
          %s208 = smul.u32 2, %s21
        $region32: #{_lambda_.5} parent=23 // pred_fallthru
          _
      $region24: #{_lambda_.5} parent=5 // pred_fallthru
        _
      %p209 = scmp.le.s32.totalorder 1, %s13
      %p210 = scmp.lt.s32.totalorder %s13, 3
      %p211 = pnand %p209, %p210
      %p212 = pneg %p211
      // Predicated region
      $region33: #{_lambda_.5} parent=5 // pred_check
        _
      $region34: #{_lambda_.5} parent=5 // pred_check_branch
        %214 = sbr.rel (%p211) target = $region36
      $region35: #{_lambda_.5} parent=5 // pred_region
        %s215 = ssub.s32 %s13, 1
        %s216 = smul.u32 16, %s22
        %p217 = scmp.lt.s32.totalorder %s216, 31
        %s218 = scalar_select %p217, %s216, 31
        %s219 = smul.addr %s218, 8
        %s220 = scalar_lea.vmem %s0, %s219
        %p221 = pneg %p51
        %p222 = pneg %p48
        %s223 = smul.u32 2, %s23
        %p224 = scmp.lt.s32.totalorder %s223, 1
        %s225 = scalar_select %p224, %s223, 1
        %s226 = smul.addr %s225, 8
        %s227 = scalar_lea.vmem %s1, %s226
        %p228 = pneg %p77
        %p229 = pneg %p74
        %p230 = pneg %p98
        %p231 = pneg %p95
        %s232 = smul.u32 16, %s22
        %s233 = smul.u32 2, %s23
        %p234 = scmp.lt.s32.totalorder %s232, 31
        %s235 = scalar_select %p234, %s232, 31
        %p236 = scmp.lt.s32.totalorder %s233, 1
        %s237 = scalar_select %p236, %s233, 1
        %s238 = smul.addr %s235, 2
        %s239 = sadd.s32 %s237, %s238
        %s240 = smul.addr %s239, 8
        %s241 = scalar_lea.vmem %s3, %s240
        %p242 = pneg %p126
        %p243 = pneg %p123
        %p244 = pneg %p154
        %p245 = pneg %p151
        %s246 = sand.u32 %s141, 1
        %s247 = scalar_lea.sflag [#allocation3], %s246
        %s248 = sand.u32 %s141, 1
        %s249 = smul.addr %s248, 256
        %s250 = scalar_lea.vmem [#allocation2], %s249
        %s251 = smul.u32 16, %s22
        %p252 = scmp.lt.s32.totalorder %s251, 31
        %s253 = scalar_select %p252, %s251, 31
        %s254 = smul.addr %s253, 8
        %s255 = scalar_lea.vmem %s0, %s254
        %s256 = smul.u32 16, %s22
        %s257 = smul.u32 2, %s23
        %p258 = scmp.lt.s32.totalorder %s257, 1
        %s259 = scalar_select %p258, %s257, 1
        %s260 = smul.addr %s259, 8
        %s261 = scalar_lea.vmem %s1, %s260
        %s262 = smul.u32 2, %s23
        %s263 = smul.u32 16, %s22
        %s264 = smul.u32 2, %s23
        %p265 = scmp.lt.s32.totalorder %s263, 31
        %s266 = scalar_select %p265, %s263, 31
        %p267 = scmp.lt.s32.totalorder %s264, 1
        %s268 = scalar_select %p267, %s264, 1
        %s269 = smul.addr %s266, 2
        %s270 = sadd.s32 %s268, %s269
        %s271 = smul.addr %s270, 8
        %s272 = scalar_lea.vmem %s3, %s271
        %s273 = smul.u32 16, %s22
        %s274 = smul.u32 2, %s23
        %s275 = smul.u32 16, %s22
        %s276 = smul.u32 2, %s23
        %v277 = vld [vmem:[%s255] sm:$0xff]
        %v278 = vld [vmem:[%s255 + $0x8] sm:$0xff]
        %v279 = vld [vmem:[%s255 + $0x10] sm:$0xff]
        %v280 = vld [vmem:[%s255 + $0x18] sm:$0xff]
        %v281 = vld [vmem:[%s255 + $0x20] sm:$0xff]
        %v282 = vld [vmem:[%s255 + $0x28] sm:$0xff]
        %v283 = vld [vmem:[%s255 + $0x30] sm:$0xff]
        %v284 = vld [vmem:[%s255 + $0x38] sm:$0xff]
        %v285 = vld [vmem:[%s255 + $0x40] sm:$0xff]
        %v286 = vld [vmem:[%s255 + $0x48] sm:$0xff]
        %v287 = vld [vmem:[%s255 + $0x50] sm:$0xff]
        %v288 = vld [vmem:[%s255 + $0x58] sm:$0xff]
        %v289 = vld [vmem:[%s255 + $0x60] sm:$0xff]
        %v290 = vld [vmem:[%s255 + $0x68] sm:$0xff]
        %v291 = vld [vmem:[%s255 + $0x70] sm:$0xff]
        %v292 = vld [vmem:[%s255 + $0x78] sm:$0xff]
        %v293 = vld [vmem:[%s261] sm:$0xff]
        %v294 = vld [vmem:[%s261 + $0x8] sm:$0xff]
        %v295 = vld [vmem:[%s2] sm:$0xff]
        %297 = vset.pattern.permute.xlu0 0
        %298 = vperm.xlu0 %297, %v277
        %v299 = vpop.permute.xlu0 %298
        %302 = vset.pattern.permute.xlu0 0
        %303 = vperm.xlu0 %302, %v278
        %v304 = vpop.permute.xlu0 %303
        %307 = vset.pattern.permute.xlu0 0
        %308 = vperm.xlu0 %307, %v279
        %v309 = vpop.permute.xlu0 %308
        %312 = vset.pattern.permute.xlu0 0
        %313 = vperm.xlu0 %312, %v280
        %v314 = vpop.permute.xlu0 %313
        %317 = vset.pattern.permute.xlu0 0
        %318 = vperm.xlu0 %317, %v281
        %v319 = vpop.permute.xlu0 %318
        %322 = vset.pattern.permute.xlu0 0
        %323 = vperm.xlu0 %322, %v282
        %v324 = vpop.permute.xlu0 %323
        %327 = vset.pattern.permute.xlu0 0
        %328 = vperm.xlu0 %327, %v283
        %v329 = vpop.permute.xlu0 %328
        %332 = vset.pattern.permute.xlu0 0
        %333 = vperm.xlu0 %332, %v284
        %v334 = vpop.permute.xlu0 %333
        %337 = vset.pattern.permute.xlu0 0
        %338 = vperm.xlu0 %337, %v285
        %v339 = vpop.permute.xlu0 %338
        %342 = vset.pattern.permute.xlu0 0
        %343 = vperm.xlu0 %342, %v286
        %v344 = vpop.permute.xlu0 %343
        %347 = vset.pattern.permute.xlu0 0
        %348 = vperm.xlu0 %347, %v287
        %v349 = vpop.permute.xlu0 %348
        %352 = vset.pattern.permute.xlu0 0
        %353 = vperm.xlu0 %352, %v288
        %v354 = vpop.permute.xlu0 %353
        %357 = vset.pattern.permute.xlu0 0
        %358 = vperm.xlu0 %357, %v289
        %v359 = vpop.permute.xlu0 %358
        %362 = vset.pattern.permute.xlu0 0
        %363 = vperm.xlu0 %362, %v290
        %v364 = vpop.permute.xlu0 %363
        %367 = vset.pattern.permute.xlu0 0
        %368 = vperm.xlu0 %367, %v291
        %v369 = vpop.permute.xlu0 %368
        %372 = vset.pattern.permute.xlu0 0
        %373 = vperm.xlu0 %372, %v292
        %v374 = vpop.permute.xlu0 %373
        %v376 = vlaneseq
        %v377 = vshrl.u32 %v376, 7
        %v378 = vsub.s32 0, %v377
        %v379 = vrot.slane %v295, %v378
        %v380 = vmul.f32 %v299, %v379
        %v381 = vmul.f32 %v304, %v379
        %v382 = vmul.f32 %v309, %v379
        %v383 = vmul.f32 %v314, %v379
        %v384 = vmul.f32 %v319, %v379
        %v385 = vmul.f32 %v324, %v379
        %v386 = vmul.f32 %v329, %v379
        %v387 = vmul.f32 %v334, %v379
        %v388 = vmul.f32 %v339, %v379
        %v389 = vmul.f32 %v344, %v379
        %v390 = vmul.f32 %v349, %v379
        %v391 = vmul.f32 %v354, %v379
        %v392 = vmul.f32 %v359, %v379
        %v393 = vmul.f32 %v364, %v379
        %v394 = vmul.f32 %v369, %v379
        %v395 = vmul.f32 %v374, %v379
        %396 = vset.pattern.permute.xlu0 1
        %397 = vperm.xlu0 %396, %v277
        %v398 = vpop.permute.xlu0 %397
        %400 = vset.pattern.permute.xlu0 1
        %401 = vperm.xlu0 %400, %v278
        %v402 = vpop.permute.xlu0 %401
        %404 = vset.pattern.permute.xlu0 1
        %405 = vperm.xlu0 %404, %v279
        %v406 = vpop.permute.xlu0 %405
        %408 = vset.pattern.permute.xlu0 1
        %409 = vperm.xlu0 %408, %v280
        %v410 = vpop.permute.xlu0 %409
        %412 = vset.pattern.permute.xlu0 1
        %413 = vperm.xlu0 %412, %v281
        %v414 = vpop.permute.xlu0 %413
        %416 = vset.pattern.permute.xlu0 1
        %417 = vperm.xlu0 %416, %v282
        %v418 = vpop.permute.xlu0 %417
        %420 = vset.pattern.permute.xlu0 1
        %421 = vperm.xlu0 %420, %v283
        %v422 = vpop.permute.xlu0 %421
        %424 = vset.pattern.permute.xlu0 1
        %425 = vperm.xlu0 %424, %v284
        %v426 = vpop.permute.xlu0 %425
        %428 = vset.pattern.permute.xlu0 1
        %429 = vperm.xlu0 %428, %v285
        %v430 = vpop.permute.xlu0 %429
        %432 = vset.pattern.permute.xlu0 1
        %433 = vperm.xlu0 %432, %v286
        %v434 = vpop.permute.xlu0 %433
        %436 = vset.pattern.permute.xlu0 1
        %437 = vperm.xlu0 %436, %v287
        %v438 = vpop.permute.xlu0 %437
        %440 = vset.pattern.permute.xlu0 1
        %441 = vperm.xlu0 %440, %v288
        %v442 = vpop.permute.xlu0 %441
        %444 = vset.pattern.permute.xlu0 1
        %445 = vperm.xlu0 %444, %v289
        %v446 = vpop.permute.xlu0 %445
        %448 = vset.pattern.permute.xlu0 1
        %449 = vperm.xlu0 %448, %v290
        %v450 = vpop.permute.xlu0 %449
        %452 = vset.pattern.permute.xlu0 1
        %453 = vperm.xlu0 %452, %v291
        %v454 = vpop.permute.xlu0 %453
        %456 = vset.pattern.permute.xlu0 1
        %457 = vperm.xlu0 %456, %v292
        %v458 = vpop.permute.xlu0 %457
        %v460 = vlaneseq
        %v461 = vshrl.u32 %v460, 7
        %v462 = vsub.s32 1, %v461
        %v463 = vrot.slane %v295, %v462
        %v464 = vmul.f32 %v398, %v463
        %v465 = vmul.f32 %v402, %v463
        %v466 = vmul.f32 %v406, %v463
        %v467 = vmul.f32 %v410, %v463
        %v468 = vmul.f32 %v414, %v463
        %v469 = vmul.f32 %v418, %v463
        %v470 = vmul.f32 %v422, %v463
        %v471 = vmul.f32 %v426, %v463
        %v472 = vmul.f32 %v430, %v463
        %v473 = vmul.f32 %v434, %v463
        %v474 = vmul.f32 %v438, %v463
        %v475 = vmul.f32 %v442, %v463
        %v476 = vmul.f32 %v446, %v463
        %v477 = vmul.f32 %v450, %v463
        %v478 = vmul.f32 %v454, %v463
        %v479 = vmul.f32 %v458, %v463
        %v480 = vadd.f32 %v380, %v464
        %v481 = vadd.f32 %v381, %v465
        %v482 = vadd.f32 %v382, %v466
        %v483 = vadd.f32 %v383, %v467
        %v484 = vadd.f32 %v384, %v468
        %v485 = vadd.f32 %v385, %v469
        %v486 = vadd.f32 %v386, %v470
        %v487 = vadd.f32 %v387, %v471
        %v488 = vadd.f32 %v388, %v472
        %v489 = vadd.f32 %v389, %v473
        %v490 = vadd.f32 %v390, %v474
        %v491 = vadd.f32 %v391, %v475
        %v492 = vadd.f32 %v392, %v476
        %v493 = vadd.f32 %v393, %v477
        %v494 = vadd.f32 %v394, %v478
        %v495 = vadd.f32 %v395, %v479
        %496 = vset.pattern.permute.xlu0 2
        %497 = vperm.xlu0 %496, %v277
        %v498 = vpop.permute.xlu0 %497
        %500 = vset.pattern.permute.xlu0 2
        %501 = vperm.xlu0 %500, %v278
        %v502 = vpop.permute.xlu0 %501
        %504 = vset.pattern.permute.xlu0 2
        %505 = vperm.xlu0 %504, %v279
        %v506 = vpop.permute.xlu0 %505
        %508 = vset.pattern.permute.xlu0 2
        %509 = vperm.xlu0 %508, %v280
        %v510 = vpop.permute.xlu0 %509
        %512 = vset.pattern.permute.xlu0 2
        %513 = vperm.xlu0 %512, %v281
        %v514 = vpop.permute.xlu0 %513
        %516 = vset.pattern.permute.xlu0 2
        %517 = vperm.xlu0 %516, %v282
        %v518 = vpop.permute.xlu0 %517
        %520 = vset.pattern.permute.xlu0 2
        %521 = vperm.xlu0 %520, %v283
        %v522 = vpop.permute.xlu0 %521
        %524 = vset.pattern.permute.xlu0 2
        %525 = vperm.xlu0 %524, %v284
        %v526 = vpop.permute.xlu0 %525
        %528 = vset.pattern.permute.xlu0 2
        %529 = vperm.xlu0 %528, %v285
        %v530 = vpop.permute.xlu0 %529
        %532 = vset.pattern.permute.xlu0 2
        %533 = vperm.xlu0 %532, %v286
        %v534 = vpop.permute.xlu0 %533
        %536 = vset.pattern.permute.xlu0 2
        %537 = vperm.xlu0 %536, %v287
        %v538 = vpop.permute.xlu0 %537
        %540 = vset.pattern.permute.xlu0 2
        %541 = vperm.xlu0 %540, %v288
        %v542 = vpop.permute.xlu0 %541
        %544 = vset.pattern.permute.xlu0 2
        %545 = vperm.xlu0 %544, %v289
        %v546 = vpop.permute.xlu0 %545
        %548 = vset.pattern.permute.xlu0 2
        %549 = vperm.xlu0 %548, %v290
        %v550 = vpop.permute.xlu0 %549
        %552 = vset.pattern.permute.xlu0 2
        %553 = vperm.xlu0 %552, %v291
        %v554 = vpop.permute.xlu0 %553
        %556 = vset.pattern.permute.xlu0 2
        %557 = vperm.xlu0 %556, %v292
        %v558 = vpop.permute.xlu0 %557
        %v560 = vlaneseq
        %v561 = vshrl.u32 %v560, 7
        %v562 = vsub.s32 2, %v561
        %v563 = vrot.slane %v295, %v562
        %v564 = vmul.f32 %v498, %v563
        %v565 = vmul.f32 %v502, %v563
        %v566 = vmul.f32 %v506, %v563
        %v567 = vmul.f32 %v510, %v563
        %v568 = vmul.f32 %v514, %v563
        %v569 = vmul.f32 %v518, %v563
        %v570 = vmul.f32 %v522, %v563
        %v571 = vmul.f32 %v526, %v563
        %v572 = vmul.f32 %v530, %v563
        %v573 = vmul.f32 %v534, %v563
        %v574 = vmul.f32 %v538, %v563
        %v575 = vmul.f32 %v542, %v563
        %v576 = vmul.f32 %v546, %v563
        %v577 = vmul.f32 %v550, %v563
        %v578 = vmul.f32 %v554, %v563
        %v579 = vmul.f32 %v558, %v563
        %v580 = vadd.f32 %v480, %v564
        %v581 = vadd.f32 %v481, %v565
        %v582 = vadd.f32 %v482, %v566
        %v583 = vadd.f32 %v483, %v567
        %v584 = vadd.f32 %v484, %v568
        %v585 = vadd.f32 %v485, %v569
        %v586 = vadd.f32 %v486, %v570
        %v587 = vadd.f32 %v487, %v571
        %v588 = vadd.f32 %v488, %v572
        %v589 = vadd.f32 %v489, %v573
        %v590 = vadd.f32 %v490, %v574
        %v591 = vadd.f32 %v491, %v575
        %v592 = vadd.f32 %v492, %v576
        %v593 = vadd.f32 %v493, %v577
        %v594 = vadd.f32 %v494, %v578
        %v595 = vadd.f32 %v495, %v579
        %596 = vset.pattern.permute.xlu0 3
        %597 = vperm.xlu0 %596, %v277
        %v598 = vpop.permute.xlu0 %597
        %600 = vset.pattern.permute.xlu0 3
        %601 = vperm.xlu0 %600, %v278
        %v602 = vpop.permute.xlu0 %601
        %604 = vset.pattern.permute.xlu0 3
        %605 = vperm.xlu0 %604, %v279
        %v606 = vpop.permute.xlu0 %605
        %608 = vset.pattern.permute.xlu0 3
        %609 = vperm.xlu0 %608, %v280
        %v610 = vpop.permute.xlu0 %609
        %612 = vset.pattern.permute.xlu0 3
        %613 = vperm.xlu0 %612, %v281
        %v614 = vpop.permute.xlu0 %613
        %616 = vset.pattern.permute.xlu0 3
        %617 = vperm.xlu0 %616, %v282
        %v618 = vpop.permute.xlu0 %617
        %620 = vset.pattern.permute.xlu0 3
        %621 = vperm.xlu0 %620, %v283
        %v622 = vpop.permute.xlu0 %621
        %624 = vset.pattern.permute.xlu0 3
        %625 = vperm.xlu0 %624, %v284
        %v626 = vpop.permute.xlu0 %625
        %628 = vset.pattern.permute.xlu0 3
        %629 = vperm.xlu0 %628, %v285
        %v630 = vpop.permute.xlu0 %629
        %632 = vset.pattern.permute.xlu0 3
        %633 = vperm.xlu0 %632, %v286
        %v634 = vpop.permute.xlu0 %633
        %636 = vset.pattern.permute.xlu0 3
        %637 = vperm.xlu0 %636, %v287
        %v638 = vpop.permute.xlu0 %637
        %640 = vset.pattern.permute.xlu0 3
        %641 = vperm.xlu0 %640, %v288
        %v642 = vpop.permute.xlu0 %641
        %644 = vset.pattern.permute.xlu0 3
        %645 = vperm.xlu0 %644, %v289
        %v646 = vpop.permute.xlu0 %645
        %648 = vset.pattern.permute.xlu0 3
        %649 = vperm.xlu0 %648, %v290
        %v650 = vpop.permute.xlu0 %649
        %652 = vset.pattern.permute.xlu0 3
        %653 = vperm.xlu0 %652, %v291
        %v654 = vpop.permute.xlu0 %653
        %656 = vset.pattern.permute.xlu0 3
        %657 = vperm.xlu0 %656, %v292
        %v658 = vpop.permute.xlu0 %657
        %v660 = vlaneseq
        %v661 = vshrl.u32 %v660, 7
        %v662 = vsub.s32 3, %v661
        %v663 = vrot.slane %v295, %v662
        %v664 = vmul.f32 %v598, %v663
        %v665 = vmul.f32 %v602, %v663
        %v666 = vmul.f32 %v606, %v663
        %v667 = vmul.f32 %v610, %v663
        %v668 = vmul.f32 %v614, %v663
        %v669 = vmul.f32 %v618, %v663
        %v670 = vmul.f32 %v622, %v663
        %v671 = vmul.f32 %v626, %v663
        %v672 = vmul.f32 %v630, %v663
        %v673 = vmul.f32 %v634, %v663
        %v674 = vmul.f32 %v638, %v663
        %v675 = vmul.f32 %v642, %v663
        %v676 = vmul.f32 %v646, %v663
        %v677 = vmul.f32 %v650, %v663
        %v678 = vmul.f32 %v654, %v663
        %v679 = vmul.f32 %v658, %v663
        %v680 = vadd.f32 %v580, %v664
        %v681 = vadd.f32 %v581, %v665
        %v682 = vadd.f32 %v582, %v666
        %v683 = vadd.f32 %v583, %v667
        %v684 = vadd.f32 %v584, %v668
        %v685 = vadd.f32 %v585, %v669
        %v686 = vadd.f32 %v586, %v670
        %v687 = vadd.f32 %v587, %v671
        %v688 = vadd.f32 %v588, %v672
        %v689 = vadd.f32 %v589, %v673
        %v690 = vadd.f32 %v590, %v674
        %v691 = vadd.f32 %v591, %v675
        %v692 = vadd.f32 %v592, %v676
        %v693 = vadd.f32 %v593, %v677
        %v694 = vadd.f32 %v594, %v678
        %v695 = vadd.f32 %v595, %v679
        %696 = vset.pattern.permute.xlu0 4
        %697 = vperm.xlu0 %696, %v277
        %v698 = vpop.permute.xlu0 %697
        %700 = vset.pattern.permute.xlu0 4
        %701 = vperm.xlu0 %700, %v278
        %v702 = vpop.permute.xlu0 %701
        %704 = vset.pattern.permute.xlu0 4
        %705 = vperm.xlu0 %704, %v279
        %v706 = vpop.permute.xlu0 %705
        %708 = vset.pattern.permute.xlu0 4
        %709 = vperm.xlu0 %708, %v280
        %v710 = vpop.permute.xlu0 %709
        %712 = vset.pattern.permute.xlu0 4
        %713 = vperm.xlu0 %712, %v281
        %v714 = vpop.permute.xlu0 %713
        %716 = vset.pattern.permute.xlu0 4
        %717 = vperm.xlu0 %716, %v282
        %v718 = vpop.permute.xlu0 %717
        %720 = vset.pattern.permute.xlu0 4
        %721 = vperm.xlu0 %720, %v283
        %v722 = vpop.permute.xlu0 %721
        %724 = vset.pattern.permute.xlu0 4
        %725 = vperm.xlu0 %724, %v284
        %v726 = vpop.permute.xlu0 %725
        %728 = vset.pattern.permute.xlu0 4
        %729 = vperm.xlu0 %728, %v285
        %v730 = vpop.permute.xlu0 %729
        %732 = vset.pattern.permute.xlu0 4
        %733 = vperm.xlu0 %732, %v286
        %v734 = vpop.permute.xlu0 %733
        %736 = vset.pattern.permute.xlu0 4
        %737 = vperm.xlu0 %736, %v287
        %v738 = vpop.permute.xlu0 %737
        %740 = vset.pattern.permute.xlu0 4
        %741 = vperm.xlu0 %740, %v288
        %v742 = vpop.permute.xlu0 %741
        %744 = vset.pattern.permute.xlu0 4
        %745 = vperm.xlu0 %744, %v289
        %v746 = vpop.permute.xlu0 %745
        %748 = vset.pattern.permute.xlu0 4
        %749 = vperm.xlu0 %748, %v290
        %v750 = vpop.permute.xlu0 %749
        %752 = vset.pattern.permute.xlu0 4
        %753 = vperm.xlu0 %752, %v291
        %v754 = vpop.permute.xlu0 %753
        %756 = vset.pattern.permute.xlu0 4
        %757 = vperm.xlu0 %756, %v292
        %v758 = vpop.permute.xlu0 %757
        %v760 = vlaneseq
        %v761 = vshrl.u32 %v760, 7
        %v762 = vsub.s32 4, %v761
        %v763 = vrot.slane %v295, %v762
        %v764 = vmul.f32 %v698, %v763
        %v765 = vmul.f32 %v702, %v763
        %v766 = vmul.f32 %v706, %v763
        %v767 = vmul.f32 %v710, %v763
        %v768 = vmul.f32 %v714, %v763
        %v769 = vmul.f32 %v718, %v763
        %v770 = vmul.f32 %v722, %v763
        %v771 = vmul.f32 %v726, %v763
        %v772 = vmul.f32 %v730, %v763
        %v773 = vmul.f32 %v734, %v763
        %v774 = vmul.f32 %v738, %v763
        %v775 = vmul.f32 %v742, %v763
        %v776 = vmul.f32 %v746, %v763
        %v777 = vmul.f32 %v750, %v763
        %v778 = vmul.f32 %v754, %v763
        %v779 = vmul.f32 %v758, %v763
        %v780 = vadd.f32 %v680, %v764
        %v781 = vadd.f32 %v681, %v765
        %v782 = vadd.f32 %v682, %v766
        %v783 = vadd.f32 %v683, %v767
        %v784 = vadd.f32 %v684, %v768
        %v785 = vadd.f32 %v685, %v769
        %v786 = vadd.f32 %v686, %v770
        %v787 = vadd.f32 %v687, %v771
        %v788 = vadd.f32 %v688, %v772
        %v789 = vadd.f32 %v689, %v773
        %v790 = vadd.f32 %v690, %v774
        %v791 = vadd.f32 %v691, %v775
        %v792 = vadd.f32 %v692, %v776
        %v793 = vadd.f32 %v693, %v777
        %v794 = vadd.f32 %v694, %v778
        %v795 = vadd.f32 %v695, %v779
        %796 = vset.pattern.permute.xlu0 5
        %797 = vperm.xlu0 %796, %v277
        %v798 = vpop.permute.xlu0 %797
        %800 = vset.pattern.permute.xlu0 5
        %801 = vperm.xlu0 %800, %v278
        %v802 = vpop.permute.xlu0 %801
        %804 = vset.pattern.permute.xlu0 5
        %805 = vperm.xlu0 %804, %v279
        %v806 = vpop.permute.xlu0 %805
        %808 = vset.pattern.permute.xlu0 5
        %809 = vperm.xlu0 %808, %v280
        %v810 = vpop.permute.xlu0 %809
        %812 = vset.pattern.permute.xlu0 5
        %813 = vperm.xlu0 %812, %v281
        %v814 = vpop.permute.xlu0 %813
        %816 = vset.pattern.permute.xlu0 5
        %817 = vperm.xlu0 %816, %v282
        %v818 = vpop.permute.xlu0 %817
        %820 = vset.pattern.permute.xlu0 5
        %821 = vperm.xlu0 %820, %v283
        %v822 = vpop.permute.xlu0 %821
        %824 = vset.pattern.permute.xlu0 5
        %825 = vperm.xlu0 %824, %v284
        %v826 = vpop.permute.xlu0 %825
        %828 = vset.pattern.permute.xlu0 5
        %829 = vperm.xlu0 %828, %v285
        %v830 = vpop.permute.xlu0 %829
        %832 = vset.pattern.permute.xlu0 5
        %833 = vperm.xlu0 %832, %v286
        %v834 = vpop.permute.xlu0 %833
        %836 = vset.pattern.permute.xlu0 5
        %837 = vperm.xlu0 %836, %v287
        %v838 = vpop.permute.xlu0 %837
        %840 = vset.pattern.permute.xlu0 5
        %841 = vperm.xlu0 %840, %v288
        %v842 = vpop.permute.xlu0 %841
        %844 = vset.pattern.permute.xlu0 5
        %845 = vperm.xlu0 %844, %v289
        %v846 = vpop.permute.xlu0 %845
        %848 = vset.pattern.permute.xlu0 5
        %849 = vperm.xlu0 %848, %v290
        %v850 = vpop.permute.xlu0 %849
        %852 = vset.pattern.permute.xlu0 5
        %853 = vperm.xlu0 %852, %v291
        %v854 = vpop.permute.xlu0 %853
        %856 = vset.pattern.permute.xlu0 5
        %857 = vperm.xlu0 %856, %v292
        %v858 = vpop.permute.xlu0 %857
        %v860 = vlaneseq
        %v861 = vshrl.u32 %v860, 7
        %v862 = vsub.s32 5, %v861
        %v863 = vrot.slane %v295, %v862
        %v864 = vmul.f32 %v798, %v863
        %v865 = vmul.f32 %v802, %v863
        %v866 = vmul.f32 %v806, %v863
        %v867 = vmul.f32 %v810, %v863
        %v868 = vmul.f32 %v814, %v863
        %v869 = vmul.f32 %v818, %v863
        %v870 = vmul.f32 %v822, %v863
        %v871 = vmul.f32 %v826, %v863
        %v872 = vmul.f32 %v830, %v863
        %v873 = vmul.f32 %v834, %v863
        %v874 = vmul.f32 %v838, %v863
        %v875 = vmul.f32 %v842, %v863
        %v876 = vmul.f32 %v846, %v863
        %v877 = vmul.f32 %v850, %v863
        %v878 = vmul.f32 %v854, %v863
        %v879 = vmul.f32 %v858, %v863
        %v880 = vadd.f32 %v780, %v864
        %v881 = vadd.f32 %v781, %v865
        %v882 = vadd.f32 %v782, %v866
        %v883 = vadd.f32 %v783, %v867
        %v884 = vadd.f32 %v784, %v868
        %v885 = vadd.f32 %v785, %v869
        %v886 = vadd.f32 %v786, %v870
        %v887 = vadd.f32 %v787, %v871
        %v888 = vadd.f32 %v788, %v872
        %v889 = vadd.f32 %v789, %v873
        %v890 = vadd.f32 %v790, %v874
        %v891 = vadd.f32 %v791, %v875
        %v892 = vadd.f32 %v792, %v876
        %v893 = vadd.f32 %v793, %v877
        %v894 = vadd.f32 %v794, %v878
        %v895 = vadd.f32 %v795, %v879
        %896 = vset.pattern.permute.xlu0 6
        %897 = vperm.xlu0 %896, %v277
        %v898 = vpop.permute.xlu0 %897
        %900 = vset.pattern.permute.xlu0 6
        %901 = vperm.xlu0 %900, %v278
        %v902 = vpop.permute.xlu0 %901
        %904 = vset.pattern.permute.xlu0 6
        %905 = vperm.xlu0 %904, %v279
        %v906 = vpop.permute.xlu0 %905
        %908 = vset.pattern.permute.xlu0 6
        %909 = vperm.xlu0 %908, %v280
        %v910 = vpop.permute.xlu0 %909
        %912 = vset.pattern.permute.xlu0 6
        %913 = vperm.xlu0 %912, %v281
        %v914 = vpop.permute.xlu0 %913
        %916 = vset.pattern.permute.xlu0 6
        %917 = vperm.xlu0 %916, %v282
        %v918 = vpop.permute.xlu0 %917
        %920 = vset.pattern.permute.xlu0 6
        %921 = vperm.xlu0 %920, %v283
        %v922 = vpop.permute.xlu0 %921
        %924 = vset.pattern.permute.xlu0 6
        %925 = vperm.xlu0 %924, %v284
        %v926 = vpop.permute.xlu0 %925
        %928 = vset.pattern.permute.xlu0 6
        %929 = vperm.xlu0 %928, %v285
        %v930 = vpop.permute.xlu0 %929
        %932 = vset.pattern.permute.xlu0 6
        %933 = vperm.xlu0 %932, %v286
        %v934 = vpop.permute.xlu0 %933
        %936 = vset.pattern.permute.xlu0 6
        %937 = vperm.xlu0 %936, %v287
        %v938 = vpop.permute.xlu0 %937
        %940 = vset.pattern.permute.xlu0 6
        %941 = vperm.xlu0 %940, %v288
        %v942 = vpop.permute.xlu0 %941
        %944 = vset.pattern.permute.xlu0 6
        %945 = vperm.xlu0 %944, %v289
        %v946 = vpop.permute.xlu0 %945
        %948 = vset.pattern.permute.xlu0 6
        %949 = vperm.xlu0 %948, %v290
        %v950 = vpop.permute.xlu0 %949
        %952 = vset.pattern.permute.xlu0 6
        %953 = vperm.xlu0 %952, %v291
        %v954 = vpop.permute.xlu0 %953
        %956 = vset.pattern.permute.xlu0 6
        %957 = vperm.xlu0 %956, %v292
        %v958 = vpop.permute.xlu0 %957
        %v960 = vlaneseq
        %v961 = vshrl.u32 %v960, 7
        %v962 = vsub.s32 6, %v961
        %v963 = vrot.slane %v295, %v962
        %v964 = vmul.f32 %v898, %v963
        %v965 = vmul.f32 %v902, %v963
        %v966 = vmul.f32 %v906, %v963
        %v967 = vmul.f32 %v910, %v963
        %v968 = vmul.f32 %v914, %v963
        %v969 = vmul.f32 %v918, %v963
        %v970 = vmul.f32 %v922, %v963
        %v971 = vmul.f32 %v926, %v963
        %v972 = vmul.f32 %v930, %v963
        %v973 = vmul.f32 %v934, %v963
        %v974 = vmul.f32 %v938, %v963
        %v975 = vmul.f32 %v942, %v963
        %v976 = vmul.f32 %v946, %v963
        %v977 = vmul.f32 %v950, %v963
        %v978 = vmul.f32 %v954, %v963
        %v979 = vmul.f32 %v958, %v963
        %v980 = vadd.f32 %v880, %v964
        %v981 = vadd.f32 %v881, %v965
        %v982 = vadd.f32 %v882, %v966
        %v983 = vadd.f32 %v883, %v967
        %v984 = vadd.f32 %v884, %v968
        %v985 = vadd.f32 %v885, %v969
        %v986 = vadd.f32 %v886, %v970
        %v987 = vadd.f32 %v887, %v971
        %v988 = vadd.f32 %v888, %v972
        %v989 = vadd.f32 %v889, %v973
        %v990 = vadd.f32 %v890, %v974
        %v991 = vadd.f32 %v891, %v975
        %v992 = vadd.f32 %v892, %v976
        %v993 = vadd.f32 %v893, %v977
        %v994 = vadd.f32 %v894, %v978
        %v995 = vadd.f32 %v895, %v979
        %996 = vset.pattern.permute.xlu0 7
        %997 = vperm.xlu0 %996, %v277
        %v998 = vpop.permute.xlu0 %997
        %1000 = vset.pattern.permute.xlu0 7
        %1001 = vperm.xlu0 %1000, %v278
        %v1002 = vpop.permute.xlu0 %1001
        %1004 = vset.pattern.permute.xlu0 7
        %1005 = vperm.xlu0 %1004, %v279
        %v1006 = vpop.permute.xlu0 %1005
        %1008 = vset.pattern.permute.xlu0 7
        %1009 = vperm.xlu0 %1008, %v280
        %v1010 = vpop.permute.xlu0 %1009
        %1012 = vset.pattern.permute.xlu0 7
        %1013 = vperm.xlu0 %1012, %v281
        %v1014 = vpop.permute.xlu0 %1013
        %1016 = vset.pattern.permute.xlu0 7
        %1017 = vperm.xlu0 %1016, %v282
        %v1018 = vpop.permute.xlu0 %1017
        %1020 = vset.pattern.permute.xlu0 7
        %1021 = vperm.xlu0 %1020, %v283
        %v1022 = vpop.permute.xlu0 %1021
        %1024 = vset.pattern.permute.xlu0 7
        %1025 = vperm.xlu0 %1024, %v284
        %v1026 = vpop.permute.xlu0 %1025
        %1028 = vset.pattern.permute.xlu0 7
        %1029 = vperm.xlu0 %1028, %v285
        %v1030 = vpop.permute.xlu0 %1029
        %1032 = vset.pattern.permute.xlu0 7
        %1033 = vperm.xlu0 %1032, %v286
        %v1034 = vpop.permute.xlu0 %1033
        %1036 = vset.pattern.permute.xlu0 7
        %1037 = vperm.xlu0 %1036, %v287
        %v1038 = vpop.permute.xlu0 %1037
        %1040 = vset.pattern.permute.xlu0 7
        %1041 = vperm.xlu0 %1040, %v288
        %v1042 = vpop.permute.xlu0 %1041
        %1044 = vset.pattern.permute.xlu0 7
        %1045 = vperm.xlu0 %1044, %v289
        %v1046 = vpop.permute.xlu0 %1045
        %1048 = vset.pattern.permute.xlu0 7
        %1049 = vperm.xlu0 %1048, %v290
        %v1050 = vpop.permute.xlu0 %1049
        %1052 = vset.pattern.permute.xlu0 7
        %1053 = vperm.xlu0 %1052, %v291
        %v1054 = vpop.permute.xlu0 %1053
        %1056 = vset.pattern.permute.xlu0 7
        %1057 = vperm.xlu0 %1056, %v292
        %v1058 = vpop.permute.xlu0 %1057
        %v1060 = vlaneseq
        %v1061 = vshrl.u32 %v1060, 7
        %v1062 = vsub.s32 7, %v1061
        %v1063 = vrot.slane %v295, %v1062
        %v1064 = vmul.f32 %v998, %v1063
        %v1065 = vmul.f32 %v1002, %v1063
        %v1066 = vmul.f32 %v1006, %v1063
        %v1067 = vmul.f32 %v1010, %v1063
        %v1068 = vmul.f32 %v1014, %v1063
        %v1069 = vmul.f32 %v1018, %v1063
        %v1070 = vmul.f32 %v1022, %v1063
        %v1071 = vmul.f32 %v1026, %v1063
        %v1072 = vmul.f32 %v1030, %v1063
        %v1073 = vmul.f32 %v1034, %v1063
        %v1074 = vmul.f32 %v1038, %v1063
        %v1075 = vmul.f32 %v1042, %v1063
        %v1076 = vmul.f32 %v1046, %v1063
        %v1077 = vmul.f32 %v1050, %v1063
        %v1078 = vmul.f32 %v1054, %v1063
        %v1079 = vmul.f32 %v1058, %v1063
        %v1080 = vadd.f32 %v980, %v1064
        %v1081 = vadd.f32 %v981, %v1065
        %v1082 = vadd.f32 %v982, %v1066
        %v1083 = vadd.f32 %v983, %v1067
        %v1084 = vadd.f32 %v984, %v1068
        %v1085 = vadd.f32 %v985, %v1069
        %v1086 = vadd.f32 %v986, %v1070
        %v1087 = vadd.f32 %v987, %v1071
        %v1088 = vadd.f32 %v988, %v1072
        %v1089 = vadd.f32 %v989, %v1073
        %v1090 = vadd.f32 %v990, %v1074
        %v1091 = vadd.f32 %v991, %v1075
        %v1092 = vadd.f32 %v992, %v1076
        %v1093 = vadd.f32 %v993, %v1077
        %v1094 = vadd.f32 %v994, %v1078
        %v1095 = vadd.f32 %v995, %v1079
        %1097 = vset.pattern.permute.xlu0 0
        %1098 = vperm.xlu0 %1097, %v293
        %v1099 = vpop.permute.xlu0 %1098
        %1102 = vset.pattern.permute.xlu0 0
        %1103 = vperm.xlu0 %1102, %v294
        %v1104 = vpop.permute.xlu0 %1103
        %v1106 = vlaneseq
        %v1107 = vshrl.u32 %v1106, 7
        %v1108 = vsub.s32 0, %v1107
        %v1109 = vrot.slane %v1080, %v1108
        %v1110 = vlaneseq
        %v1111 = vshrl.u32 %v1110, 7
        %v1112 = vsub.s32 0, %v1111
        %v1113 = vrot.slane %v1081, %v1112
        %v1114 = vlaneseq
        %v1115 = vshrl.u32 %v1114, 7
        %v1116 = vsub.s32 0, %v1115
        %v1117 = vrot.slane %v1082, %v1116
        %v1118 = vlaneseq
        %v1119 = vshrl.u32 %v1118, 7
        %v1120 = vsub.s32 0, %v1119
        %v1121 = vrot.slane %v1083, %v1120
        %v1122 = vlaneseq
        %v1123 = vshrl.u32 %v1122, 7
        %v1124 = vsub.s32 0, %v1123
        %v1125 = vrot.slane %v1084, %v1124
        %v1126 = vlaneseq
        %v1127 = vshrl.u32 %v1126, 7
        %v1128 = vsub.s32 0, %v1127
        %v1129 = vrot.slane %v1085, %v1128
        %v1130 = vlaneseq
        %v1131 = vshrl.u32 %v1130, 7
        %v1132 = vsub.s32 0, %v1131
        %v1133 = vrot.slane %v1086, %v1132
        %v1134 = vlaneseq
        %v1135 = vshrl.u32 %v1134, 7
        %v1136 = vsub.s32 0, %v1135
        %v1137 = vrot.slane %v1087, %v1136
        %v1138 = vlaneseq
        %v1139 = vshrl.u32 %v1138, 7
        %v1140 = vsub.s32 0, %v1139
        %v1141 = vrot.slane %v1088, %v1140
        %v1142 = vlaneseq
        %v1143 = vshrl.u32 %v1142, 7
        %v1144 = vsub.s32 0, %v1143
        %v1145 = vrot.slane %v1089, %v1144
        %v1146 = vlaneseq
        %v1147 = vshrl.u32 %v1146, 7
        %v1148 = vsub.s32 0, %v1147
        %v1149 = vrot.slane %v1090, %v1148
        %v1150 = vlaneseq
        %v1151 = vshrl.u32 %v1150, 7
        %v1152 = vsub.s32 0, %v1151
        %v1153 = vrot.slane %v1091, %v1152
        %v1154 = vlaneseq
        %v1155 = vshrl.u32 %v1154, 7
        %v1156 = vsub.s32 0, %v1155
        %v1157 = vrot.slane %v1092, %v1156
        %v1158 = vlaneseq
        %v1159 = vshrl.u32 %v1158, 7
        %v1160 = vsub.s32 0, %v1159
        %v1161 = vrot.slane %v1093, %v1160
        %v1162 = vlaneseq
        %v1163 = vshrl.u32 %v1162, 7
        %v1164 = vsub.s32 0, %v1163
        %v1165 = vrot.slane %v1094, %v1164
        %v1166 = vlaneseq
        %v1167 = vshrl.u32 %v1166, 7
        %v1168 = vsub.s32 0, %v1167
        %v1169 = vrot.slane %v1095, %v1168
        %v1170 = vmul.f32 %v1099, %v1109
        %v1171 = vmul.f32 %v1104, %v1109
        %v1172 = vmul.f32 %v1099, %v1113
        %v1173 = vmul.f32 %v1104, %v1113
        %v1174 = vmul.f32 %v1099, %v1117
        %v1175 = vmul.f32 %v1104, %v1117
        %v1176 = vmul.f32 %v1099, %v1121
        %v1177 = vmul.f32 %v1104, %v1121
        %v1178 = vmul.f32 %v1099, %v1125
        %v1179 = vmul.f32 %v1104, %v1125
        %v1180 = vmul.f32 %v1099, %v1129
        %v1181 = vmul.f32 %v1104, %v1129
        %v1182 = vmul.f32 %v1099, %v1133
        %v1183 = vmul.f32 %v1104, %v1133
        %v1184 = vmul.f32 %v1099, %v1137
        %v1185 = vmul.f32 %v1104, %v1137
        %v1186 = vmul.f32 %v1099, %v1141
        %v1187 = vmul.f32 %v1104, %v1141
        %v1188 = vmul.f32 %v1099, %v1145
        %v1189 = vmul.f32 %v1104, %v1145
        %v1190 = vmul.f32 %v1099, %v1149
        %v1191 = vmul.f32 %v1104, %v1149
        %v1192 = vmul.f32 %v1099, %v1153
        %v1193 = vmul.f32 %v1104, %v1153
        %v1194 = vmul.f32 %v1099, %v1157
        %v1195 = vmul.f32 %v1104, %v1157
        %v1196 = vmul.f32 %v1099, %v1161
        %v1197 = vmul.f32 %v1104, %v1161
        %v1198 = vmul.f32 %v1099, %v1165
        %v1199 = vmul.f32 %v1104, %v1165
        %v1200 = vmul.f32 %v1099, %v1169
        %v1201 = vmul.f32 %v1104, %v1169
        %1202 = vset.pattern.permute.xlu0 1
        %1203 = vperm.xlu0 %1202, %v293
        %v1204 = vpop.permute.xlu0 %1203
        %1206 = vset.pattern.permute.xlu0 1
        %1207 = vperm.xlu0 %1206, %v294
        %v1208 = vpop.permute.xlu0 %1207
        %v1210 = vlaneseq
        %v1211 = vshrl.u32 %v1210, 7
        %v1212 = vsub.s32 1, %v1211
        %v1213 = vrot.slane %v1080, %v1212
        %v1214 = vlaneseq
        %v1215 = vshrl.u32 %v1214, 7
        %v1216 = vsub.s32 1, %v1215
        %v1217 = vrot.slane %v1081, %v1216
        %v1218 = vlaneseq
        %v1219 = vshrl.u32 %v1218, 7
        %v1220 = vsub.s32 1, %v1219
        %v1221 = vrot.slane %v1082, %v1220
        %v1222 = vlaneseq
        %v1223 = vshrl.u32 %v1222, 7
        %v1224 = vsub.s32 1, %v1223
        %v1225 = vrot.slane %v1083, %v1224
        %v1226 = vlaneseq
        %v1227 = vshrl.u32 %v1226, 7
        %v1228 = vsub.s32 1, %v1227
        %v1229 = vrot.slane %v1084, %v1228
        %v1230 = vlaneseq
        %v1231 = vshrl.u32 %v1230, 7
        %v1232 = vsub.s32 1, %v1231
        %v1233 = vrot.slane %v1085, %v1232
        %v1234 = vlaneseq
        %v1235 = vshrl.u32 %v1234, 7
        %v1236 = vsub.s32 1, %v1235
        %v1237 = vrot.slane %v1086, %v1236
        %v1238 = vlaneseq
        %v1239 = vshrl.u32 %v1238, 7
        %v1240 = vsub.s32 1, %v1239
        %v1241 = vrot.slane %v1087, %v1240
        %v1242 = vlaneseq
        %v1243 = vshrl.u32 %v1242, 7
        %v1244 = vsub.s32 1, %v1243
        %v1245 = vrot.slane %v1088, %v1244
        %v1246 = vlaneseq
        %v1247 = vshrl.u32 %v1246, 7
        %v1248 = vsub.s32 1, %v1247
        %v1249 = vrot.slane %v1089, %v1248
        %v1250 = vlaneseq
        %v1251 = vshrl.u32 %v1250, 7
        %v1252 = vsub.s32 1, %v1251
        %v1253 = vrot.slane %v1090, %v1252
        %v1254 = vlaneseq
        %v1255 = vshrl.u32 %v1254, 7
        %v1256 = vsub.s32 1, %v1255
        %v1257 = vrot.slane %v1091, %v1256
        %v1258 = vlaneseq
        %v1259 = vshrl.u32 %v1258, 7
        %v1260 = vsub.s32 1, %v1259
        %v1261 = vrot.slane %v1092, %v1260
        %v1262 = vlaneseq
        %v1263 = vshrl.u32 %v1262, 7
        %v1264 = vsub.s32 1, %v1263
        %v1265 = vrot.slane %v1093, %v1264
        %v1266 = vlaneseq
        %v1267 = vshrl.u32 %v1266, 7
        %v1268 = vsub.s32 1, %v1267
        %v1269 = vrot.slane %v1094, %v1268
        %v1270 = vlaneseq
        %v1271 = vshrl.u32 %v1270, 7
        %v1272 = vsub.s32 1, %v1271
        %v1273 = vrot.slane %v1095, %v1272
        %v1274 = vmul.f32 %v1204, %v1213
        %v1275 = vmul.f32 %v1208, %v1213
        %v1276 = vmul.f32 %v1204, %v1217
        %v1277 = vmul.f32 %v1208, %v1217
        %v1278 = vmul.f32 %v1204, %v1221
        %v1279 = vmul.f32 %v1208, %v1221
        %v1280 = vmul.f32 %v1204, %v1225
        %v1281 = vmul.f32 %v1208, %v1225
        %v1282 = vmul.f32 %v1204, %v1229
        %v1283 = vmul.f32 %v1208, %v1229
        %v1284 = vmul.f32 %v1204, %v1233
        %v1285 = vmul.f32 %v1208, %v1233
        %v1286 = vmul.f32 %v1204, %v1237
        %v1287 = vmul.f32 %v1208, %v1237
        %v1288 = vmul.f32 %v1204, %v1241
        %v1289 = vmul.f32 %v1208, %v1241
        %v1290 = vmul.f32 %v1204, %v1245
        %v1291 = vmul.f32 %v1208, %v1245
        %v1292 = vmul.f32 %v1204, %v1249
        %v1293 = vmul.f32 %v1208, %v1249
        %v1294 = vmul.f32 %v1204, %v1253
        %v1295 = vmul.f32 %v1208, %v1253
        %v1296 = vmul.f32 %v1204, %v1257
        %v1297 = vmul.f32 %v1208, %v1257
        %v1298 = vmul.f32 %v1204, %v1261
        %v1299 = vmul.f32 %v1208, %v1261
        %v1300 = vmul.f32 %v1204, %v1265
        %v1301 = vmul.f32 %v1208, %v1265
        %v1302 = vmul.f32 %v1204, %v1269
        %v1303 = vmul.f32 %v1208, %v1269
        %v1304 = vmul.f32 %v1204, %v1273
        %v1305 = vmul.f32 %v1208, %v1273
        %v1306 = vadd.f32 %v1170, %v1274
        %v1307 = vadd.f32 %v1171, %v1275
        %v1308 = vadd.f32 %v1172, %v1276
        %v1309 = vadd.f32 %v1173, %v1277
        %v1310 = vadd.f32 %v1174, %v1278
        %v1311 = vadd.f32 %v1175, %v1279
        %v1312 = vadd.f32 %v1176, %v1280
        %v1313 = vadd.f32 %v1177, %v1281
        %v1314 = vadd.f32 %v1178, %v1282
        %v1315 = vadd.f32 %v1179, %v1283
        %v1316 = vadd.f32 %v1180, %v1284
        %v1317 = vadd.f32 %v1181, %v1285
        %v1318 = vadd.f32 %v1182, %v1286
        %v1319 = vadd.f32 %v1183, %v1287
        %v1320 = vadd.f32 %v1184, %v1288
        %v1321 = vadd.f32 %v1185, %v1289
        %v1322 = vadd.f32 %v1186, %v1290
        %v1323 = vadd.f32 %v1187, %v1291
        %v1324 = vadd.f32 %v1188, %v1292
        %v1325 = vadd.f32 %v1189, %v1293
        %v1326 = vadd.f32 %v1190, %v1294
        %v1327 = vadd.f32 %v1191, %v1295
        %v1328 = vadd.f32 %v1192, %v1296
        %v1329 = vadd.f32 %v1193, %v1297
        %v1330 = vadd.f32 %v1194, %v1298
        %v1331 = vadd.f32 %v1195, %v1299
        %v1332 = vadd.f32 %v1196, %v1300
        %v1333 = vadd.f32 %v1197, %v1301
        %v1334 = vadd.f32 %v1198, %v1302
        %v1335 = vadd.f32 %v1199, %v1303
        %v1336 = vadd.f32 %v1200, %v1304
        %v1337 = vadd.f32 %v1201, %v1305
        %1338 = vset.pattern.permute.xlu0 2
        %1339 = vperm.xlu0 %1338, %v293
        %v1340 = vpop.permute.xlu0 %1339
        %1342 = vset.pattern.permute.xlu0 2
        %1343 = vperm.xlu0 %1342, %v294
        %v1344 = vpop.permute.xlu0 %1343
        %v1346 = vlaneseq
        %v1347 = vshrl.u32 %v1346, 7
        %v1348 = vsub.s32 2, %v1347
        %v1349 = vrot.slane %v1080, %v1348
        %v1350 = vlaneseq
        %v1351 = vshrl.u32 %v1350, 7
        %v1352 = vsub.s32 2, %v1351
        %v1353 = vrot.slane %v1081, %v1352
        %v1354 = vlaneseq
        %v1355 = vshrl.u32 %v1354, 7
        %v1356 = vsub.s32 2, %v1355
        %v1357 = vrot.slane %v1082, %v1356
        %v1358 = vlaneseq
        %v1359 = vshrl.u32 %v1358, 7
        %v1360 = vsub.s32 2, %v1359
        %v1361 = vrot.slane %v1083, %v1360
        %v1362 = vlaneseq
        %v1363 = vshrl.u32 %v1362, 7
        %v1364 = vsub.s32 2, %v1363
        %v1365 = vrot.slane %v1084, %v1364
        %v1366 = vlaneseq
        %v1367 = vshrl.u32 %v1366, 7
        %v1368 = vsub.s32 2, %v1367
        %v1369 = vrot.slane %v1085, %v1368
        %v1370 = vlaneseq
        %v1371 = vshrl.u32 %v1370, 7
        %v1372 = vsub.s32 2, %v1371
        %v1373 = vrot.slane %v1086, %v1372
        %v1374 = vlaneseq
        %v1375 = vshrl.u32 %v1374, 7
        %v1376 = vsub.s32 2, %v1375
        %v1377 = vrot.slane %v1087, %v1376
        %v1378 = vlaneseq
        %v1379 = vshrl.u32 %v1378, 7
        %v1380 = vsub.s32 2, %v1379
        %v1381 = vrot.slane %v1088, %v1380
        %v1382 = vlaneseq
        %v1383 = vshrl.u32 %v1382, 7
        %v1384 = vsub.s32 2, %v1383
        %v1385 = vrot.slane %v1089, %v1384
        %v1386 = vlaneseq
        %v1387 = vshrl.u32 %v1386, 7
        %v1388 = vsub.s32 2, %v1387
        %v1389 = vrot.slane %v1090, %v1388
        %v1390 = vlaneseq
        %v1391 = vshrl.u32 %v1390, 7
        %v1392 = vsub.s32 2, %v1391
        %v1393 = vrot.slane %v1091, %v1392
        %v1394 = vlaneseq
        %v1395 = vshrl.u32 %v1394, 7
        %v1396 = vsub.s32 2, %v1395
        %v1397 = vrot.slane %v1092, %v1396
        %v1398 = vlaneseq
        %v1399 = vshrl.u32 %v1398, 7
        %v1400 = vsub.s32 2, %v1399
        %v1401 = vrot.slane %v1093, %v1400
        %v1402 = vlaneseq
        %v1403 = vshrl.u32 %v1402, 7
        %v1404 = vsub.s32 2, %v1403
        %v1405 = vrot.slane %v1094, %v1404
        %v1406 = vlaneseq
        %v1407 = vshrl.u32 %v1406, 7
        %v1408 = vsub.s32 2, %v1407
        %v1409 = vrot.slane %v1095, %v1408
        %v1410 = vmul.f32 %v1340, %v1349
        %v1411 = vmul.f32 %v1344, %v1349
        %v1412 = vmul.f32 %v1340, %v1353
        %v1413 = vmul.f32 %v1344, %v1353
        %v1414 = vmul.f32 %v1340, %v1357
        %v1415 = vmul.f32 %v1344, %v1357
        %v1416 = vmul.f32 %v1340, %v1361
        %v1417 = vmul.f32 %v1344, %v1361
        %v1418 = vmul.f32 %v1340, %v1365
        %v1419 = vmul.f32 %v1344, %v1365
        %v1420 = vmul.f32 %v1340, %v1369
        %v1421 = vmul.f32 %v1344, %v1369
        %v1422 = vmul.f32 %v1340, %v1373
        %v1423 = vmul.f32 %v1344, %v1373
        %v1424 = vmul.f32 %v1340, %v1377
        %v1425 = vmul.f32 %v1344, %v1377
        %v1426 = vmul.f32 %v1340, %v1381
        %v1427 = vmul.f32 %v1344, %v1381
        %v1428 = vmul.f32 %v1340, %v1385
        %v1429 = vmul.f32 %v1344, %v1385
        %v1430 = vmul.f32 %v1340, %v1389
        %v1431 = vmul.f32 %v1344, %v1389
        %v1432 = vmul.f32 %v1340, %v1393
        %v1433 = vmul.f32 %v1344, %v1393
        %v1434 = vmul.f32 %v1340, %v1397
        %v1435 = vmul.f32 %v1344, %v1397
        %v1436 = vmul.f32 %v1340, %v1401
        %v1437 = vmul.f32 %v1344, %v1401
        %v1438 = vmul.f32 %v1340, %v1405
        %v1439 = vmul.f32 %v1344, %v1405
        %v1440 = vmul.f32 %v1340, %v1409
        %v1441 = vmul.f32 %v1344, %v1409
        %v1442 = vadd.f32 %v1306, %v1410
        %v1443 = vadd.f32 %v1307, %v1411
        %v1444 = vadd.f32 %v1308, %v1412
        %v1445 = vadd.f32 %v1309, %v1413
        %v1446 = vadd.f32 %v1310, %v1414
        %v1447 = vadd.f32 %v1311, %v1415
        %v1448 = vadd.f32 %v1312, %v1416
        %v1449 = vadd.f32 %v1313, %v1417
        %v1450 = vadd.f32 %v1314, %v1418
        %v1451 = vadd.f32 %v1315, %v1419
        %v1452 = vadd.f32 %v1316, %v1420
        %v1453 = vadd.f32 %v1317, %v1421
        %v1454 = vadd.f32 %v1318, %v1422
        %v1455 = vadd.f32 %v1319, %v1423
        %v1456 = vadd.f32 %v1320, %v1424
        %v1457 = vadd.f32 %v1321, %v1425
        %v1458 = vadd.f32 %v1322, %v1426
        %v1459 = vadd.f32 %v1323, %v1427
        %v1460 = vadd.f32 %v1324, %v1428
        %v1461 = vadd.f32 %v1325, %v1429
        %v1462 = vadd.f32 %v1326, %v1430
        %v1463 = vadd.f32 %v1327, %v1431
        %v1464 = vadd.f32 %v1328, %v1432
        %v1465 = vadd.f32 %v1329, %v1433
        %v1466 = vadd.f32 %v1330, %v1434
        %v1467 = vadd.f32 %v1331, %v1435
        %v1468 = vadd.f32 %v1332, %v1436
        %v1469 = vadd.f32 %v1333, %v1437
        %v1470 = vadd.f32 %v1334, %v1438
        %v1471 = vadd.f32 %v1335, %v1439
        %v1472 = vadd.f32 %v1336, %v1440
        %v1473 = vadd.f32 %v1337, %v1441
        %1474 = vset.pattern.permute.xlu0 3
        %1475 = vperm.xlu0 %1474, %v293
        %v1476 = vpop.permute.xlu0 %1475
        %1478 = vset.pattern.permute.xlu0 3
        %1479 = vperm.xlu0 %1478, %v294
        %v1480 = vpop.permute.xlu0 %1479
        %v1482 = vlaneseq
        %v1483 = vshrl.u32 %v1482, 7
        %v1484 = vsub.s32 3, %v1483
        %v1485 = vrot.slane %v1080, %v1484
        %v1486 = vlaneseq
        %v1487 = vshrl.u32 %v1486, 7
        %v1488 = vsub.s32 3, %v1487
        %v1489 = vrot.slane %v1081, %v1488
        %v1490 = vlaneseq
        %v1491 = vshrl.u32 %v1490, 7
        %v1492 = vsub.s32 3, %v1491
        %v1493 = vrot.slane %v1082, %v1492
        %v1494 = vlaneseq
        %v1495 = vshrl.u32 %v1494, 7
        %v1496 = vsub.s32 3, %v1495
        %v1497 = vrot.slane %v1083, %v1496
        %v1498 = vlaneseq
        %v1499 = vshrl.u32 %v1498, 7
        %v1500 = vsub.s32 3, %v1499
        %v1501 = vrot.slane %v1084, %v1500
        %v1502 = vlaneseq
        %v1503 = vshrl.u32 %v1502, 7
        %v1504 = vsub.s32 3, %v1503
        %v1505 = vrot.slane %v1085, %v1504
        %v1506 = vlaneseq
        %v1507 = vshrl.u32 %v1506, 7
        %v1508 = vsub.s32 3, %v1507
        %v1509 = vrot.slane %v1086, %v1508
        %v1510 = vlaneseq
        %v1511 = vshrl.u32 %v1510, 7
        %v1512 = vsub.s32 3, %v1511
        %v1513 = vrot.slane %v1087, %v1512
        %v1514 = vlaneseq
        %v1515 = vshrl.u32 %v1514, 7
        %v1516 = vsub.s32 3, %v1515
        %v1517 = vrot.slane %v1088, %v1516
        %v1518 = vlaneseq
        %v1519 = vshrl.u32 %v1518, 7
        %v1520 = vsub.s32 3, %v1519
        %v1521 = vrot.slane %v1089, %v1520
        %v1522 = vlaneseq
        %v1523 = vshrl.u32 %v1522, 7
        %v1524 = vsub.s32 3, %v1523
        %v1525 = vrot.slane %v1090, %v1524
        %v1526 = vlaneseq
        %v1527 = vshrl.u32 %v1526, 7
        %v1528 = vsub.s32 3, %v1527
        %v1529 = vrot.slane %v1091, %v1528
        %v1530 = vlaneseq
        %v1531 = vshrl.u32 %v1530, 7
        %v1532 = vsub.s32 3, %v1531
        %v1533 = vrot.slane %v1092, %v1532
        %v1534 = vlaneseq
        %v1535 = vshrl.u32 %v1534, 7
        %v1536 = vsub.s32 3, %v1535
        %v1537 = vrot.slane %v1093, %v1536
        %v1538 = vlaneseq
        %v1539 = vshrl.u32 %v1538, 7
        %v1540 = vsub.s32 3, %v1539
        %v1541 = vrot.slane %v1094, %v1540
        %v1542 = vlaneseq
        %v1543 = vshrl.u32 %v1542, 7
        %v1544 = vsub.s32 3, %v1543
        %v1545 = vrot.slane %v1095, %v1544
        %v1546 = vmul.f32 %v1476, %v1485
        %v1547 = vmul.f32 %v1480, %v1485
        %v1548 = vmul.f32 %v1476, %v1489
        %v1549 = vmul.f32 %v1480, %v1489
        %v1550 = vmul.f32 %v1476, %v1493
        %v1551 = vmul.f32 %v1480, %v1493
        %v1552 = vmul.f32 %v1476, %v1497
        %v1553 = vmul.f32 %v1480, %v1497
        %v1554 = vmul.f32 %v1476, %v1501
        %v1555 = vmul.f32 %v1480, %v1501
        %v1556 = vmul.f32 %v1476, %v1505
        %v1557 = vmul.f32 %v1480, %v1505
        %v1558 = vmul.f32 %v1476, %v1509
        %v1559 = vmul.f32 %v1480, %v1509
        %v1560 = vmul.f32 %v1476, %v1513
        %v1561 = vmul.f32 %v1480, %v1513
        %v1562 = vmul.f32 %v1476, %v1517
        %v1563 = vmul.f32 %v1480, %v1517
        %v1564 = vmul.f32 %v1476, %v1521
        %v1565 = vmul.f32 %v1480, %v1521
        %v1566 = vmul.f32 %v1476, %v1525
        %v1567 = vmul.f32 %v1480, %v1525
        %v1568 = vmul.f32 %v1476, %v1529
        %v1569 = vmul.f32 %v1480, %v1529
        %v1570 = vmul.f32 %v1476, %v1533
        %v1571 = vmul.f32 %v1480, %v1533
        %v1572 = vmul.f32 %v1476, %v1537
        %v1573 = vmul.f32 %v1480, %v1537
        %v1574 = vmul.f32 %v1476, %v1541
        %v1575 = vmul.f32 %v1480, %v1541
        %v1576 = vmul.f32 %v1476, %v1545
        %v1577 = vmul.f32 %v1480, %v1545
        %v1578 = vadd.f32 %v1442, %v1546
        %v1579 = vadd.f32 %v1443, %v1547
        %v1580 = vadd.f32 %v1444, %v1548
        %v1581 = vadd.f32 %v1445, %v1549
        %v1582 = vadd.f32 %v1446, %v1550
        %v1583 = vadd.f32 %v1447, %v1551
        %v1584 = vadd.f32 %v1448, %v1552
        %v1585 = vadd.f32 %v1449, %v1553
        %v1586 = vadd.f32 %v1450, %v1554
        %v1587 = vadd.f32 %v1451, %v1555
        %v1588 = vadd.f32 %v1452, %v1556
        %v1589 = vadd.f32 %v1453, %v1557
        %v1590 = vadd.f32 %v1454, %v1558
        %v1591 = vadd.f32 %v1455, %v1559
        %v1592 = vadd.f32 %v1456, %v1560
        %v1593 = vadd.f32 %v1457, %v1561
        %v1594 = vadd.f32 %v1458, %v1562
        %v1595 = vadd.f32 %v1459, %v1563
        %v1596 = vadd.f32 %v1460, %v1564
        %v1597 = vadd.f32 %v1461, %v1565
        %v1598 = vadd.f32 %v1462, %v1566
        %v1599 = vadd.f32 %v1463, %v1567
        %v1600 = vadd.f32 %v1464, %v1568
        %v1601 = vadd.f32 %v1465, %v1569
        %v1602 = vadd.f32 %v1466, %v1570
        %v1603 = vadd.f32 %v1467, %v1571
        %v1604 = vadd.f32 %v1468, %v1572
        %v1605 = vadd.f32 %v1469, %v1573
        %v1606 = vadd.f32 %v1470, %v1574
        %v1607 = vadd.f32 %v1471, %v1575
        %v1608 = vadd.f32 %v1472, %v1576
        %v1609 = vadd.f32 %v1473, %v1577
        %1610 = vset.pattern.permute.xlu0 4
        %1611 = vperm.xlu0 %1610, %v293
        %v1612 = vpop.permute.xlu0 %1611
        %1614 = vset.pattern.permute.xlu0 4
        %1615 = vperm.xlu0 %1614, %v294
        %v1616 = vpop.permute.xlu0 %1615
        %v1618 = vlaneseq
        %v1619 = vshrl.u32 %v1618, 7
        %v1620 = vsub.s32 4, %v1619
        %v1621 = vrot.slane %v1080, %v1620
        %v1622 = vlaneseq
        %v1623 = vshrl.u32 %v1622, 7
        %v1624 = vsub.s32 4, %v1623
        %v1625 = vrot.slane %v1081, %v1624
        %v1626 = vlaneseq
        %v1627 = vshrl.u32 %v1626, 7
        %v1628 = vsub.s32 4, %v1627
        %v1629 = vrot.slane %v1082, %v1628
        %v1630 = vlaneseq
        %v1631 = vshrl.u32 %v1630, 7
        %v1632 = vsub.s32 4, %v1631
        %v1633 = vrot.slane %v1083, %v1632
        %v1634 = vlaneseq
        %v1635 = vshrl.u32 %v1634, 7
        %v1636 = vsub.s32 4, %v1635
        %v1637 = vrot.slane %v1084, %v1636
        %v1638 = vlaneseq
        %v1639 = vshrl.u32 %v1638, 7
        %v1640 = vsub.s32 4, %v1639
        %v1641 = vrot.slane %v1085, %v1640
        %v1642 = vlaneseq
        %v1643 = vshrl.u32 %v1642, 7
        %v1644 = vsub.s32 4, %v1643
        %v1645 = vrot.slane %v1086, %v1644
        %v1646 = vlaneseq
        %v1647 = vshrl.u32 %v1646, 7
        %v1648 = vsub.s32 4, %v1647
        %v1649 = vrot.slane %v1087, %v1648
        %v1650 = vlaneseq
        %v1651 = vshrl.u32 %v1650, 7
        %v1652 = vsub.s32 4, %v1651
        %v1653 = vrot.slane %v1088, %v1652
        %v1654 = vlaneseq
        %v1655 = vshrl.u32 %v1654, 7
        %v1656 = vsub.s32 4, %v1655
        %v1657 = vrot.slane %v1089, %v1656
        %v1658 = vlaneseq
        %v1659 = vshrl.u32 %v1658, 7
        %v1660 = vsub.s32 4, %v1659
        %v1661 = vrot.slane %v1090, %v1660
        %v1662 = vlaneseq
        %v1663 = vshrl.u32 %v1662, 7
        %v1664 = vsub.s32 4, %v1663
        %v1665 = vrot.slane %v1091, %v1664
        %v1666 = vlaneseq
        %v1667 = vshrl.u32 %v1666, 7
        %v1668 = vsub.s32 4, %v1667
        %v1669 = vrot.slane %v1092, %v1668
        %v1670 = vlaneseq
        %v1671 = vshrl.u32 %v1670, 7
        %v1672 = vsub.s32 4, %v1671
        %v1673 = vrot.slane %v1093, %v1672
        %v1674 = vlaneseq
        %v1675 = vshrl.u32 %v1674, 7
        %v1676 = vsub.s32 4, %v1675
        %v1677 = vrot.slane %v1094, %v1676
        %v1678 = vlaneseq
        %v1679 = vshrl.u32 %v1678, 7
        %v1680 = vsub.s32 4, %v1679
        %v1681 = vrot.slane %v1095, %v1680
        %v1682 = vmul.f32 %v1612, %v1621
        %v1683 = vmul.f32 %v1616, %v1621
        %v1684 = vmul.f32 %v1612, %v1625
        %v1685 = vmul.f32 %v1616, %v1625
        %v1686 = vmul.f32 %v1612, %v1629
        %v1687 = vmul.f32 %v1616, %v1629
        %v1688 = vmul.f32 %v1612, %v1633
        %v1689 = vmul.f32 %v1616, %v1633
        %v1690 = vmul.f32 %v1612, %v1637
        %v1691 = vmul.f32 %v1616, %v1637
        %v1692 = vmul.f32 %v1612, %v1641
        %v1693 = vmul.f32 %v1616, %v1641
        %v1694 = vmul.f32 %v1612, %v1645
        %v1695 = vmul.f32 %v1616, %v1645
        %v1696 = vmul.f32 %v1612, %v1649
        %v1697 = vmul.f32 %v1616, %v1649
        %v1698 = vmul.f32 %v1612, %v1653
        %v1699 = vmul.f32 %v1616, %v1653
        %v1700 = vmul.f32 %v1612, %v1657
        %v1701 = vmul.f32 %v1616, %v1657
        %v1702 = vmul.f32 %v1612, %v1661
        %v1703 = vmul.f32 %v1616, %v1661
        %v1704 = vmul.f32 %v1612, %v1665
        %v1705 = vmul.f32 %v1616, %v1665
        %v1706 = vmul.f32 %v1612, %v1669
        %v1707 = vmul.f32 %v1616, %v1669
        %v1708 = vmul.f32 %v1612, %v1673
        %v1709 = vmul.f32 %v1616, %v1673
        %v1710 = vmul.f32 %v1612, %v1677
        %v1711 = vmul.f32 %v1616, %v1677
        %v1712 = vmul.f32 %v1612, %v1681
        %v1713 = vmul.f32 %v1616, %v1681
        %v1714 = vadd.f32 %v1578, %v1682
        %v1715 = vadd.f32 %v1579, %v1683
        %v1716 = vadd.f32 %v1580, %v1684
        %v1717 = vadd.f32 %v1581, %v1685
        %v1718 = vadd.f32 %v1582, %v1686
        %v1719 = vadd.f32 %v1583, %v1687
        %v1720 = vadd.f32 %v1584, %v1688
        %v1721 = vadd.f32 %v1585, %v1689
        %v1722 = vadd.f32 %v1586, %v1690
        %v1723 = vadd.f32 %v1587, %v1691
        %v1724 = vadd.f32 %v1588, %v1692
        %v1725 = vadd.f32 %v1589, %v1693
        %v1726 = vadd.f32 %v1590, %v1694
        %v1727 = vadd.f32 %v1591, %v1695
        %v1728 = vadd.f32 %v1592, %v1696
        %v1729 = vadd.f32 %v1593, %v1697
        %v1730 = vadd.f32 %v1594, %v1698
        %v1731 = vadd.f32 %v1595, %v1699
        %v1732 = vadd.f32 %v1596, %v1700
        %v1733 = vadd.f32 %v1597, %v1701
        %v1734 = vadd.f32 %v1598, %v1702
        %v1735 = vadd.f32 %v1599, %v1703
        %v1736 = vadd.f32 %v1600, %v1704
        %v1737 = vadd.f32 %v1601, %v1705
        %v1738 = vadd.f32 %v1602, %v1706
        %v1739 = vadd.f32 %v1603, %v1707
        %v1740 = vadd.f32 %v1604, %v1708
        %v1741 = vadd.f32 %v1605, %v1709
        %v1742 = vadd.f32 %v1606, %v1710
        %v1743 = vadd.f32 %v1607, %v1711
        %v1744 = vadd.f32 %v1608, %v1712
        %v1745 = vadd.f32 %v1609, %v1713
        %1746 = vset.pattern.permute.xlu0 5
        %1747 = vperm.xlu0 %1746, %v293
        %v1748 = vpop.permute.xlu0 %1747
        %1750 = vset.pattern.permute.xlu0 5
        %1751 = vperm.xlu0 %1750, %v294
        %v1752 = vpop.permute.xlu0 %1751
        %v1754 = vlaneseq
        %v1755 = vshrl.u32 %v1754, 7
        %v1756 = vsub.s32 5, %v1755
        %v1757 = vrot.slane %v1080, %v1756
        %v1758 = vlaneseq
        %v1759 = vshrl.u32 %v1758, 7
        %v1760 = vsub.s32 5, %v1759
        %v1761 = vrot.slane %v1081, %v1760
        %v1762 = vlaneseq
        %v1763 = vshrl.u32 %v1762, 7
        %v1764 = vsub.s32 5, %v1763
        %v1765 = vrot.slane %v1082, %v1764
        %v1766 = vlaneseq
        %v1767 = vshrl.u32 %v1766, 7
        %v1768 = vsub.s32 5, %v1767
        %v1769 = vrot.slane %v1083, %v1768
        %v1770 = vlaneseq
        %v1771 = vshrl.u32 %v1770, 7
        %v1772 = vsub.s32 5, %v1771
        %v1773 = vrot.slane %v1084, %v1772
        %v1774 = vlaneseq
        %v1775 = vshrl.u32 %v1774, 7
        %v1776 = vsub.s32 5, %v1775
        %v1777 = vrot.slane %v1085, %v1776
        %v1778 = vlaneseq
        %v1779 = vshrl.u32 %v1778, 7
        %v1780 = vsub.s32 5, %v1779
        %v1781 = vrot.slane %v1086, %v1780
        %v1782 = vlaneseq
        %v1783 = vshrl.u32 %v1782, 7
        %v1784 = vsub.s32 5, %v1783
        %v1785 = vrot.slane %v1087, %v1784
        %v1786 = vlaneseq
        %v1787 = vshrl.u32 %v1786, 7
        %v1788 = vsub.s32 5, %v1787
        %v1789 = vrot.slane %v1088, %v1788
        %v1790 = vlaneseq
        %v1791 = vshrl.u32 %v1790, 7
        %v1792 = vsub.s32 5, %v1791
        %v1793 = vrot.slane %v1089, %v1792
        %v1794 = vlaneseq
        %v1795 = vshrl.u32 %v1794, 7
        %v1796 = vsub.s32 5, %v1795
        %v1797 = vrot.slane %v1090, %v1796
        %v1798 = vlaneseq
        %v1799 = vshrl.u32 %v1798, 7
        %v1800 = vsub.s32 5, %v1799
        %v1801 = vrot.slane %v1091, %v1800
        %v1802 = vlaneseq
        %v1803 = vshrl.u32 %v1802, 7
        %v1804 = vsub.s32 5, %v1803
        %v1805 = vrot.slane %v1092, %v1804
        %v1806 = vlaneseq
        %v1807 = vshrl.u32 %v1806, 7
        %v1808 = vsub.s32 5, %v1807
        %v1809 = vrot.slane %v1093, %v1808
        %v1810 = vlaneseq
        %v1811 = vshrl.u32 %v1810, 7
        %v1812 = vsub.s32 5, %v1811
        %v1813 = vrot.slane %v1094, %v1812
        %v1814 = vlaneseq
        %v1815 = vshrl.u32 %v1814, 7
        %v1816 = vsub.s32 5, %v1815
        %v1817 = vrot.slane %v1095, %v1816
        %v1818 = vmul.f32 %v1748, %v1757
        %v1819 = vmul.f32 %v1752, %v1757
        %v1820 = vmul.f32 %v1748, %v1761
        %v1821 = vmul.f32 %v1752, %v1761
        %v1822 = vmul.f32 %v1748, %v1765
        %v1823 = vmul.f32 %v1752, %v1765
        %v1824 = vmul.f32 %v1748, %v1769
        %v1825 = vmul.f32 %v1752, %v1769
        %v1826 = vmul.f32 %v1748, %v1773
        %v1827 = vmul.f32 %v1752, %v1773
        %v1828 = vmul.f32 %v1748, %v1777
        %v1829 = vmul.f32 %v1752, %v1777
        %v1830 = vmul.f32 %v1748, %v1781
        %v1831 = vmul.f32 %v1752, %v1781
        %v1832 = vmul.f32 %v1748, %v1785
        %v1833 = vmul.f32 %v1752, %v1785
        %v1834 = vmul.f32 %v1748, %v1789
        %v1835 = vmul.f32 %v1752, %v1789
        %v1836 = vmul.f32 %v1748, %v1793
        %v1837 = vmul.f32 %v1752, %v1793
        %v1838 = vmul.f32 %v1748, %v1797
        %v1839 = vmul.f32 %v1752, %v1797
        %v1840 = vmul.f32 %v1748, %v1801
        %v1841 = vmul.f32 %v1752, %v1801
        %v1842 = vmul.f32 %v1748, %v1805
        %v1843 = vmul.f32 %v1752, %v1805
        %v1844 = vmul.f32 %v1748, %v1809
        %v1845 = vmul.f32 %v1752, %v1809
        %v1846 = vmul.f32 %v1748, %v1813
        %v1847 = vmul.f32 %v1752, %v1813
        %v1848 = vmul.f32 %v1748, %v1817
        %v1849 = vmul.f32 %v1752, %v1817
        %v1850 = vadd.f32 %v1714, %v1818
        %v1851 = vadd.f32 %v1715, %v1819
        %v1852 = vadd.f32 %v1716, %v1820
        %v1853 = vadd.f32 %v1717, %v1821
        %v1854 = vadd.f32 %v1718, %v1822
        %v1855 = vadd.f32 %v1719, %v1823
        %v1856 = vadd.f32 %v1720, %v1824
        %v1857 = vadd.f32 %v1721, %v1825
        %v1858 = vadd.f32 %v1722, %v1826
        %v1859 = vadd.f32 %v1723, %v1827
        %v1860 = vadd.f32 %v1724, %v1828
        %v1861 = vadd.f32 %v1725, %v1829
        %v1862 = vadd.f32 %v1726, %v1830
        %v1863 = vadd.f32 %v1727, %v1831
        %v1864 = vadd.f32 %v1728, %v1832
        %v1865 = vadd.f32 %v1729, %v1833
        %v1866 = vadd.f32 %v1730, %v1834
        %v1867 = vadd.f32 %v1731, %v1835
        %v1868 = vadd.f32 %v1732, %v1836
        %v1869 = vadd.f32 %v1733, %v1837
        %v1870 = vadd.f32 %v1734, %v1838
        %v1871 = vadd.f32 %v1735, %v1839
        %v1872 = vadd.f32 %v1736, %v1840
        %v1873 = vadd.f32 %v1737, %v1841
        %v1874 = vadd.f32 %v1738, %v1842
        %v1875 = vadd.f32 %v1739, %v1843
        %v1876 = vadd.f32 %v1740, %v1844
        %v1877 = vadd.f32 %v1741, %v1845
        %v1878 = vadd.f32 %v1742, %v1846
        %v1879 = vadd.f32 %v1743, %v1847
        %v1880 = vadd.f32 %v1744, %v1848
        %v1881 = vadd.f32 %v1745, %v1849
        %1882 = vset.pattern.permute.xlu0 6
        %1883 = vperm.xlu0 %1882, %v293
        %v1884 = vpop.permute.xlu0 %1883
        %1886 = vset.pattern.permute.xlu0 6
        %1887 = vperm.xlu0 %1886, %v294
        %v1888 = vpop.permute.xlu0 %1887
        %v1890 = vlaneseq
        %v1891 = vshrl.u32 %v1890, 7
        %v1892 = vsub.s32 6, %v1891
        %v1893 = vrot.slane %v1080, %v1892
        %v1894 = vlaneseq
        %v1895 = vshrl.u32 %v1894, 7
        %v1896 = vsub.s32 6, %v1895
        %v1897 = vrot.slane %v1081, %v1896
        %v1898 = vlaneseq
        %v1899 = vshrl.u32 %v1898, 7
        %v1900 = vsub.s32 6, %v1899
        %v1901 = vrot.slane %v1082, %v1900
        %v1902 = vlaneseq
        %v1903 = vshrl.u32 %v1902, 7
        %v1904 = vsub.s32 6, %v1903
        %v1905 = vrot.slane %v1083, %v1904
        %v1906 = vlaneseq
        %v1907 = vshrl.u32 %v1906, 7
        %v1908 = vsub.s32 6, %v1907
        %v1909 = vrot.slane %v1084, %v1908
        %v1910 = vlaneseq
        %v1911 = vshrl.u32 %v1910, 7
        %v1912 = vsub.s32 6, %v1911
        %v1913 = vrot.slane %v1085, %v1912
        %v1914 = vlaneseq
        %v1915 = vshrl.u32 %v1914, 7
        %v1916 = vsub.s32 6, %v1915
        %v1917 = vrot.slane %v1086, %v1916
        %v1918 = vlaneseq
        %v1919 = vshrl.u32 %v1918, 7
        %v1920 = vsub.s32 6, %v1919
        %v1921 = vrot.slane %v1087, %v1920
        %v1922 = vlaneseq
        %v1923 = vshrl.u32 %v1922, 7
        %v1924 = vsub.s32 6, %v1923
        %v1925 = vrot.slane %v1088, %v1924
        %v1926 = vlaneseq
        %v1927 = vshrl.u32 %v1926, 7
        %v1928 = vsub.s32 6, %v1927
        %v1929 = vrot.slane %v1089, %v1928
        %v1930 = vlaneseq
        %v1931 = vshrl.u32 %v1930, 7
        %v1932 = vsub.s32 6, %v1931
        %v1933 = vrot.slane %v1090, %v1932
        %v1934 = vlaneseq
        %v1935 = vshrl.u32 %v1934, 7
        %v1936 = vsub.s32 6, %v1935
        %v1937 = vrot.slane %v1091, %v1936
        %v1938 = vlaneseq
        %v1939 = vshrl.u32 %v1938, 7
        %v1940 = vsub.s32 6, %v1939
        %v1941 = vrot.slane %v1092, %v1940
        %v1942 = vlaneseq
        %v1943 = vshrl.u32 %v1942, 7
        %v1944 = vsub.s32 6, %v1943
        %v1945 = vrot.slane %v1093, %v1944
        %v1946 = vlaneseq
        %v1947 = vshrl.u32 %v1946, 7
        %v1948 = vsub.s32 6, %v1947
        %v1949 = vrot.slane %v1094, %v1948
        %v1950 = vlaneseq
        %v1951 = vshrl.u32 %v1950, 7
        %v1952 = vsub.s32 6, %v1951
        %v1953 = vrot.slane %v1095, %v1952
        %v1954 = vmul.f32 %v1884, %v1893
        %v1955 = vmul.f32 %v1888, %v1893
        %v1956 = vmul.f32 %v1884, %v1897
        %v1957 = vmul.f32 %v1888, %v1897
        %v1958 = vmul.f32 %v1884, %v1901
        %v1959 = vmul.f32 %v1888, %v1901
        %v1960 = vmul.f32 %v1884, %v1905
        %v1961 = vmul.f32 %v1888, %v1905
        %v1962 = vmul.f32 %v1884, %v1909
        %v1963 = vmul.f32 %v1888, %v1909
        %v1964 = vmul.f32 %v1884, %v1913
        %v1965 = vmul.f32 %v1888, %v1913
        %v1966 = vmul.f32 %v1884, %v1917
        %v1967 = vmul.f32 %v1888, %v1917
        %v1968 = vmul.f32 %v1884, %v1921
        %v1969 = vmul.f32 %v1888, %v1921
        %v1970 = vmul.f32 %v1884, %v1925
        %v1971 = vmul.f32 %v1888, %v1925
        %v1972 = vmul.f32 %v1884, %v1929
        %v1973 = vmul.f32 %v1888, %v1929
        %v1974 = vmul.f32 %v1884, %v1933
        %v1975 = vmul.f32 %v1888, %v1933
        %v1976 = vmul.f32 %v1884, %v1937
        %v1977 = vmul.f32 %v1888, %v1937
        %v1978 = vmul.f32 %v1884, %v1941
        %v1979 = vmul.f32 %v1888, %v1941
        %v1980 = vmul.f32 %v1884, %v1945
        %v1981 = vmul.f32 %v1888, %v1945
        %v1982 = vmul.f32 %v1884, %v1949
        %v1983 = vmul.f32 %v1888, %v1949
        %v1984 = vmul.f32 %v1884, %v1953
        %v1985 = vmul.f32 %v1888, %v1953
        %v1986 = vadd.f32 %v1850, %v1954
        %v1987 = vadd.f32 %v1851, %v1955
        %v1988 = vadd.f32 %v1852, %v1956
        %v1989 = vadd.f32 %v1853, %v1957
        %v1990 = vadd.f32 %v1854, %v1958
        %v1991 = vadd.f32 %v1855, %v1959
        %v1992 = vadd.f32 %v1856, %v1960
        %v1993 = vadd.f32 %v1857, %v1961
        %v1994 = vadd.f32 %v1858, %v1962
        %v1995 = vadd.f32 %v1859, %v1963
        %v1996 = vadd.f32 %v1860, %v1964
        %v1997 = vadd.f32 %v1861, %v1965
        %v1998 = vadd.f32 %v1862, %v1966
        %v1999 = vadd.f32 %v1863, %v1967
        %v2000 = vadd.f32 %v1864, %v1968
        %v2001 = vadd.f32 %v1865, %v1969
        %v2002 = vadd.f32 %v1866, %v1970
        %v2003 = vadd.f32 %v1867, %v1971
        %v2004 = vadd.f32 %v1868, %v1972
        %v2005 = vadd.f32 %v1869, %v1973
        %v2006 = vadd.f32 %v1870, %v1974
        %v2007 = vadd.f32 %v1871, %v1975
        %v2008 = vadd.f32 %v1872, %v1976
        %v2009 = vadd.f32 %v1873, %v1977
        %v2010 = vadd.f32 %v1874, %v1978
        %v2011 = vadd.f32 %v1875, %v1979
        %v2012 = vadd.f32 %v1876, %v1980
        %v2013 = vadd.f32 %v1877, %v1981
        %v2014 = vadd.f32 %v1878, %v1982
        %v2015 = vadd.f32 %v1879, %v1983
        %v2016 = vadd.f32 %v1880, %v1984
        %v2017 = vadd.f32 %v1881, %v1985
        %2018 = vset.pattern.permute.xlu0 7
        %2019 = vperm.xlu0 %2018, %v293
        %v2020 = vpop.permute.xlu0 %2019
        %2022 = vset.pattern.permute.xlu0 7
        %2023 = vperm.xlu0 %2022, %v294
        %v2024 = vpop.permute.xlu0 %2023
        %v2026 = vlaneseq
        %v2027 = vshrl.u32 %v2026, 7
        %v2028 = vsub.s32 7, %v2027
        %v2029 = vrot.slane %v1080, %v2028
        %v2030 = vlaneseq
        %v2031 = vshrl.u32 %v2030, 7
        %v2032 = vsub.s32 7, %v2031
        %v2033 = vrot.slane %v1081, %v2032
        %v2034 = vlaneseq
        %v2035 = vshrl.u32 %v2034, 7
        %v2036 = vsub.s32 7, %v2035
        %v2037 = vrot.slane %v1082, %v2036
        %v2038 = vlaneseq
        %v2039 = vshrl.u32 %v2038, 7
        %v2040 = vsub.s32 7, %v2039
        %v2041 = vrot.slane %v1083, %v2040
        %v2042 = vlaneseq
        %v2043 = vshrl.u32 %v2042, 7
        %v2044 = vsub.s32 7, %v2043
        %v2045 = vrot.slane %v1084, %v2044
        %v2046 = vlaneseq
        %v2047 = vshrl.u32 %v2046, 7
        %v2048 = vsub.s32 7, %v2047
        %v2049 = vrot.slane %v1085, %v2048
        %v2050 = vlaneseq
        %v2051 = vshrl.u32 %v2050, 7
        %v2052 = vsub.s32 7, %v2051
        %v2053 = vrot.slane %v1086, %v2052
        %v2054 = vlaneseq
        %v2055 = vshrl.u32 %v2054, 7
        %v2056 = vsub.s32 7, %v2055
        %v2057 = vrot.slane %v1087, %v2056
        %v2058 = vlaneseq
        %v2059 = vshrl.u32 %v2058, 7
        %v2060 = vsub.s32 7, %v2059
        %v2061 = vrot.slane %v1088, %v2060
        %v2062 = vlaneseq
        %v2063 = vshrl.u32 %v2062, 7
        %v2064 = vsub.s32 7, %v2063
        %v2065 = vrot.slane %v1089, %v2064
        %v2066 = vlaneseq
        %v2067 = vshrl.u32 %v2066, 7
        %v2068 = vsub.s32 7, %v2067
        %v2069 = vrot.slane %v1090, %v2068
        %v2070 = vlaneseq
        %v2071 = vshrl.u32 %v2070, 7
        %v2072 = vsub.s32 7, %v2071
        %v2073 = vrot.slane %v1091, %v2072
        %v2074 = vlaneseq
        %v2075 = vshrl.u32 %v2074, 7
        %v2076 = vsub.s32 7, %v2075
        %v2077 = vrot.slane %v1092, %v2076
        %v2078 = vlaneseq
        %v2079 = vshrl.u32 %v2078, 7
        %v2080 = vsub.s32 7, %v2079
        %v2081 = vrot.slane %v1093, %v2080
        %v2082 = vlaneseq
        %v2083 = vshrl.u32 %v2082, 7
        %v2084 = vsub.s32 7, %v2083
        %v2085 = vrot.slane %v1094, %v2084
        %v2086 = vlaneseq
        %v2087 = vshrl.u32 %v2086, 7
        %v2088 = vsub.s32 7, %v2087
        %v2089 = vrot.slane %v1095, %v2088
        %v2090 = vmul.f32 %v2020, %v2029
        %v2091 = vmul.f32 %v2024, %v2029
        %v2092 = vmul.f32 %v2020, %v2033
        %v2093 = vmul.f32 %v2024, %v2033
        %v2094 = vmul.f32 %v2020, %v2037
        %v2095 = vmul.f32 %v2024, %v2037
        %v2096 = vmul.f32 %v2020, %v2041
        %v2097 = vmul.f32 %v2024, %v2041
        %v2098 = vmul.f32 %v2020, %v2045
        %v2099 = vmul.f32 %v2024, %v2045
        %v2100 = vmul.f32 %v2020, %v2049
        %v2101 = vmul.f32 %v2024, %v2049
        %v2102 = vmul.f32 %v2020, %v2053
        %v2103 = vmul.f32 %v2024, %v2053
        %v2104 = vmul.f32 %v2020, %v2057
        %v2105 = vmul.f32 %v2024, %v2057
        %v2106 = vmul.f32 %v2020, %v2061
        %v2107 = vmul.f32 %v2024, %v2061
        %v2108 = vmul.f32 %v2020, %v2065
        %v2109 = vmul.f32 %v2024, %v2065
        %v2110 = vmul.f32 %v2020, %v2069
        %v2111 = vmul.f32 %v2024, %v2069
        %v2112 = vmul.f32 %v2020, %v2073
        %v2113 = vmul.f32 %v2024, %v2073
        %v2114 = vmul.f32 %v2020, %v2077
        %v2115 = vmul.f32 %v2024, %v2077
        %v2116 = vmul.f32 %v2020, %v2081
        %v2117 = vmul.f32 %v2024, %v2081
        %v2118 = vmul.f32 %v2020, %v2085
        %v2119 = vmul.f32 %v2024, %v2085
        %v2120 = vmul.f32 %v2020, %v2089
        %v2121 = vmul.f32 %v2024, %v2089
        %v2122 = vadd.f32 %v1986, %v2090
        %v2123 = vadd.f32 %v1987, %v2091
        %v2124 = vadd.f32 %v1988, %v2092
        %v2125 = vadd.f32 %v1989, %v2093
        %v2126 = vadd.f32 %v1990, %v2094
        %v2127 = vadd.f32 %v1991, %v2095
        %v2128 = vadd.f32 %v1992, %v2096
        %v2129 = vadd.f32 %v1993, %v2097
        %v2130 = vadd.f32 %v1994, %v2098
        %v2131 = vadd.f32 %v1995, %v2099
        %v2132 = vadd.f32 %v1996, %v2100
        %v2133 = vadd.f32 %v1997, %v2101
        %v2134 = vadd.f32 %v1998, %v2102
        %v2135 = vadd.f32 %v1999, %v2103
        %v2136 = vadd.f32 %v2000, %v2104
        %v2137 = vadd.f32 %v2001, %v2105
        %v2138 = vadd.f32 %v2002, %v2106
        %v2139 = vadd.f32 %v2003, %v2107
        %v2140 = vadd.f32 %v2004, %v2108
        %v2141 = vadd.f32 %v2005, %v2109
        %v2142 = vadd.f32 %v2006, %v2110
        %v2143 = vadd.f32 %v2007, %v2111
        %v2144 = vadd.f32 %v2008, %v2112
        %v2145 = vadd.f32 %v2009, %v2113
        %v2146 = vadd.f32 %v2010, %v2114
        %v2147 = vadd.f32 %v2011, %v2115
        %v2148 = vadd.f32 %v2012, %v2116
        %v2149 = vadd.f32 %v2013, %v2117
        %v2150 = vadd.f32 %v2014, %v2118
        %v2151 = vadd.f32 %v2015, %v2119
        %v2152 = vadd.f32 %v2016, %v2120
        %v2153 = vadd.f32 %v2017, %v2121
        %v2154 = vld [vmem:[%s272] sm:$0xff]
        %v2155 = vld [vmem:[%s272 + $0x8] sm:$0xff]
        %v2156 = vld [vmem:[%s272 + $0x10] sm:$0xff]
        %v2157 = vld [vmem:[%s272 + $0x18] sm:$0xff]
        %v2158 = vld [vmem:[%s272 + $0x20] sm:$0xff]
        %v2159 = vld [vmem:[%s272 + $0x28] sm:$0xff]
        %v2160 = vld [vmem:[%s272 + $0x30] sm:$0xff]
        %v2161 = vld [vmem:[%s272 + $0x38] sm:$0xff]
        %v2162 = vld [vmem:[%s272 + $0x40] sm:$0xff]
        %v2163 = vld [vmem:[%s272 + $0x48] sm:$0xff]
        %v2164 = vld [vmem:[%s272 + $0x50] sm:$0xff]
        %v2165 = vld [vmem:[%s272 + $0x58] sm:$0xff]
        %v2166 = vld [vmem:[%s272 + $0x60] sm:$0xff]
        %v2167 = vld [vmem:[%s272 + $0x68] sm:$0xff]
        %v2168 = vld [vmem:[%s272 + $0x70] sm:$0xff]
        %v2169 = vld [vmem:[%s272 + $0x78] sm:$0xff]
        %v2170 = vld [vmem:[%s272 + $0x80] sm:$0xff]
        %v2171 = vld [vmem:[%s272 + $0x88] sm:$0xff]
        %v2172 = vld [vmem:[%s272 + $0x90] sm:$0xff]
        %v2173 = vld [vmem:[%s272 + $0x98] sm:$0xff]
        %v2174 = vld [vmem:[%s272 + $0xa0] sm:$0xff]
        %v2175 = vld [vmem:[%s272 + $0xa8] sm:$0xff]
        %v2176 = vld [vmem:[%s272 + $0xb0] sm:$0xff]
        %v2177 = vld [vmem:[%s272 + $0xb8] sm:$0xff]
        %v2178 = vld [vmem:[%s272 + $0xc0] sm:$0xff]
        %v2179 = vld [vmem:[%s272 + $0xc8] sm:$0xff]
        %v2180 = vld [vmem:[%s272 + $0xd0] sm:$0xff]
        %v2181 = vld [vmem:[%s272 + $0xd8] sm:$0xff]
        %v2182 = vld [vmem:[%s272 + $0xe0] sm:$0xff]
        %v2183 = vld [vmem:[%s272 + $0xe8] sm:$0xff]
        %v2184 = vld [vmem:[%s272 + $0xf0] sm:$0xff]
        %v2185 = vld [vmem:[%s272 + $0xf8] sm:$0xff]
        %v2186 = vmul.f32 %v2154, %v2122
        %v2187 = vmul.f32 %v2155, %v2123
        %v2188 = vmul.f32 %v2156, %v2124
        %v2189 = vmul.f32 %v2157, %v2125
        %v2190 = vmul.f32 %v2158, %v2126
        %v2191 = vmul.f32 %v2159, %v2127
        %v2192 = vmul.f32 %v2160, %v2128
        %v2193 = vmul.f32 %v2161, %v2129
        %v2194 = vmul.f32 %v2162, %v2130
        %v2195 = vmul.f32 %v2163, %v2131
        %v2196 = vmul.f32 %v2164, %v2132
        %v2197 = vmul.f32 %v2165, %v2133
        %v2198 = vmul.f32 %v2166, %v2134
        %v2199 = vmul.f32 %v2167, %v2135
        %v2200 = vmul.f32 %v2168, %v2136
        %v2201 = vmul.f32 %v2169, %v2137
        %v2202 = vmul.f32 %v2170, %v2138
        %v2203 = vmul.f32 %v2171, %v2139
        %v2204 = vmul.f32 %v2172, %v2140
        %v2205 = vmul.f32 %v2173, %v2141
        %v2206 = vmul.f32 %v2174, %v2142
        %v2207 = vmul.f32 %v2175, %v2143
        %v2208 = vmul.f32 %v2176, %v2144
        %v2209 = vmul.f32 %v2177, %v2145
        %v2210 = vmul.f32 %v2178, %v2146
        %v2211 = vmul.f32 %v2179, %v2147
        %v2212 = vmul.f32 %v2180, %v2148
        %v2213 = vmul.f32 %v2181, %v2149
        %v2214 = vmul.f32 %v2182, %v2150
        %v2215 = vmul.f32 %v2183, %v2151
        %v2216 = vmul.f32 %v2184, %v2152
        %v2217 = vmul.f32 %v2185, %v2153
        %vm2218 = vcmask 130048
        %2219 = vst.msk [vmem:[%s250] sm:$0xff] %vm2218, %v2186
        %2220 = vst.msk [vmem:[%s250 + $0x8] sm:$0xff] %vm2218, %v2187
        %2221 = vst.msk [vmem:[%s250 + $0x10] sm:$0xff] %vm2218, %v2188
        %2222 = vst.msk [vmem:[%s250 + $0x18] sm:$0xff] %vm2218, %v2189
        %2223 = vst.msk [vmem:[%s250 + $0x20] sm:$0xff] %vm2218, %v2190
        %2224 = vst.msk [vmem:[%s250 + $0x28] sm:$0xff] %vm2218, %v2191
        %2225 = vst.msk [vmem:[%s250 + $0x30] sm:$0xff] %vm2218, %v2192
        %2226 = vst.msk [vmem:[%s250 + $0x38] sm:$0xff] %vm2218, %v2193
        %2227 = vst.msk [vmem:[%s250 + $0x40] sm:$0xff] %vm2218, %v2194
        %2228 = vst.msk [vmem:[%s250 + $0x48] sm:$0xff] %vm2218, %v2195
        %2229 = vst.msk [vmem:[%s250 + $0x50] sm:$0xff] %vm2218, %v2196
        %2230 = vst.msk [vmem:[%s250 + $0x58] sm:$0xff] %vm2218, %v2197
        %2231 = vst.msk [vmem:[%s250 + $0x60] sm:$0xff] %vm2218, %v2198
        %2232 = vst.msk [vmem:[%s250 + $0x68] sm:$0xff] %vm2218, %v2199
        %2233 = vst.msk [vmem:[%s250 + $0x70] sm:$0xff] %vm2218, %v2200
        %2234 = vst.msk [vmem:[%s250 + $0x78] sm:$0xff] %vm2218, %v2201
        %2235 = vst.msk [vmem:[%s250 + $0x80] sm:$0xff] %vm2218, %v2202
        %2236 = vst.msk [vmem:[%s250 + $0x88] sm:$0xff] %vm2218, %v2203
        %2237 = vst.msk [vmem:[%s250 + $0x90] sm:$0xff] %vm2218, %v2204
        %2238 = vst.msk [vmem:[%s250 + $0x98] sm:$0xff] %vm2218, %v2205
        %2239 = vst.msk [vmem:[%s250 + $0xa0] sm:$0xff] %vm2218, %v2206
        %2240 = vst.msk [vmem:[%s250 + $0xa8] sm:$0xff] %vm2218, %v2207
        %2241 = vst.msk [vmem:[%s250 + $0xb0] sm:$0xff] %vm2218, %v2208
        %2242 = vst.msk [vmem:[%s250 + $0xb8] sm:$0xff] %vm2218, %v2209
        %2243 = vst.msk [vmem:[%s250 + $0xc0] sm:$0xff] %vm2218, %v2210
        %2244 = vst.msk [vmem:[%s250 + $0xc8] sm:$0xff] %vm2218, %v2211
        %2245 = vst.msk [vmem:[%s250 + $0xd0] sm:$0xff] %vm2218, %v2212
        %2246 = vst.msk [vmem:[%s250 + $0xd8] sm:$0xff] %vm2218, %v2213
        %2247 = vst.msk [vmem:[%s250 + $0xe0] sm:$0xff] %vm2218, %v2214
        %2248 = vst.msk [vmem:[%s250 + $0xe8] sm:$0xff] %vm2218, %v2215
        %2249 = vst.msk [vmem:[%s250 + $0xf0] sm:$0xff] %vm2218, %v2216
        %2250 = vst.msk [vmem:[%s250 + $0xf8] sm:$0xff] %vm2218, %v2217
        %s2251 = sand.u32 %s141, 1
        %s2252 = scalar_lea.sflag [#allocation3], %s2251
        %s2253 = sand.u32 %s141, 1
        %s2254 = smul.addr %s2253, 256
        %s2255 = scalar_lea.vmem [#allocation2], %s2254
        // Predicated region
        $region37: #{_lambda_.5} parent=35 // pred_check
          %p2256 = pneg %p151
        $region38: #{_lambda_.5} parent=35 // pred_check_branch
          %2258 = sbr.rel (%p2256) target = $region40
        $region39: #{_lambda_.5} parent=35 // pred_region
          %s2259 = smul.u32 16, %s22
          %s2260 = smul.u32 2, %s23
          %s2262 = ssub.s32 4096, 4096
          %2263 = vsyncadd %s2252, %s2262
          %s2264 = smul.addr %s2259, 2
          %s2265 = sadd.s32 %s2260, %s2264
          %s2266 = smul.addr %s2265, 128
          %s2267 = scalar_lea.hbm %s4, %s2266
          %s2268 = sshll.u32 %s2255, 4
          %s2269 = int_to_ptr.vmem [resolvable:$true] %s2268
          %2274 = dma.vmem_to_hbm [thread:$0]  %s2269, 4096, %s2267, %s2252, 128, 128, 8
        $region40: #{_lambda_.5} parent=35 // pred_fallthru
          _
      $region36: #{_lambda_.5} parent=5 // pred_fallthru
        _
      %p2275 = scmp.le.s32.totalorder 2, %s13
      // Predicated region
      $region41: #{_lambda_.5} parent=5 // pred_check
        %p2276 = pneg %p2275
      $region42: #{_lambda_.5} parent=5 // pred_check_branch
        %2278 = sbr.rel (%p2276) target = $region44
      $region43: #{_lambda_.5} parent=5 // pred_region
        %s2279 = ssub.s32 %s13, 2
        // Predicated region
        $region45: #{_lambda_.5} parent=43 // pred_check
          %p2280 = pneg %p157
        $region46: #{_lambda_.5} parent=43 // pred_check_branch
          %2282 = sbr.rel (%p2280) target = $region48
        $region47: #{_lambda_.5} parent=43 // pred_region
          %s2283 = sand.u32 %s142, 1
          %s2284 = scalar_lea.sflag [#allocation3], %s2283
          %s2285 = sand.u32 %s142, 1
          %s2286 = smul.addr %s2285, 256
          %s2287 = scalar_lea.vmem [#allocation2], %s2286
          %2288 = dma.done %s2284, 4096
        $region48: #{_lambda_.5} parent=43 // pred_fallthru
          _
      $region44: #{_lambda_.5} parent=5 // pred_fallthru
        _
    $region6: #{_lambda_.5} parent=1 // loop_footer
      %s17 = sadd.s32 1, %s13
    $region7: #{_lambda_.5} parent=1 // loop_footer_branch
      %12 = sbr.rel target = $region3
    $region8: #{_lambda_.5} parent=1 // loop_exit
      _
    %2289 = vsyncpa [#allocation3], 1
    %s2290 = scalar_lea.sflag [#allocation3], 1
    %2291 = vsyncpa %s2290, 1

</llo_original>
